<compile_context>
chip_gen: v6e
topology: v6e:2x2x1
jax: 0.10.0
libtpu: 0.0.40
codegen_flags: <defaults>
</compile_context>

<pallas_src>
import jax
import jax.numpy as jnp
from jax.experimental import pallas as pl
from jax.experimental.pallas import tpu as pltpu

BN_EPS = 1e-5


# ----------------------------- sizing helpers --------------------------------

def _vmem_physical_bytes():
    try:
        info = pltpu.get_tpu_info()
        for name in ("vmem_capacity_bytes", "vmem_bytes", "vmem_size_bytes"):
            v = getattr(info, name, None)
            if v:
                return int(v)
    except Exception:
        pass
    return 64 << 20  # conservative default (v7x per-core physical VMEM)


def _vmem_limit(block_bytes):
    # Generation-aware scoped-VMEM limit: leave headroom for compiler scratch;
    # never claim all of a 64 MiB part, allow ~110 MiB on 128 MiB parts.
    phys = _vmem_physical_bytes()
    cap = max(min(phys - (16 << 20), 110 << 20), 32 << 20)
    return int(min(max(block_bytes + (8 << 20), 32 << 20), cap))


def _cout_tile(c):
    # Output-channel tile for the "parallel" grid axis (lets a 2-TC part take
    # disjoint channel slices; BN stats are per-channel so the split is
    # reduction-free).  256 fills the v6e/v7x 2x256^2 MXU N dim and halves the
    # number of times the activation block is re-read.
    if c % 256 == 0:
        return 256
    if c % 128 == 0:
        return 128
    return c


def _pick_batch_tile(n, per_image_bytes, budget_bytes):
    bt = 1
    for cand in range(1, n + 1):
        if n % cand == 0 and cand * per_image_bytes <= budget_bytes:
            bt = cand
    return bt


# ----------------------------- kernel bodies ---------------------------------

def _init_pad_border_and_stats(pad_ref, stats_ref):
    # Zero only the 1-pixel pad border (the interior is overwritten every step)
    # and the per-channel stats accumulator.  Runs once per channel tile.
    bt, hp, wp, cin = pad_ref.shape
    pad_ref[:, 0:1, :, :] = jnp.zeros((bt, 1, wp, cin), pad_ref.dtype)
    pad_ref[:, hp - 1:hp, :, :] = jnp.zeros((bt, 1, wp, cin), pad_ref.dtype)
    pad_ref[:, :, 0:1, :] = jnp.zeros((bt, hp, 1, cin), pad_ref.dtype)
    pad_ref[:, :, wp - 1:wp, :] = jnp.zeros((bt, hp, 1, cin), pad_ref.dtype)
    stats_ref[...] = jnp.zeros_like(stats_ref)


def _conv3x3_and_stats(pad_ref, slab_ref, w_ref, z_ref, stats_ref):
    # Pack the 9 shifted taps into one bf16 im2col slab and contract with a
    # SINGLE (M, 9*Cin) x (9*Cin, TCo) MXU matmul (accumulation stays inside the
    # MXU result path -> no per-tap f32 accumulator round-trips through VMEM).
    bt, ho, wo, tco = z_ref.shape
    cin = pad_ref.shape[3]
    for dy in range(3):
        for dx in range(3):
            t = dy * 3 + dx
            slab_ref[:, :, :, t * cin:(t + 1) * cin] = pad_ref[:, dy:dy + ho, dx:dx + wo, :]

    a = slab_ref[...].reshape(bt * ho * wo, 9 * cin)
    acc = jnp.dot(a, w_ref[...], preferred_element_type=jnp.float32)
    z_ref[...] = acc.reshape(bt, ho, wo, tco).astype(z_ref.dtype)

    # Per-channel BN statistics accumulated in f32 across the batch grid axis.
    # (E[x^2]-E[x]^2 in f32; acceptable here, see module-level notes.)
    stats_ref[0:1, :] += jnp.sum(acc, axis=0, keepdims=True)
    stats_ref[1:2, :] += jnp.sum(acc * acc, axis=0, keepdims=True)


def _pool_conv_stats_kernel(x_ref, w_ref, z_ref, stats_ref, pad_ref, slab_ref):
    # x_ref:     (BT, H, W, Cin)           f32
    # w_ref:     (9*Cin, TCo)              bf16
    # z_ref:     (BT, Ho, Wo, TCo)         bf16   pre-BN conv1 output
    # stats_ref: (2, TCo)                  f32    [sum, sumsq] accumulator
    # pad_ref:   (BT, Ho+2, Wo+2, Cin)     bf16   scratch (border zeroed once)
    # slab_ref:  (BT, Ho, Wo, 9*Cin)       bf16   im2col scratch
    bt, ho, wo, _ = z_ref.shape

    @pl.when(pl.program_id(1) == 0)
    def _():
        _init_pad_border_and_stats(pad_ref, stats_ref)

    # fused 2x2 / stride-2 max pool via strided ref reads (no HBM temporary)
    p00 = x_ref[:, pl.ds(0, ho, stride=2), pl.ds(0, wo, stride=2), :]
    p01 = x_ref[:, pl.ds(0, ho, stride=2), pl.ds(1, wo, stride=2), :]
    p10 = x_ref[:, pl.ds(1, ho, stride=2), pl.ds(0, wo, stride=2), :]
    p11 = x_ref[:, pl.ds(1, ho, stride=2), pl.ds(1, wo, stride=2), :]
    pooled = jnp.maximum(jnp.maximum(p00, p01), jnp.maximum(p10, p11))
    pad_ref[:, 1:ho + 1, 1:wo + 1, :] = pooled.astype(pad_ref.dtype)

    _conv3x3_and_stats(pad_ref, slab_ref, w_ref, z_ref, stats_ref)


def _bn_conv_stats_kernel(z_in_ref, scale_ref, shift_ref, w_ref,
                          z_ref, stats_ref, pad_ref, slab_ref):
    # BN1-apply (precomputed per-channel scale/shift) + ReLU + pad + conv2 + stats.
    bt, ho, wo, _ = z_ref.shape

    @pl.when(pl.program_id(1) == 0)
    def _():
        _init_pad_border_and_stats(pad_ref, stats_ref)

    a = z_in_ref[...].astype(jnp.float32) * scale_ref[0, :] + shift_ref[0, :]
    pad_ref[:, 1:ho + 1, 1:wo + 1, :] = jnp.maximum(a, 0.0).astype(pad_ref.dtype)

    _conv3x3_and_stats(pad_ref, slab_ref, w_ref, z_ref, stats_ref)


def _bn_relu_kernel(z_ref, scale_ref, shift_ref, o_ref):
    # Final BN-apply + ReLU (f32 output).
    a = z_ref[...].astype(jnp.float32) * scale_ref[0, :] + shift_ref[0, :]
    o_ref[...] = jnp.maximum(a, 0.0)


# --------------------------- pallas_call wrappers -----------------------------

def pool_conv_stats(x_nhwc, w, bt):
    n, h, wd, cin = x_nhwc.shape
    ho, wo = h // 2, wd // 2
    kq, cout = w.shape                        # kq = 9*Cin
    tco = _cout_tile(cout)
    jc = cout // tco
    nb = n // bt

    block_bytes = (2 * bt * h * wd * cin * 4 + 2 * kq * tco * 2 +
                   2 * bt * ho * wo * tco * 2 + 2 * tco * 4 +
                   bt * (ho + 2) * (wo + 2) * cin * 2 + bt * ho * wo * kq * 2)
    flops = 2 * n * ho * wo * kq * cout + 3 * n * ho * wo * cin
    bytes_accessed = (jc * n * h * wd * cin * 4 + jc * kq * cout * 2 +
                      n * ho * wo * cout * 2 + jc * 2 * cout * 4)

    return pl.pallas_call(
        _pool_conv_stats_kernel,
        grid=(jc, nb),
        in_specs=[
            pl.BlockSpec((bt, h, wd, cin), lambda j, i: (i, 0, 0, 0)),
            pl.BlockSpec((kq, tco), lambda j, i: (0, j)),
        ],
        out_specs=(
            pl.BlockSpec((bt, ho, wo, tco), lambda j, i: (i, 0, 0, j)),
            pl.BlockSpec((2, tco), lambda j, i: (0, j)),
        ),
        out_shape=(
            jax.ShapeDtypeStruct((n, ho, wo, cout), jnp.bfloat16),
            jax.ShapeDtypeStruct((2, cout), jnp.float32),
        ),
        scratch_shapes=[
            pltpu.VMEM((bt, ho + 2, wo + 2, cin), jnp.bfloat16),
            pltpu.VMEM((bt, ho, wo, kq), jnp.bfloat16),
        ],
        compiler_params=pltpu.CompilerParams(
            dimension_semantics=("parallel", "arbitrary"),
            vmem_limit_bytes=_vmem_limit(block_bytes)),
        cost_estimate=pl.CostEstimate(flops=flops, transcendentals=0,
                                      bytes_accessed=bytes_accessed),
    )(x_nhwc, w)


def bn_conv_stats(z_in, scale, shift, w, bt):
    n, ho, wo, cin = z_in.shape
    kq, cout = w.shape
    tco = _cout_tile(cout)
    jc = cout // tco
    nb = n // bt

    block_bytes = (2 * bt * ho * wo * cin * 2 + 2 * 2 * cin * 4 + 2 * kq * tco * 2 +
                   2 * bt * ho * wo * tco * 2 + 2 * tco * 4 +
                   bt * (ho + 2) * (wo + 2) * cin * 2 + bt * ho * wo * kq * 2)
    flops = 2 * n * ho * wo * kq * cout + 3 * n * ho * wo * cin
    bytes_accessed = (jc * n * ho * wo * cin * 2 + jc * kq * cout * 2 +
                      n * ho * wo * cout * 2 + jc * 2 * cout * 4)

    return pl.pallas_call(
        _bn_conv_stats_kernel,
        grid=(jc, nb),
        in_specs=[
            pl.BlockSpec((bt, ho, wo, cin), lambda j, i: (i, 0, 0, 0)),
            pl.BlockSpec((1, cin), lambda j, i: (0, 0)),
            pl.BlockSpec((1, cin), lambda j, i: (0, 0)),
            pl.BlockSpec((kq, tco), lambda j, i: (0, j)),
        ],
        out_specs=(
            pl.BlockSpec((bt, ho, wo, tco), lambda j, i: (i, 0, 0, j)),
            pl.BlockSpec((2, tco), lambda j, i: (0, j)),
        ),
        out_shape=(
            jax.ShapeDtypeStruct((n, ho, wo, cout), jnp.bfloat16),
            jax.ShapeDtypeStruct((2, cout), jnp.float32),
        ),
        scratch_shapes=[
            pltpu.VMEM((bt, ho + 2, wo + 2, cin), jnp.bfloat16),
            pltpu.VMEM((bt, ho, wo, kq), jnp.bfloat16),
        ],
        compiler_params=pltpu.CompilerParams(
            dimension_semantics=("parallel", "arbitrary"),
            vmem_limit_bytes=_vmem_limit(block_bytes)),
        cost_estimate=pl.CostEstimate(flops=flops, transcendentals=0,
                                      bytes_accessed=bytes_accessed),
    )(z_in, scale, shift, w)


def bn_relu_apply(z, scale, shift, bt):
    n, ho, wo, c = z.shape
    nb = n // bt
    block_bytes = 2 * bt * ho * wo * c * (2 + 4) + 2 * 2 * c * 4
    return pl.pallas_call(
        _bn_relu_kernel,
        grid=(nb,),
        in_specs=[
            pl.BlockSpec((bt, ho, wo, c), lambda i: (i, 0, 0, 0)),
            pl.BlockSpec((1, c), lambda i: (0, 0)),
            pl.BlockSpec((1, c), lambda i: (0, 0)),
        ],
        out_specs=pl.BlockSpec((bt, ho, wo, c), lambda i: (i, 0, 0, 0)),
        out_shape=jax.ShapeDtypeStruct((n, ho, wo, c), jnp.float32),
        compiler_params=pltpu.CompilerParams(
            dimension_semantics=("parallel",),
            vmem_limit_bytes=_vmem_limit(block_bytes)),
        cost_estimate=pl.CostEstimate(flops=3 * n * ho * wo * c, transcendentals=0,
                                      bytes_accessed=n * ho * wo * c * (2 + 4)),
    )(z, scale, shift)


# ------------------------------ glue (JAX) ------------------------------------

def _bn_scale_shift(stats, gamma, beta, count):
    # Tiny (C,)-sized finalization of the two-pass BN: kept at the JAX level.
    mean = stats[0] / count
    var = jnp.maximum(stats[1] / count - mean * mean, 0.0)   # biased var (train mode)
    scale = gamma * jax.lax.rsqrt(var + BN_EPS)
    shift = beta - mean * scale
    return scale.reshape(1, -1), shift.reshape(1, -1)


def init_down_params(key, in_channels, out_channels, mid_channels=None):
    mid = mid_channels or out_channels
    k1, k2 = jax.random.split(key)

    def conv_w(k, cin, cout):
        w = jax.random.normal(k, (3, 3, cin, cout), jnp.float32) * (2.0 / (9 * cin)) ** 0.5
        # (dy, dx, ci)-major contraction axis, bf16 operands for the MXU.
        return w.reshape(9 * cin, cout).astype(jnp.bfloat16)

    return {
        "w1": conv_w(k1, in_channels, mid),
        "gamma1": jnp.ones((mid,), jnp.float32),
        "beta1": jnp.zeros((mid,), jnp.float32),
        "w2": conv_w(k2, mid, out_channels),
        "gamma2": jnp.ones((out_channels,), jnp.float32),
        "beta2": jnp.zeros((out_channels,), jnp.float32),
    }


def down_forward(x_nchw, params):
    # Down: MaxPool2d(2) -> (Conv3x3 -> BN -> ReLU) x 2, NCHW in / NCHW out.
    x = jnp.transpose(x_nchw, (0, 2, 3, 1)).astype(jnp.float32)   # NCHW -> NHWC
    n, h, w, cin = x.shape
    ho, wo = h // 2, w // 2
    count = n * ho * wo

    mid = params["gamma1"].shape[0]
    cout = params["gamma2"].shape[0]
    tc1, tc2 = _cout_tile(mid), _cout_tile(cout)

    # Batch-tile sized from the per-image VMEM footprint of both conv stages.
    per_img = max(
        2 * h * w * cin * 4 + 2 * ho * wo * tc1 * 2
        + (ho + 2) * (wo + 2) * cin * 2 + ho * wo * 9 * cin * 2,
        2 * ho * wo * mid * 2 + 2 * ho * wo * tc2 * 2
        + (ho + 2) * (wo + 2) * mid * 2 + ho * wo * 9 * mid * 2,
    )
    budget = max(16 << 20, int(0.35 * _vmem_physical_bytes()))
    bt = _pick_batch_tile(n, per_img, budget)

    z1, stats1 = pool_conv_stats(x, params["w1"], bt)
    scale1, shift1 = _bn_scale_shift(stats1, params["gamma1"], params["beta1"], count)

    z2, stats2 = bn_conv_stats(z1, scale1, shift1, params["w2"], bt)
    scale2, shift2 = _bn_scale_shift(stats2, params["gamma2"], params["beta2"], count)

    y = bn_relu_apply(z2, scale2, shift2, bt)
    return jnp.transpose(y, (0, 3, 1, 2))                         # NHWC -> NCHW


# --------------------------------- main ----------------------------------------

if __name__ == "__main__":
    key = jax.random.PRNGKey(0)
    k_x, k_p = jax.random.split(key)

    batch, in_channels, out_channels, spatial = 2, 4, 8, 16
    x = jax.random.normal(k_x, (batch, in_channels, spatial, spatial), jnp.float32)
    params = init_down_params(k_p, in_channels, out_channels)

    fwd = jax.jit(lambda xx: down_forward(xx, params))
    y = fwd(x)
    jax.block_until_ready(y)

    assert y.shape == (batch, out_channels, spatial // 2, spatial // 2)
    assert bool(jnp.all(jnp.isfinite(y)))
    print("KERNEL_OK")
</pallas_src>

<mosaic_0001>
module attributes {stable_mosaic.version = 11 : i64} {
  func.func @_bn_conv_stats_kernel(%arg0: i32, %arg1: i32, %arg2: memref<2x8x8x8xbf16, #tpu.memory_space<vmem>>, %arg3: memref<1x8xf32, #tpu.memory_space<vmem>>, %arg4: memref<1x8xf32, #tpu.memory_space<vmem>>, %arg5: memref<72x8xbf16, #tpu.memory_space<vmem>>, %arg6: memref<2x8x8x8xbf16, #tpu.memory_space<vmem>>, %arg7: memref<2x8xf32, #tpu.memory_space<vmem>>, %arg8: memref<2x10x10x8xbf16, #tpu.memory_space<vmem>>, %arg9: memref<2x8x8x72xbf16, #tpu.memory_space<vmem>>) attributes {dimension_semantics = [#tpu.dimension_semantics<parallel>, #tpu.dimension_semantics<arbitrary>], iteration_bounds = array<i64: 1, 1>, scalar_prefetch = 0 : i64, scratch_operands = 2 : i64, tpu.core_type = #tpu.core_type<tc>, window_params = [{transform_indices = @transform_0, window_bounds = array<i64: 2, 8, 8, 8>}, {pipeline_mode = #tpu.pipeline_mode<synchronous>, transform_indices = @transform_1, window_bounds = array<i64: 1, 8>}, {pipeline_mode = #tpu.pipeline_mode<synchronous>, transform_indices = @transform_2, window_bounds = array<i64: 1, 8>}, {transform_indices = @transform_3, window_bounds = array<i64: 72, 8>}, {transform_indices = @transform_4, window_bounds = array<i64: 2, 8, 8, 8>}, {transform_indices = @transform_5, window_bounds = array<i64: 2, 8>}]} {
    %c0_i32 = arith.constant 0 : i32
    %0 = arith.cmpi eq, %arg1, %c0_i32 : i32
    %1 = arith.extui %0 : i1 to i32
    %c0_i32_0 = arith.constant 0 : i32
    %2 = arith.cmpi ne, %1, %c0_i32_0 : i32
    scf.if %2 {
      %cst_95 = arith.constant 0.000000e+00 : bf16
      %55 = vector.broadcast %cst_95 : bf16 to vector<2x1x10x8xbf16>
      %c0_96 = arith.constant 0 : index
      %c0_97 = arith.constant 0 : index
      %c0_98 = arith.constant 0 : index
      %c0_99 = arith.constant 0 : index
      %56 = vector.load %arg8[%c0_96, %c0_97, %c0_98, %c0_99] : memref<2x10x10x8xbf16, #tpu.memory_space<vmem>>, vector<2x1x10x8xbf16>
      tpu.vector_store %arg8[%c0_96, %c0_97, %c0_98, %c0_99], %55 {strides = array<i32>} : memref<2x10x10x8xbf16, #tpu.memory_space<vmem>>, vector<2x1x10x8xbf16>,
      %cst_100 = arith.constant 0.000000e+00 : bf16
      %57 = vector.broadcast %cst_100 : bf16 to vector<2x1x10x8xbf16>
      %c0_101 = arith.constant 0 : index
      %c9 = arith.constant 9 : index
      %c0_102 = arith.constant 0 : index
      %c0_103 = arith.constant 0 : index
      %58 = vector.load %arg8[%c0_101, %c9, %c0_102, %c0_103] : memref<2x10x10x8xbf16, #tpu.memory_space<vmem>>, vector<2x1x10x8xbf16>
      tpu.vector_store %arg8[%c0_101, %c9, %c0_102, %c0_103], %57 {strides = array<i32>} : memref<2x10x10x8xbf16, #tpu.memory_space<vmem>>, vector<2x1x10x8xbf16>,
      %cst_104 = arith.constant 0.000000e+00 : bf16
      %59 = vector.broadcast %cst_104 : bf16 to vector<2x10x1x8xbf16>
      %c0_105 = arith.constant 0 : index
      %c0_106 = arith.constant 0 : index
      %c0_107 = arith.constant 0 : index
      %c0_108 = arith.constant 0 : index
      %60 = vector.load %arg8[%c0_105, %c0_106, %c0_107, %c0_108] : memref<2x10x10x8xbf16, #tpu.memory_space<vmem>>, vector<2x10x1x8xbf16>
      tpu.vector_store %arg8[%c0_105, %c0_106, %c0_107, %c0_108], %59 {strides = array<i32>} : memref<2x10x10x8xbf16, #tpu.memory_space<vmem>>, vector<2x10x1x8xbf16>,
      %cst_109 = arith.constant 0.000000e+00 : bf16
      %61 = vector.broadcast %cst_109 : bf16 to vector<2x10x1x8xbf16>
      %c0_110 = arith.constant 0 : index
      %c0_111 = arith.constant 0 : index
      %c9_112 = arith.constant 9 : index
      %c0_113 = arith.constant 0 : index
      %62 = vector.load %arg8[%c0_110, %c0_111, %c9_112, %c0_113] : memref<2x10x10x8xbf16, #tpu.memory_space<vmem>>, vector<2x10x1x8xbf16>
      tpu.vector_store %arg8[%c0_110, %c0_111, %c9_112, %c0_113], %61 {strides = array<i32>} : memref<2x10x10x8xbf16, #tpu.memory_space<vmem>>, vector<2x10x1x8xbf16>,
      %cst_114 = arith.constant 0.000000e+00 : f32
      %63 = vector.broadcast %cst_114 : f32 to vector<2x8xf32>
      %c0_115 = arith.constant 0 : index
      %c0_116 = arith.constant 0 : index
      %64 = vector.load %arg7[%c0_115, %c0_116] : memref<2x8xf32, #tpu.memory_space<vmem>>, vector<2x8xf32>
      tpu.vector_store %arg7[%c0_115, %c0_116], %63 {strides = array<i32>} : memref<2x8xf32, #tpu.memory_space<vmem>>, vector<2x8xf32>,
    } else {
    }
    %c0 = arith.constant 0 : index
    %c0_1 = arith.constant 0 : index
    %c0_2 = arith.constant 0 : index
    %c0_3 = arith.constant 0 : index
    %3 = vector.load %arg2[%c0, %c0_1, %c0_2, %c0_3] : memref<2x8x8x8xbf16, #tpu.memory_space<vmem>>, vector<2x8x8x8xbf16>
    %4 = arith.extf %3 : vector<2x8x8x8xbf16> to vector<2x8x8x8xf32>
    %c0_4 = arith.constant 0 : index
    %c0_5 = arith.constant 0 : index
    %5 = vector.load %arg3[%c0_4, %c0_5] : memref<1x8xf32, #tpu.memory_space<vmem>>, vector<1x8xf32>
    %6 = vector.shape_cast %5 : vector<1x8xf32> to vector<8xf32>
    %7 = vector.shape_cast %6 : vector<8xf32> to vector<1x1x1x8xf32>
    %8 = vector.broadcast %7 : vector<1x1x1x8xf32> to vector<2x8x8x8xf32>
    %9 = arith.mulf %4, %8 : vector<2x8x8x8xf32>
    %c0_6 = arith.constant 0 : index
    %c0_7 = arith.constant 0 : index
    %10 = vector.load %arg4[%c0_6, %c0_7] : memref<1x8xf32, #tpu.memory_space<vmem>>, vector<1x8xf32>
    %11 = vector.shape_cast %10 : vector<1x8xf32> to vector<8xf32>
    %12 = vector.shape_cast %11 : vector<8xf32> to vector<1x1x1x8xf32>
    %13 = vector.broadcast %12 : vector<1x1x1x8xf32> to vector<2x8x8x8xf32>
    %14 = arith.addf %9, %13 : vector<2x8x8x8xf32>
    %cst = arith.constant 0.000000e+00 : f32
    %15 = vector.broadcast %cst : f32 to vector<2x8x8x8xf32>
    %16 = arith.maximumf %14, %15 : vector<2x8x8x8xf32>
    %17 = arith.truncf %16 : vector<2x8x8x8xf32> to vector<2x8x8x8xbf16>
    %c0_8 = arith.constant 0 : index
    %c1 = arith.constant 1 : index
    %c1_9 = arith.constant 1 : index
    %c0_10 = arith.constant 0 : index
    %18 = vector.load %arg8[%c0_8, %c1, %c1_9, %c0_10] : memref<2x10x10x8xbf16, #tpu.memory_space<vmem>>, vector<2x8x8x8xbf16>
    tpu.vector_store %arg8[%c0_8, %c1, %c1_9, %c0_10], %17 {strides = array<i32>} : memref<2x10x10x8xbf16, #tpu.memory_space<vmem>>, vector<2x8x8x8xbf16>,
    %c0_11 = arith.constant 0 : index
    %c0_12 = arith.constant 0 : index
    %c0_13 = arith.constant 0 : index
    %c0_14 = arith.constant 0 : index
    %19 = vector.load %arg8[%c0_11, %c0_12, %c0_13, %c0_14] : memref<2x10x10x8xbf16, #tpu.memory_space<vmem>>, vector<2x8x8x8xbf16>
    %c0_15 = arith.constant 0 : index
    %c0_16 = arith.constant 0 : index
    %c0_17 = arith.constant 0 : index
    %c0_18 = arith.constant 0 : index
    %20 = vector.load %arg9[%c0_15, %c0_16, %c0_17, %c0_18] : memref<2x8x8x72xbf16, #tpu.memory_space<vmem>>, vector<2x8x8x8xbf16>
    tpu.vector_store %arg9[%c0_15, %c0_16, %c0_17, %c0_18], %19 {strides = array<i32>} : memref<2x8x8x72xbf16, #tpu.memory_space<vmem>>, vector<2x8x8x8xbf16>,
    %c0_19 = arith.constant 0 : index
    %c0_20 = arith.constant 0 : index
    %c1_21 = arith.constant 1 : index
    %c0_22 = arith.constant 0 : index
    %21 = vector.load %arg8[%c0_19, %c0_20, %c1_21, %c0_22] : memref<2x10x10x8xbf16, #tpu.memory_space<vmem>>, vector<2x8x8x8xbf16>
    %c0_23 = arith.constant 0 : index
    %c0_24 = arith.constant 0 : index
    %c0_25 = arith.constant 0 : index
    %c8 = arith.constant 8 : index
    %22 = vector.load %arg9[%c0_23, %c0_24, %c0_25, %c8] : memref<2x8x8x72xbf16, #tpu.memory_space<vmem>>, vector<2x8x8x8xbf16>
    tpu.vector_store %arg9[%c0_23, %c0_24, %c0_25, %c8], %21 {strides = array<i32>} : memref<2x8x8x72xbf16, #tpu.memory_space<vmem>>, vector<2x8x8x8xbf16>,
    %c0_26 = arith.constant 0 : index
    %c0_27 = arith.constant 0 : index
    %c2 = arith.constant 2 : index
    %c0_28 = arith.constant 0 : index
    %23 = vector.load %arg8[%c0_26, %c0_27, %c2, %c0_28] : memref<2x10x10x8xbf16, #tpu.memory_space<vmem>>, vector<2x8x8x8xbf16>
    %c0_29 = arith.constant 0 : index
    %c0_30 = arith.constant 0 : index
    %c0_31 = arith.constant 0 : index
    %c16 = arith.constant 16 : index
    %24 = vector.load %arg9[%c0_29, %c0_30, %c0_31, %c16] : memref<2x8x8x72xbf16, #tpu.memory_space<vmem>>, vector<2x8x8x8xbf16>
    tpu.vector_store %arg9[%c0_29, %c0_30, %c0_31, %c16], %23 {strides = array<i32>} : memref<2x8x8x72xbf16, #tpu.memory_space<vmem>>, vector<2x8x8x8xbf16>,
    %c0_32 = arith.constant 0 : index
    %c1_33 = arith.constant 1 : index
    %c0_34 = arith.constant 0 : index
    %c0_35 = arith.constant 0 : index
    %25 = vector.load %arg8[%c0_32, %c1_33, %c0_34, %c0_35] : memref<2x10x10x8xbf16, #tpu.memory_space<vmem>>, vector<2x8x8x8xbf16>
    %c0_36 = arith.constant 0 : index
    %c0_37 = arith.constant 0 : index
    %c0_38 = arith.constant 0 : index
    %c24 = arith.constant 24 : index
    %26 = vector.load %arg9[%c0_36, %c0_37, %c0_38, %c24] : memref<2x8x8x72xbf16, #tpu.memory_space<vmem>>, vector<2x8x8x8xbf16>
    tpu.vector_store %arg9[%c0_36, %c0_37, %c0_38, %c24], %25 {strides = array<i32>} : memref<2x8x8x72xbf16, #tpu.memory_space<vmem>>, vector<2x8x8x8xbf16>,
    %c0_39 = arith.constant 0 : index
    %c1_40 = arith.constant 1 : index
    %c1_41 = arith.constant 1 : index
    %c0_42 = arith.constant 0 : index
    %27 = vector.load %arg8[%c0_39, %c1_40, %c1_41, %c0_42] : memref<2x10x10x8xbf16, #tpu.memory_space<vmem>>, vector<2x8x8x8xbf16>
    %c0_43 = arith.constant 0 : index
    %c0_44 = arith.constant 0 : index
    %c0_45 = arith.constant 0 : index
    %c32 = arith.constant 32 : index
    %28 = vector.load %arg9[%c0_43, %c0_44, %c0_45, %c32] : memref<2x8x8x72xbf16, #tpu.memory_space<vmem>>, vector<2x8x8x8xbf16>
    tpu.vector_store %arg9[%c0_43, %c0_44, %c0_45, %c32], %27 {strides = array<i32>} : memref<2x8x8x72xbf16, #tpu.memory_space<vmem>>, vector<2x8x8x8xbf16>,
    %c0_46 = arith.constant 0 : index
    %c1_47 = arith.constant 1 : index
    %c2_48 = arith.constant 2 : index
    %c0_49 = arith.constant 0 : index
    %29 = vector.load %arg8[%c0_46, %c1_47, %c2_48, %c0_49] : memref<2x10x10x8xbf16, #tpu.memory_space<vmem>>, vector<2x8x8x8xbf16>
    %c0_50 = arith.constant 0 : index
    %c0_51 = arith.constant 0 : index
    %c0_52 = arith.constant 0 : index
    %c40 = arith.constant 40 : index
    %30 = vector.load %arg9[%c0_50, %c0_51, %c0_52, %c40] : memref<2x8x8x72xbf16, #tpu.memory_space<vmem>>, vector<2x8x8x8xbf16>
    tpu.vector_store %arg9[%c0_50, %c0_51, %c0_52, %c40], %29 {strides = array<i32>} : memref<2x8x8x72xbf16, #tpu.memory_space<vmem>>, vector<2x8x8x8xbf16>,
    %c0_53 = arith.constant 0 : index
    %c2_54 = arith.constant 2 : index
    %c0_55 = arith.constant 0 : index
    %c0_56 = arith.constant 0 : index
    %31 = vector.load %arg8[%c0_53, %c2_54, %c0_55, %c0_56] : memref<2x10x10x8xbf16, #tpu.memory_space<vmem>>, vector<2x8x8x8xbf16>
    %c0_57 = arith.constant 0 : index
    %c0_58 = arith.constant 0 : index
    %c0_59 = arith.constant 0 : index
    %c48 = arith.constant 48 : index
    %32 = vector.load %arg9[%c0_57, %c0_58, %c0_59, %c48] : memref<2x8x8x72xbf16, #tpu.memory_space<vmem>>, vector<2x8x8x8xbf16>
    tpu.vector_store %arg9[%c0_57, %c0_58, %c0_59, %c48], %31 {strides = array<i32>} : memref<2x8x8x72xbf16, #tpu.memory_space<vmem>>, vector<2x8x8x8xbf16>,
    %c0_60 = arith.constant 0 : index
    %c2_61 = arith.constant 2 : index
    %c1_62 = arith.constant 1 : index
    %c0_63 = arith.constant 0 : index
    %33 = vector.load %arg8[%c0_60, %c2_61, %c1_62, %c0_63] : memref<2x10x10x8xbf16, #tpu.memory_space<vmem>>, vector<2x8x8x8xbf16>
    %c0_64 = arith.constant 0 : index
    %c0_65 = arith.constant 0 : index
    %c0_66 = arith.constant 0 : index
    %c56 = arith.constant 56 : index
    %34 = vector.load %arg9[%c0_64, %c0_65, %c0_66, %c56] : memref<2x8x8x72xbf16, #tpu.memory_space<vmem>>, vector<2x8x8x8xbf16>
    tpu.vector_store %arg9[%c0_64, %c0_65, %c0_66, %c56], %33 {strides = array<i32>} : memref<2x8x8x72xbf16, #tpu.memory_space<vmem>>, vector<2x8x8x8xbf16>,
    %c0_67 = arith.constant 0 : index
    %c2_68 = arith.constant 2 : index
    %c2_69 = arith.constant 2 : index
    %c0_70 = arith.constant 0 : index
    %35 = vector.load %arg8[%c0_67, %c2_68, %c2_69, %c0_70] : memref<2x10x10x8xbf16, #tpu.memory_space<vmem>>, vector<2x8x8x8xbf16>
    %c0_71 = arith.constant 0 : index
    %c0_72 = arith.constant 0 : index
    %c0_73 = arith.constant 0 : index
    %c64 = arith.constant 64 : index
    %36 = vector.load %arg9[%c0_71, %c0_72, %c0_73, %c64] : memref<2x8x8x72xbf16, #tpu.memory_space<vmem>>, vector<2x8x8x8xbf16>
    tpu.vector_store %arg9[%c0_71, %c0_72, %c0_73, %c64], %35 {strides = array<i32>} : memref<2x8x8x72xbf16, #tpu.memory_space<vmem>>, vector<2x8x8x8xbf16>,
    %c0_74 = arith.constant 0 : index
    %c0_75 = arith.constant 0 : index
    %c0_76 = arith.constant 0 : index
    %c0_77 = arith.constant 0 : index
    %37 = vector.load %arg9[%c0_74, %c0_75, %c0_76, %c0_77] : memref<2x8x8x72xbf16, #tpu.memory_space<vmem>>, vector<2x8x8x72xbf16>
    %38 = vector.shape_cast %37 : vector<2x8x8x72xbf16> to vector<128x72xbf16>
    %c0_78 = arith.constant 0 : index
    %c0_79 = arith.constant 0 : index
    %39 = vector.load %arg5[%c0_78, %c0_79] : memref<72x8xbf16, #tpu.memory_space<vmem>>, vector<72x8xbf16>
    %cst_80 = arith.constant dense<0.000000e+00> : vector<128x8xf32>
    %40 = tpu.matmul %38, %39, %cst_80 {dimension_numbers = #tpu.dot_dimension_numbers<[1], [0], [0], [1], [0, 0, 1, 1], [], []>} : vector<128x72xbf16>, vector<72x8xbf16>, vector<128x8xf32> -> vector<128x8xf32>
    %41 = vector.shape_cast %40 : vector<128x8xf32> to vector<2x8x8x8xf32>
    %42 = arith.truncf %41 : vector<2x8x8x8xf32> to vector<2x8x8x8xbf16>
    %c0_81 = arith.constant 0 : index
    %c0_82 = arith.constant 0 : index
    %c0_83 = arith.constant 0 : index
    %c0_84 = arith.constant 0 : index
    %43 = vector.load %arg6[%c0_81, %c0_82, %c0_83, %c0_84] : memref<2x8x8x8xbf16, #tpu.memory_space<vmem>>, vector<2x8x8x8xbf16>
    tpu.vector_store %arg6[%c0_81, %c0_82, %c0_83, %c0_84], %42 {strides = array<i32>} : memref<2x8x8x8xbf16, #tpu.memory_space<vmem>>, vector<2x8x8x8xbf16>,
    %c0_85 = arith.constant 0 : index
    %c0_86 = arith.constant 0 : index
    %44 = vector.load %arg7[%c0_85, %c0_86] : memref<2x8xf32, #tpu.memory_space<vmem>>, vector<1x8xf32>
    %cst_87 = arith.constant dense<0.000000e+00> : vector<8xf32>
    %45 = vector.multi_reduction <add>, %40, %cst_87 [0] : vector<128x8xf32> to vector<8xf32>
    %46 = vector.shape_cast %45 : vector<8xf32> to vector<1x8xf32>
    %47 = arith.addf %44, %46 : vector<1x8xf32>
    %c0_88 = arith.constant 0 : index
    %c0_89 = arith.constant 0 : index
    %48 = vector.load %arg7[%c0_88, %c0_89] : memref<2x8xf32, #tpu.memory_space<vmem>>, vector<1x8xf32>
    tpu.vector_store %arg7[%c0_88, %c0_89], %47 {strides = array<i32>} : memref<2x8xf32, #tpu.memory_space<vmem>>, vector<1x8xf32>,
    %c1_90 = arith.constant 1 : index
    %c0_91 = arith.constant 0 : index
    %49 = vector.load %arg7[%c1_90, %c0_91] : memref<2x8xf32, #tpu.memory_space<vmem>>, vector<1x8xf32>
    %50 = arith.mulf %40, %40 : vector<128x8xf32>
    %cst_92 = arith.constant dense<0.000000e+00> : vector<8xf32>
    %51 = vector.multi_reduction <add>, %50, %cst_92 [0] : vector<128x8xf32> to vector<8xf32>
    %52 = vector.shape_cast %51 : vector<8xf32> to vector<1x8xf32>
    %53 = arith.addf %49, %52 : vector<1x8xf32>
    %c1_93 = arith.constant 1 : index
    %c0_94 = arith.constant 0 : index
    %54 = vector.load %arg7[%c1_93, %c0_94] : memref<2x8xf32, #tpu.memory_space<vmem>>, vector<1x8xf32>
    tpu.vector_store %arg7[%c1_93, %c0_94], %53 {strides = array<i32>} : memref<2x8xf32, #tpu.memory_space<vmem>>, vector<1x8xf32>,
    return
  }
  func.func @transform_0(%arg0: i32, %arg1: i32) -> (i32, i32, i32, i32) {
    %c0_i32 = arith.constant 0 : i32
    %c0_i32_0 = arith.constant 0 : i32
    %c0_i32_1 = arith.constant 0 : i32
    %c0_i32_2 = arith.constant 0 : i32
    return %arg1, %c0_i32, %c0_i32_0, %c0_i32_1 : i32, i32, i32, i32
  }
  func.func @transform_1(%arg0: i32, %arg1: i32) -> (i32, i32) {
    %c0_i32 = arith.constant 0 : i32
    %c0_i32_0 = arith.constant 0 : i32
    %c0_i32_1 = arith.constant 0 : i32
    return %c0_i32, %c0_i32_0 : i32, i32
  }
  func.func @transform_2(%arg0: i32, %arg1: i32) -> (i32, i32) {
    %c0_i32 = arith.constant 0 : i32
    %c0_i32_0 = arith.constant 0 : i32
    %c0_i32_1 = arith.constant 0 : i32
    return %c0_i32, %c0_i32_0 : i32, i32
  }
  func.func @transform_3(%arg0: i32, %arg1: i32) -> (i32, i32) {
    %c0_i32 = arith.constant 0 : i32
    %c0_i32_0 = arith.constant 0 : i32
    return %c0_i32, %arg0 : i32, i32
  }
  func.func @transform_4(%arg0: i32, %arg1: i32) -> (i32, i32, i32, i32) {
    %c0_i32 = arith.constant 0 : i32
    %c0_i32_0 = arith.constant 0 : i32
    %c0_i32_1 = arith.constant 0 : i32
    return %arg1, %c0_i32, %c0_i32_0, %arg0 : i32, i32, i32, i32
  }
  func.func @transform_5(%arg0: i32, %arg1: i32) -> (i32, i32) {
    %c0_i32 = arith.constant 0 : i32
    %c0_i32_0 = arith.constant 0 : i32
    return %c0_i32, %arg0 : i32, i32
  }
}

module attributes {stable_mosaic.version = 11 : i64} {
  func.func @_pool_conv_stats_kernel(%arg0: i32, %arg1: i32, %arg2: memref<2x16x16x4xf32, #tpu.memory_space<vmem>>, %arg3: memref<36x8xbf16, #tpu.memory_space<vmem>>, %arg4: memref<2x8x8x8xbf16, #tpu.memory_space<vmem>>, %arg5: memref<2x8xf32, #tpu.memory_space<vmem>>, %arg6: memref<2x10x10x4xbf16, #tpu.memory_space<vmem>>, %arg7: memref<2x8x8x36xbf16, #tpu.memory_space<vmem>>) attributes {dimension_semantics = [#tpu.dimension_semantics<parallel>, #tpu.dimension_semantics<arbitrary>], iteration_bounds = array<i64: 1, 1>, scalar_prefetch = 0 : i64, scratch_operands = 2 : i64, tpu.core_type = #tpu.core_type<tc>, window_params = [{transform_indices = @transform_0, window_bounds = array<i64: 2, 16, 16, 4>}, {transform_indices = @transform_1, window_bounds = array<i64: 36, 8>}, {transform_indices = @transform_2, window_bounds = array<i64: 2, 8, 8, 8>}, {transform_indices = @transform_3, window_bounds = array<i64: 2, 8>}]} {
    %c0_i32 = arith.constant 0 : i32
    %0 = arith.cmpi eq, %arg1, %c0_i32 : i32
    %1 = arith.extui %0 : i1 to i32
    %c0_i32_0 = arith.constant 0 : i32
    %2 = arith.cmpi ne, %1, %c0_i32_0 : i32
    scf.if %2 {
      %cst_102 = arith.constant 0.000000e+00 : bf16
      %48 = vector.broadcast %cst_102 : bf16 to vector<2x1x10x4xbf16>
      %c0_103 = arith.constant 0 : index
      %c0_104 = arith.constant 0 : index
      %c0_105 = arith.constant 0 : index
      %c0_106 = arith.constant 0 : index
      %49 = vector.load %arg6[%c0_103, %c0_104, %c0_105, %c0_106] : memref<2x10x10x4xbf16, #tpu.memory_space<vmem>>, vector<2x1x10x4xbf16>
      tpu.vector_store %arg6[%c0_103, %c0_104, %c0_105, %c0_106], %48 {strides = array<i32>} : memref<2x10x10x4xbf16, #tpu.memory_space<vmem>>, vector<2x1x10x4xbf16>,
      %cst_107 = arith.constant 0.000000e+00 : bf16
      %50 = vector.broadcast %cst_107 : bf16 to vector<2x1x10x4xbf16>
      %c0_108 = arith.constant 0 : index
      %c9 = arith.constant 9 : index
      %c0_109 = arith.constant 0 : index
      %c0_110 = arith.constant 0 : index
      %51 = vector.load %arg6[%c0_108, %c9, %c0_109, %c0_110] : memref<2x10x10x4xbf16, #tpu.memory_space<vmem>>, vector<2x1x10x4xbf16>
      tpu.vector_store %arg6[%c0_108, %c9, %c0_109, %c0_110], %50 {strides = array<i32>} : memref<2x10x10x4xbf16, #tpu.memory_space<vmem>>, vector<2x1x10x4xbf16>,
      %cst_111 = arith.constant 0.000000e+00 : bf16
      %52 = vector.broadcast %cst_111 : bf16 to vector<2x10x1x4xbf16>
      %c0_112 = arith.constant 0 : index
      %c0_113 = arith.constant 0 : index
      %c0_114 = arith.constant 0 : index
      %c0_115 = arith.constant 0 : index
      %53 = vector.load %arg6[%c0_112, %c0_113, %c0_114, %c0_115] : memref<2x10x10x4xbf16, #tpu.memory_space<vmem>>, vector<2x10x1x4xbf16>
      tpu.vector_store %arg6[%c0_112, %c0_113, %c0_114, %c0_115], %52 {strides = array<i32>} : memref<2x10x10x4xbf16, #tpu.memory_space<vmem>>, vector<2x10x1x4xbf16>,
      %cst_116 = arith.constant 0.000000e+00 : bf16
      %54 = vector.broadcast %cst_116 : bf16 to vector<2x10x1x4xbf16>
      %c0_117 = arith.constant 0 : index
      %c0_118 = arith.constant 0 : index
      %c9_119 = arith.constant 9 : index
      %c0_120 = arith.constant 0 : index
      %55 = vector.load %arg6[%c0_117, %c0_118, %c9_119, %c0_120] : memref<2x10x10x4xbf16, #tpu.memory_space<vmem>>, vector<2x10x1x4xbf16>
      tpu.vector_store %arg6[%c0_117, %c0_118, %c9_119, %c0_120], %54 {strides = array<i32>} : memref<2x10x10x4xbf16, #tpu.memory_space<vmem>>, vector<2x10x1x4xbf16>,
      %cst_121 = arith.constant 0.000000e+00 : f32
      %56 = vector.broadcast %cst_121 : f32 to vector<2x8xf32>
      %c0_122 = arith.constant 0 : index
      %c0_123 = arith.constant 0 : index
      %57 = vector.load %arg5[%c0_122, %c0_123] : memref<2x8xf32, #tpu.memory_space<vmem>>, vector<2x8xf32>
      tpu.vector_store %arg5[%c0_122, %c0_123], %56 {strides = array<i32>} : memref<2x8xf32, #tpu.memory_space<vmem>>, vector<2x8xf32>,
    } else {
    }
    %c0 = arith.constant 0 : index
    %c0_1 = arith.constant 0 : index
    %c0_2 = arith.constant 0 : index
    %c0_3 = arith.constant 0 : index
    %3 = tpu.strided_load %arg2[%c0, %c0_1, %c0_2, %c0_3] {strides = array<i32: 1, 2, 2, 1>} : memref<2x16x16x4xf32, #tpu.memory_space<vmem>>, vector<2x8x8x4xf32>
    %c0_4 = arith.constant 0 : index
    %c0_5 = arith.constant 0 : index
    %c1 = arith.constant 1 : index
    %c0_6 = arith.constant 0 : index
    %4 = tpu.strided_load %arg2[%c0_4, %c0_5, %c1, %c0_6] {strides = array<i32: 1, 2, 2, 1>} : memref<2x16x16x4xf32, #tpu.memory_space<vmem>>, vector<2x8x8x4xf32>
    %c0_7 = arith.constant 0 : index
    %c1_8 = arith.constant 1 : index
    %c0_9 = arith.constant 0 : index
    %c0_10 = arith.constant 0 : index
    %5 = tpu.strided_load %arg2[%c0_7, %c1_8, %c0_9, %c0_10] {strides = array<i32: 1, 2, 2, 1>} : memref<2x16x16x4xf32, #tpu.memory_space<vmem>>, vector<2x8x8x4xf32>
    %c0_11 = arith.constant 0 : index
    %c1_12 = arith.constant 1 : index
    %c1_13 = arith.constant 1 : index
    %c0_14 = arith.constant 0 : index
    %6 = tpu.strided_load %arg2[%c0_11, %c1_12, %c1_13, %c0_14] {strides = array<i32: 1, 2, 2, 1>} : memref<2x16x16x4xf32, #tpu.memory_space<vmem>>, vector<2x8x8x4xf32>
    %7 = arith.maximumf %3, %4 : vector<2x8x8x4xf32>
    %8 = arith.maximumf %5, %6 : vector<2x8x8x4xf32>
    %9 = arith.maximumf %7, %8 : vector<2x8x8x4xf32>
    %10 = arith.truncf %9 : vector<2x8x8x4xf32> to vector<2x8x8x4xbf16>
    %c0_15 = arith.constant 0 : index
    %c1_16 = arith.constant 1 : index
    %c1_17 = arith.constant 1 : index
    %c0_18 = arith.constant 0 : index
    %11 = vector.load %arg6[%c0_15, %c1_16, %c1_17, %c0_18] : memref<2x10x10x4xbf16, #tpu.memory_space<vmem>>, vector<2x8x8x4xbf16>
    tpu.vector_store %arg6[%c0_15, %c1_16, %c1_17, %c0_18], %10 {strides = array<i32>} : memref<2x10x10x4xbf16, #tpu.memory_space<vmem>>, vector<2x8x8x4xbf16>,
    %c0_19 = arith.constant 0 : index
    %c0_20 = arith.constant 0 : index
    %c0_21 = arith.constant 0 : index
    %c0_22 = arith.constant 0 : index
    %12 = vector.load %arg6[%c0_19, %c0_20, %c0_21, %c0_22] : memref<2x10x10x4xbf16, #tpu.memory_space<vmem>>, vector<2x8x8x4xbf16>
    %c0_23 = arith.constant 0 : index
    %c0_24 = arith.constant 0 : index
    %c0_25 = arith.constant 0 : index
    %c0_26 = arith.constant 0 : index
    %13 = vector.load %arg7[%c0_23, %c0_24, %c0_25, %c0_26] : memref<2x8x8x36xbf16, #tpu.memory_space<vmem>>, vector<2x8x8x4xbf16>
    tpu.vector_store %arg7[%c0_23, %c0_24, %c0_25, %c0_26], %12 {strides = array<i32>} : memref<2x8x8x36xbf16, #tpu.memory_space<vmem>>, vector<2x8x8x4xbf16>,
    %c0_27 = arith.constant 0 : index
    %c0_28 = arith.constant 0 : index
    %c1_29 = arith.constant 1 : index
    %c0_30 = arith.constant 0 : index
    %14 = vector.load %arg6[%c0_27, %c0_28, %c1_29, %c0_30] : memref<2x10x10x4xbf16, #tpu.memory_space<vmem>>, vector<2x8x8x4xbf16>
    %c0_31 = arith.constant 0 : index
    %c0_32 = arith.constant 0 : index
    %c0_33 = arith.constant 0 : index
    %c4 = arith.constant 4 : index
    %15 = vector.load %arg7[%c0_31, %c0_32, %c0_33, %c4] : memref<2x8x8x36xbf16, #tpu.memory_space<vmem>>, vector<2x8x8x4xbf16>
    tpu.vector_store %arg7[%c0_31, %c0_32, %c0_33, %c4], %14 {strides = array<i32>} : memref<2x8x8x36xbf16, #tpu.memory_space<vmem>>, vector<2x8x8x4xbf16>,
    %c0_34 = arith.constant 0 : index
    %c0_35 = arith.constant 0 : index
    %c2 = arith.constant 2 : index
    %c0_36 = arith.constant 0 : index
    %16 = vector.load %arg6[%c0_34, %c0_35, %c2, %c0_36] : memref<2x10x10x4xbf16, #tpu.memory_space<vmem>>, vector<2x8x8x4xbf16>
    %c0_37 = arith.constant 0 : index
    %c0_38 = arith.constant 0 : index
    %c0_39 = arith.constant 0 : index
    %c8 = arith.constant 8 : index
    %17 = vector.load %arg7[%c0_37, %c0_38, %c0_39, %c8] : memref<2x8x8x36xbf16, #tpu.memory_space<vmem>>, vector<2x8x8x4xbf16>
    tpu.vector_store %arg7[%c0_37, %c0_38, %c0_39, %c8], %16 {strides = array<i32>} : memref<2x8x8x36xbf16, #tpu.memory_space<vmem>>, vector<2x8x8x4xbf16>,
    %c0_40 = arith.constant 0 : index
    %c1_41 = arith.constant 1 : index
    %c0_42 = arith.constant 0 : index
    %c0_43 = arith.constant 0 : index
    %18 = vector.load %arg6[%c0_40, %c1_41, %c0_42, %c0_43] : memref<2x10x10x4xbf16, #tpu.memory_space<vmem>>, vector<2x8x8x4xbf16>
    %c0_44 = arith.constant 0 : index
    %c0_45 = arith.constant 0 : index
    %c0_46 = arith.constant 0 : index
    %c12 = arith.constant 12 : index
    %19 = vector.load %arg7[%c0_44, %c0_45, %c0_46, %c12] : memref<2x8x8x36xbf16, #tpu.memory_space<vmem>>, vector<2x8x8x4xbf16>
    tpu.vector_store %arg7[%c0_44, %c0_45, %c0_46, %c12], %18 {strides = array<i32>} : memref<2x8x8x36xbf16, #tpu.memory_space<vmem>>, vector<2x8x8x4xbf16>,
    %c0_47 = arith.constant 0 : index
    %c1_48 = arith.constant 1 : index
    %c1_49 = arith.constant 1 : index
    %c0_50 = arith.constant 0 : index
    %20 = vector.load %arg6[%c0_47, %c1_48, %c1_49, %c0_50] : memref<2x10x10x4xbf16, #tpu.memory_space<vmem>>, vector<2x8x8x4xbf16>
    %c0_51 = arith.constant 0 : index
    %c0_52 = arith.constant 0 : index
    %c0_53 = arith.constant 0 : index
    %c16 = arith.constant 16 : index
    %21 = vector.load %arg7[%c0_51, %c0_52, %c0_53, %c16] : memref<2x8x8x36xbf16, #tpu.memory_space<vmem>>, vector<2x8x8x4xbf16>
    tpu.vector_store %arg7[%c0_51, %c0_52, %c0_53, %c16], %20 {strides = array<i32>} : memref<2x8x8x36xbf16, #tpu.memory_space<vmem>>, vector<2x8x8x4xbf16>,
    %c0_54 = arith.constant 0 : index
    %c1_55 = arith.constant 1 : index
    %c2_56 = arith.constant 2 : index
    %c0_57 = arith.constant 0 : index
    %22 = vector.load %arg6[%c0_54, %c1_55, %c2_56, %c0_57] : memref<2x10x10x4xbf16, #tpu.memory_space<vmem>>, vector<2x8x8x4xbf16>
    %c0_58 = arith.constant 0 : index
    %c0_59 = arith.constant 0 : index
    %c0_60 = arith.constant 0 : index
    %c20 = arith.constant 20 : index
    %23 = vector.load %arg7[%c0_58, %c0_59, %c0_60, %c20] : memref<2x8x8x36xbf16, #tpu.memory_space<vmem>>, vector<2x8x8x4xbf16>
    tpu.vector_store %arg7[%c0_58, %c0_59, %c0_60, %c20], %22 {strides = array<i32>} : memref<2x8x8x36xbf16, #tpu.memory_space<vmem>>, vector<2x8x8x4xbf16>,
    %c0_61 = arith.constant 0 : index
    %c2_62 = arith.constant 2 : index
    %c0_63 = arith.constant 0 : index
    %c0_64 = arith.constant 0 : index
    %24 = vector.load %arg6[%c0_61, %c2_62, %c0_63, %c0_64] : memref<2x10x10x4xbf16, #tpu.memory_space<vmem>>, vector<2x8x8x4xbf16>
    %c0_65 = arith.constant 0 : index
    %c0_66 = arith.constant 0 : index
    %c0_67 = arith.constant 0 : index
    %c24 = arith.constant 24 : index
    %25 = vector.load %arg7[%c0_65, %c0_66, %c0_67, %c24] : memref<2x8x8x36xbf16, #tpu.memory_space<vmem>>, vector<2x8x8x4xbf16>
    tpu.vector_store %arg7[%c0_65, %c0_66, %c0_67, %c24], %24 {strides = array<i32>} : memref<2x8x8x36xbf16, #tpu.memory_space<vmem>>, vector<2x8x8x4xbf16>,
    %c0_68 = arith.constant 0 : index
    %c2_69 = arith.constant 2 : index
    %c1_70 = arith.constant 1 : index
    %c0_71 = arith.constant 0 : index
    %26 = vector.load %arg6[%c0_68, %c2_69, %c1_70, %c0_71] : memref<2x10x10x4xbf16, #tpu.memory_space<vmem>>, vector<2x8x8x4xbf16>
    %c0_72 = arith.constant 0 : index
    %c0_73 = arith.constant 0 : index
    %c0_74 = arith.constant 0 : index
    %c28 = arith.constant 28 : index
    %27 = vector.load %arg7[%c0_72, %c0_73, %c0_74, %c28] : memref<2x8x8x36xbf16, #tpu.memory_space<vmem>>, vector<2x8x8x4xbf16>
    tpu.vector_store %arg7[%c0_72, %c0_73, %c0_74, %c28], %26 {strides = array<i32>} : memref<2x8x8x36xbf16, #tpu.memory_space<vmem>>, vector<2x8x8x4xbf16>,
    %c0_75 = arith.constant 0 : index
    %c2_76 = arith.constant 2 : index
    %c2_77 = arith.constant 2 : index
    %c0_78 = arith.constant 0 : index
    %28 = vector.load %arg6[%c0_75, %c2_76, %c2_77, %c0_78] : memref<2x10x10x4xbf16, #tpu.memory_space<vmem>>, vector<2x8x8x4xbf16>
    %c0_79 = arith.constant 0 : index
    %c0_80 = arith.constant 0 : index
    %c0_81 = arith.constant 0 : index
    %c32 = arith.constant 32 : index
    %29 = vector.load %arg7[%c0_79, %c0_80, %c0_81, %c32] : memref<2x8x8x36xbf16, #tpu.memory_space<vmem>>, vector<2x8x8x4xbf16>
    tpu.vector_store %arg7[%c0_79, %c0_80, %c0_81, %c32], %28 {strides = array<i32>} : memref<2x8x8x36xbf16, #tpu.memory_space<vmem>>, vector<2x8x8x4xbf16>,
    %c0_82 = arith.constant 0 : index
    %c0_83 = arith.constant 0 : index
    %c0_84 = arith.constant 0 : index
    %c0_85 = arith.constant 0 : index
    %30 = vector.load %arg7[%c0_82, %c0_83, %c0_84, %c0_85] : memref<2x8x8x36xbf16, #tpu.memory_space<vmem>>, vector<2x8x8x36xbf16>
    %31 = vector.shape_cast %30 : vector<2x8x8x36xbf16> to vector<128x36xbf16>
    %c0_86 = arith.constant 0 : index
    %c0_87 = arith.constant 0 : index
    %32 = vector.load %arg3[%c0_86, %c0_87] : memref<36x8xbf16, #tpu.memory_space<vmem>>, vector<36x8xbf16>
    %cst = arith.constant dense<0.000000e+00> : vector<128x8xf32>
    %33 = tpu.matmul %31, %32, %cst {dimension_numbers = #tpu.dot_dimension_numbers<[1], [0], [0], [1], [0, 0, 1, 1], [], []>} : vector<128x36xbf16>, vector<36x8xbf16>, vector<128x8xf32> -> vector<128x8xf32>
    %34 = vector.shape_cast %33 : vector<128x8xf32> to vector<2x8x8x8xf32>
    %35 = arith.truncf %34 : vector<2x8x8x8xf32> to vector<2x8x8x8xbf16>
    %c0_88 = arith.constant 0 : index
    %c0_89 = arith.constant 0 : index
    %c0_90 = arith.constant 0 : index
    %c0_91 = arith.constant 0 : index
    %36 = vector.load %arg4[%c0_88, %c0_89, %c0_90, %c0_91] : memref<2x8x8x8xbf16, #tpu.memory_space<vmem>>, vector<2x8x8x8xbf16>
    tpu.vector_store %arg4[%c0_88, %c0_89, %c0_90, %c0_91], %35 {strides = array<i32>} : memref<2x8x8x8xbf16, #tpu.memory_space<vmem>>, vector<2x8x8x8xbf16>,
    %c0_92 = arith.constant 0 : index
    %c0_93 = arith.constant 0 : index
    %37 = vector.load %arg5[%c0_92, %c0_93] : memref<2x8xf32, #tpu.memory_space<vmem>>, vector<1x8xf32>
    %cst_94 = arith.constant dense<0.000000e+00> : vector<8xf32>
    %38 = vector.multi_reduction <add>, %33, %cst_94 [0] : vector<128x8xf32> to vector<8xf32>
    %39 = vector.shape_cast %38 : vector<8xf32> to vector<1x8xf32>
    %40 = arith.addf %37, %39 : vector<1x8xf32>
    %c0_95 = arith.constant 0 : index
    %c0_96 = arith.constant 0 : index
    %41 = vector.load %arg5[%c0_95, %c0_96] : memref<2x8xf32, #tpu.memory_space<vmem>>, vector<1x8xf32>
    tpu.vector_store %arg5[%c0_95, %c0_96], %40 {strides = array<i32>} : memref<2x8xf32, #tpu.memory_space<vmem>>, vector<1x8xf32>,
    %c1_97 = arith.constant 1 : index
    %c0_98 = arith.constant 0 : index
    %42 = vector.load %arg5[%c1_97, %c0_98] : memref<2x8xf32, #tpu.memory_space<vmem>>, vector<1x8xf32>
    %43 = arith.mulf %33, %33 : vector<128x8xf32>
    %cst_99 = arith.constant dense<0.000000e+00> : vector<8xf32>
    %44 = vector.multi_reduction <add>, %43, %cst_99 [0] : vector<128x8xf32> to vector<8xf32>
    %45 = vector.shape_cast %44 : vector<8xf32> to vector<1x8xf32>
    %46 = arith.addf %42, %45 : vector<1x8xf32>
    %c1_100 = arith.constant 1 : index
    %c0_101 = arith.constant 0 : index
    %47 = vector.load %arg5[%c1_100, %c0_101] : memref<2x8xf32, #tpu.memory_space<vmem>>, vector<1x8xf32>
    tpu.vector_store %arg5[%c1_100, %c0_101], %46 {strides = array<i32>} : memref<2x8xf32, #tpu.memory_space<vmem>>, vector<1x8xf32>,
    return
  }
  func.func @transform_0(%arg0: i32, %arg1: i32) -> (i32, i32, i32, i32) {
    %c0_i32 = arith.constant 0 : i32
    %c0_i32_0 = arith.constant 0 : i32
    %c0_i32_1 = arith.constant 0 : i32
    %c0_i32_2 = arith.constant 0 : i32
    return %arg1, %c0_i32, %c0_i32_0, %c0_i32_1 : i32, i32, i32, i32
  }
  func.func @transform_1(%arg0: i32, %arg1: i32) -> (i32, i32) {
    %c0_i32 = arith.constant 0 : i32
    %c0_i32_0 = arith.constant 0 : i32
    return %c0_i32, %arg0 : i32, i32
  }
  func.func @transform_2(%arg0: i32, %arg1: i32) -> (i32, i32, i32, i32) {
    %c0_i32 = arith.constant 0 : i32
    %c0_i32_0 = arith.constant 0 : i32
    %c0_i32_1 = arith.constant 0 : i32
    return %arg1, %c0_i32, %c0_i32_0, %arg0 : i32, i32, i32, i32
  }
  func.func @transform_3(%arg0: i32, %arg1: i32) -> (i32, i32) {
    %c0_i32 = arith.constant 0 : i32
    %c0_i32_0 = arith.constant 0 : i32
    return %c0_i32, %arg0 : i32, i32
  }
}

module attributes {stable_mosaic.version = 11 : i64} {
  func.func @_bn_relu_kernel(%arg0: i32, %arg1: memref<2x8x8x8xbf16, #tpu.memory_space<vmem>>, %arg2: memref<1x8xf32, #tpu.memory_space<vmem>>, %arg3: memref<1x8xf32, #tpu.memory_space<vmem>>, %arg4: memref<2x8x8x8xf32, #tpu.memory_space<vmem>>) attributes {dimension_semantics = [#tpu.dimension_semantics<parallel>], iteration_bounds = array<i64: 1>, scalar_prefetch = 0 : i64, scratch_operands = 0 : i64, tpu.core_type = #tpu.core_type<tc>, window_params = [{transform_indices = @transform_0, window_bounds = array<i64: 2, 8, 8, 8>}, {pipeline_mode = #tpu.pipeline_mode<synchronous>, transform_indices = @transform_1, window_bounds = array<i64: 1, 8>}, {pipeline_mode = #tpu.pipeline_mode<synchronous>, transform_indices = @transform_2, window_bounds = array<i64: 1, 8>}, {transform_indices = @transform_3, window_bounds = array<i64: 2, 8, 8, 8>}]} {
    %c0 = arith.constant 0 : index
    %c0_0 = arith.constant 0 : index
    %c0_1 = arith.constant 0 : index
    %c0_2 = arith.constant 0 : index
    %0 = vector.load %arg1[%c0, %c0_0, %c0_1, %c0_2] : memref<2x8x8x8xbf16, #tpu.memory_space<vmem>>, vector<2x8x8x8xbf16>
    %1 = arith.extf %0 : vector<2x8x8x8xbf16> to vector<2x8x8x8xf32>
    %c0_3 = arith.constant 0 : index
    %c0_4 = arith.constant 0 : index
    %2 = vector.load %arg2[%c0_3, %c0_4] : memref<1x8xf32, #tpu.memory_space<vmem>>, vector<1x8xf32>
    %3 = vector.shape_cast %2 : vector<1x8xf32> to vector<8xf32>
    %4 = vector.shape_cast %3 : vector<8xf32> to vector<1x1x1x8xf32>
    %5 = vector.broadcast %4 : vector<1x1x1x8xf32> to vector<2x8x8x8xf32>
    %6 = arith.mulf %1, %5 : vector<2x8x8x8xf32>
    %c0_5 = arith.constant 0 : index
    %c0_6 = arith.constant 0 : index
    %7 = vector.load %arg3[%c0_5, %c0_6] : memref<1x8xf32, #tpu.memory_space<vmem>>, vector<1x8xf32>
    %8 = vector.shape_cast %7 : vector<1x8xf32> to vector<8xf32>
    %9 = vector.shape_cast %8 : vector<8xf32> to vector<1x1x1x8xf32>
    %10 = vector.broadcast %9 : vector<1x1x1x8xf32> to vector<2x8x8x8xf32>
    %11 = arith.addf %6, %10 : vector<2x8x8x8xf32>
    %cst = arith.constant 0.000000e+00 : f32
    %12 = vector.broadcast %cst : f32 to vector<2x8x8x8xf32>
    %13 = arith.maximumf %11, %12 : vector<2x8x8x8xf32>
    %c0_7 = arith.constant 0 : index
    %c0_8 = arith.constant 0 : index
    %c0_9 = arith.constant 0 : index
    %c0_10 = arith.constant 0 : index
    %14 = vector.load %arg4[%c0_7, %c0_8, %c0_9, %c0_10] : memref<2x8x8x8xf32, #tpu.memory_space<vmem>>, vector<2x8x8x8xf32>
    tpu.vector_store %arg4[%c0_7, %c0_8, %c0_9, %c0_10], %13 {strides = array<i32>} : memref<2x8x8x8xf32, #tpu.memory_space<vmem>>, vector<2x8x8x8xf32>,
    return
  }
  func.func @transform_0(%arg0: i32) -> (i32, i32, i32, i32) {
    %c0_i32 = arith.constant 0 : i32
    %c0_i32_0 = arith.constant 0 : i32
    %c0_i32_1 = arith.constant 0 : i32
    %c0_i32_2 = arith.constant 0 : i32
    return %arg0, %c0_i32, %c0_i32_0, %c0_i32_1 : i32, i32, i32, i32
  }
  func.func @transform_1(%arg0: i32) -> (i32, i32) {
    %c0_i32 = arith.constant 0 : i32
    %c0_i32_0 = arith.constant 0 : i32
    %c0_i32_1 = arith.constant 0 : i32
    return %c0_i32, %c0_i32_0 : i32, i32
  }
  func.func @transform_2(%arg0: i32) -> (i32, i32) {
    %c0_i32 = arith.constant 0 : i32
    %c0_i32_0 = arith.constant 0 : i32
    %c0_i32_1 = arith.constant 0 : i32
    return %c0_i32, %c0_i32_0 : i32, i32
  }
  func.func @transform_3(%arg0: i32) -> (i32, i32, i32, i32) {
    %c0_i32 = arith.constant 0 : i32
    %c0_i32_0 = arith.constant 0 : i32
    %c0_i32_1 = arith.constant 0 : i32
    %c0_i32_2 = arith.constant 0 : i32
    return %arg0, %c0_i32, %c0_i32_0, %c0_i32_1 : i32, i32, i32, i32
  }
}

</mosaic_0001>

<llo_original>
// kernel: _lambda_.5
$region0: #{_lambda_.5}
  #allocation0 [shape = 'u32[]', space=smem, size = 0x4, offset = 0x4, fixed_abs, tag = 'smem constant byte address 0x4 - core index']
  #allocation1 [shape = 'u32[144,128]{1,0:T(1,128)}', space=vmem, size = 0x12000, scoped, tag = 'internal scratch']
  %s0 = inlined_call_operand.vmem [shape: bf16[2,8,8,8], index: 0, kind: input, shape index: {}]
  %s1 = inlined_call_operand.vmem [shape: f32[1,8], index: 1, kind: input, shape index: {}]
  %s2 = inlined_call_operand.vmem [shape: f32[1,8], index: 2, kind: input, shape index: {}]
  %s3 = inlined_call_operand.vmem [shape: f32[2,8,8,8], index: 3, kind: output, shape index: {}]
  %s4 = sld [smem:[#allocation0]]
  $region22: #{_lambda_.5} parent=0
    _
  %s6 = ssub.s32 1, %s4
  %s7 = scalar_select 0, %s6, %s4
  // Predicated region
  $region2: #{_lambda_.5} parent=0 // pred_check
    _
  $region3: #{_lambda_.5} parent=0 // pred_check_branch
    %9 = sbr.rel (0) target = $region5
  $region4: #{_lambda_.5} parent=0 // pred_region
    _
  $region5: #{_lambda_.5} parent=0 // pred_fallthru
    _
  // Predicated region
  $region6: #{_lambda_.5} parent=0 // pred_check
    _
  $region7: #{_lambda_.5} parent=0 // pred_check_branch
    %11 = sbr.rel (0) target = $region9
  $region8: #{_lambda_.5} parent=0 // pred_region
    _
  $region9: #{_lambda_.5} parent=0 // pred_fallthru
    _
  // Predicated region
  $region10: #{_lambda_.5} parent=0 // pred_check
    _
  $region11: #{_lambda_.5} parent=0 // pred_check_branch
    %13 = sbr.rel (0) target = $region13
  $region12: #{_lambda_.5} parent=0 // pred_region
    _
  $region13: #{_lambda_.5} parent=0 // pred_fallthru
    _
  %v14 = vld [vmem:[%s0] sm:$0xf]
  %v15 = vld [vmem:[%s0 + $0x4] sm:$0xf]
  %v16 = vld [vmem:[%s0 + $0x8] sm:$0xf]
  %v17 = vld [vmem:[%s0 + $0xc] sm:$0xf]
  %v18 = vld [vmem:[%s0 + $0x10] sm:$0xf]
  %v19 = vld [vmem:[%s0 + $0x14] sm:$0xf]
  %v20 = vld [vmem:[%s0 + $0x18] sm:$0xf]
  %v21 = vld [vmem:[%s0 + $0x1c] sm:$0xf]
  %v22 = vld [vmem:[%s0 + $0x20] sm:$0xf]
  %v23 = vld [vmem:[%s0 + $0x24] sm:$0xf]
  %v24 = vld [vmem:[%s0 + $0x28] sm:$0xf]
  %v25 = vld [vmem:[%s0 + $0x2c] sm:$0xf]
  %v26 = vld [vmem:[%s0 + $0x30] sm:$0xf]
  %v27 = vld [vmem:[%s0 + $0x34] sm:$0xf]
  %v28 = vld [vmem:[%s0 + $0x38] sm:$0xf]
  %v29 = vld [vmem:[%s0 + $0x3c] sm:$0xf]
  %v30 = vunpack.c.l.bf16 %v14
  %v31 = vunpack.c.l.bf16 %v15
  %v32 = vunpack.c.l.bf16 %v16
  %v33 = vunpack.c.l.bf16 %v17
  %v34 = vunpack.c.l.bf16 %v18
  %v35 = vunpack.c.l.bf16 %v19
  %v36 = vunpack.c.l.bf16 %v20
  %v37 = vunpack.c.l.bf16 %v21
  %v38 = vunpack.c.l.bf16 %v22
  %v39 = vunpack.c.l.bf16 %v23
  %v40 = vunpack.c.l.bf16 %v24
  %v41 = vunpack.c.l.bf16 %v25
  %v42 = vunpack.c.l.bf16 %v26
  %v43 = vunpack.c.l.bf16 %v27
  %v44 = vunpack.c.l.bf16 %v28
  %v45 = vunpack.c.l.bf16 %v29
  %v46 = vld [vmem:[%s1] sm:$0x1]
  %v48 = vlaneseq
  %v49 = vshrl.u32 %v48, 7
  %v50 = vsub.s32 0, %v49
  %v51 = vrot.slane %v46, %v50
  %v53 = vmul.f32 %v30, %v51
  %v54 = vmul.f32 %v31, %v51
  %v55 = vmul.f32 %v32, %v51
  %v56 = vmul.f32 %v33, %v51
  %v57 = vmul.f32 %v34, %v51
  %v58 = vmul.f32 %v35, %v51
  %v59 = vmul.f32 %v36, %v51
  %v60 = vmul.f32 %v37, %v51
  %v61 = vmul.f32 %v38, %v51
  %v62 = vmul.f32 %v39, %v51
  %v63 = vmul.f32 %v40, %v51
  %v64 = vmul.f32 %v41, %v51
  %v65 = vmul.f32 %v42, %v51
  %v66 = vmul.f32 %v43, %v51
  %v67 = vmul.f32 %v44, %v51
  %v68 = vmul.f32 %v45, %v51
  %v69 = vld [vmem:[%s2] sm:$0x1]
  %v71 = vlaneseq
  %v72 = vshrl.u32 %v71, 7
  %v73 = vsub.s32 0, %v72
  %v74 = vrot.slane %v69, %v73
  %v76 = vadd.f32 %v53, %v74
  %v77 = vadd.f32 %v54, %v74
  %v78 = vadd.f32 %v55, %v74
  %v79 = vadd.f32 %v56, %v74
  %v80 = vadd.f32 %v57, %v74
  %v81 = vadd.f32 %v58, %v74
  %v82 = vadd.f32 %v59, %v74
  %v83 = vadd.f32 %v60, %v74
  %v84 = vadd.f32 %v61, %v74
  %v85 = vadd.f32 %v62, %v74
  %v86 = vadd.f32 %v63, %v74
  %v87 = vadd.f32 %v64, %v74
  %v88 = vadd.f32 %v65, %v74
  %v89 = vadd.f32 %v66, %v74
  %v90 = vadd.f32 %v67, %v74
  %v91 = vadd.f32 %v68, %v74
  %v92 = vmax.f32 %v76, 0.0
  %v93 = vmax.f32 %v77, 0.0
  %v94 = vmax.f32 %v78, 0.0
  %v95 = vmax.f32 %v79, 0.0
  %v96 = vmax.f32 %v80, 0.0
  %v97 = vmax.f32 %v81, 0.0
  %v98 = vmax.f32 %v82, 0.0
  %v99 = vmax.f32 %v83, 0.0
  %v100 = vmax.f32 %v84, 0.0
  %v101 = vmax.f32 %v85, 0.0
  %v102 = vmax.f32 %v86, 0.0
  %v103 = vmax.f32 %v87, 0.0
  %v104 = vmax.f32 %v88, 0.0
  %v105 = vmax.f32 %v89, 0.0
  %v106 = vmax.f32 %v90, 0.0
  %v107 = vmax.f32 %v91, 0.0
  %vm108 = vcmask 64512
  %109 = vst.msk [vmem:[%s3] sm:$0xff] %vm108, %v92
  %110 = vst.msk [vmem:[%s3 + $0x8] sm:$0xff] %vm108, %v93
  %111 = vst.msk [vmem:[%s3 + $0x10] sm:$0xff] %vm108, %v94
  %112 = vst.msk [vmem:[%s3 + $0x18] sm:$0xff] %vm108, %v95
  %113 = vst.msk [vmem:[%s3 + $0x20] sm:$0xff] %vm108, %v96
  %114 = vst.msk [vmem:[%s3 + $0x28] sm:$0xff] %vm108, %v97
  %115 = vst.msk [vmem:[%s3 + $0x30] sm:$0xff] %vm108, %v98
  %116 = vst.msk [vmem:[%s3 + $0x38] sm:$0xff] %vm108, %v99
  %117 = vst.msk [vmem:[%s3 + $0x40] sm:$0xff] %vm108, %v100
  %118 = vst.msk [vmem:[%s3 + $0x48] sm:$0xff] %vm108, %v101
  %119 = vst.msk [vmem:[%s3 + $0x50] sm:$0xff] %vm108, %v102
  %120 = vst.msk [vmem:[%s3 + $0x58] sm:$0xff] %vm108, %v103
  %121 = vst.msk [vmem:[%s3 + $0x60] sm:$0xff] %vm108, %v104
  %122 = vst.msk [vmem:[%s3 + $0x68] sm:$0xff] %vm108, %v105
  %123 = vst.msk [vmem:[%s3 + $0x70] sm:$0xff] %vm108, %v106
  %124 = vst.msk [vmem:[%s3 + $0x78] sm:$0xff] %vm108, %v107
  // Predicated region
  $region14: #{_lambda_.5} parent=0 // pred_check
    _
  $region15: #{_lambda_.5} parent=0 // pred_check_branch
    %126 = sbr.rel (0) target = $region17
  $region16: #{_lambda_.5} parent=0 // pred_region
    _
  $region17: #{_lambda_.5} parent=0 // pred_fallthru
    _
  // Predicated region
  $region18: #{_lambda_.5} parent=0 // pred_check
    _
  $region19: #{_lambda_.5} parent=0 // pred_check_branch
    %128 = sbr.rel (0) target = $region21
  $region20: #{_lambda_.5} parent=0 // pred_region
    _
  $region21: #{_lambda_.5} parent=0 // pred_fallthru
    _

// kernel: _lambda_.4
$region0: #{_lambda_.4}
  #allocation0 [shape = 'u32[]', space=smem, size = 0x4, offset = 0x4, fixed_abs, tag = 'smem constant byte address 0x4 - core index']
  #allocation1 [shape = 'u32[144,128]{1,0:T(1,128)}', space=vmem, size = 0x12000, scoped, tag = 'internal scratch']
  #allocation2 [shape = 'bf16[2,10,10,8]{3,2,1,0:T(8,128)(2,1)}', space=vmem, size = 0x14000, scoped, tag = 'scratch operand']
  #allocation3 [shape = 'bf16[2,8,8,72]{3,2,1,0:T(8,128)(2,1)}', space=vmem, size = 0x8000, scoped, tag = 'scratch operand']
  %s0 = inlined_call_operand.vmem [shape: bf16[2,8,8,8], index: 0, kind: input, shape index: {}]
  %s1 = inlined_call_operand.vmem [shape: f32[1,8], index: 1, kind: input, shape index: {}]
  %s2 = inlined_call_operand.vmem [shape: f32[1,8], index: 2, kind: input, shape index: {}]
  %s3 = inlined_call_operand.vmem [shape: bf16[72,8], index: 3, kind: input, shape index: {}]
  %s4 = inlined_call_operand.vmem [shape: bf16[2,8,8,8], index: 4, kind: output, shape index: {0}]
  %s5 = inlined_call_operand.vmem [shape: f32[2,8], index: 5, kind: output, shape index: {1}]
  %6 = xla_tuple %s4, %s5
  %s7 = sld [smem:[#allocation0]]
  $region38: #{_lambda_.4} parent=0
    _
  %s9 = ssub.s32 1, %s7
  %s10 = scalar_select 0, %s9, %s7
  // Predicated region
  $region2: #{_lambda_.4} parent=0 // pred_check
    _
  $region3: #{_lambda_.4} parent=0 // pred_check_branch
    %12 = sbr.rel (0) target = $region5
  $region4: #{_lambda_.4} parent=0 // pred_region
    _
  $region5: #{_lambda_.4} parent=0 // pred_fallthru
    _
  // Predicated region
  $region6: #{_lambda_.4} parent=0 // pred_check
    _
  $region7: #{_lambda_.4} parent=0 // pred_check_branch
    %14 = sbr.rel (0) target = $region9
  $region8: #{_lambda_.4} parent=0 // pred_region
    _
  $region9: #{_lambda_.4} parent=0 // pred_fallthru
    _
  // Predicated region
  $region10: #{_lambda_.4} parent=0 // pred_check
    _
  $region11: #{_lambda_.4} parent=0 // pred_check_branch
    %16 = sbr.rel (0) target = $region13
  $region12: #{_lambda_.4} parent=0 // pred_region
    _
  $region13: #{_lambda_.4} parent=0 // pred_fallthru
    _
  // Predicated region
  $region14: #{_lambda_.4} parent=0 // pred_check
    _
  $region15: #{_lambda_.4} parent=0 // pred_check_branch
    %18 = sbr.rel (0) target = $region17
  $region16: #{_lambda_.4} parent=0 // pred_region
    _
  $region17: #{_lambda_.4} parent=0 // pred_fallthru
    _
  %p20 = scmp.eq.s32.totalorder 0, 0
  // Predicated region
  $region18: #{_lambda_.4} parent=0 // pred_check
    %p21 = pneg %p20
  $region19: #{_lambda_.4} parent=0 // pred_check_branch
    %23 = sbr.rel (%p21) target = $region21
  $region20: #{_lambda_.4} parent=0 // pred_region
    %vm24 = vcmask 60416
    %25 = vst.msk [vmem:[#allocation2] sm:$0xf] %vm24, 0
    %vm26 = vcmask 57344
    %27 = vst.msk [vmem:[#allocation2 + $0x4] sm:$0x1] %vm26, 0
    %28 = vst.msk [vmem:[#allocation2 + $0x50] sm:$0xf] %vm24, 0
    %29 = vst.msk [vmem:[#allocation2 + $0x54] sm:$0x1] %vm26, 0
    %s30 = scalar_lea.vmem [#allocation2], 72
    %31 = vst.msk [vmem:[%s30] sm:$0xf] %vm24, 0
    %32 = vst.msk [vmem:[%s30 + $0x4] sm:$0x1] %vm26, 0
    %33 = vst.msk [vmem:[%s30 + $0x50] sm:$0xf] %vm24, 0
    %34 = vst.msk [vmem:[%s30 + $0x54] sm:$0x1] %vm26, 0
    %vm35 = vcmask 57344
    %vm36 = vsmask.f32 256
    %vm37 = vmand %vm35, %vm36
    %v38 = vld [vmem:[#allocation2] sm:$0x1]
    %v39 = vsel %vm37, 0, %v38
    %40 = vst [vmem:[#allocation2] sm:$0x1] %v39
    %v41 = vld [vmem:[#allocation2 + $0x8] sm:$0x1]
    %v42 = vsel %vm37, 0, %v41
    %43 = vst [vmem:[#allocation2 + $0x8] sm:$0x1] %v42
    %v44 = vld [vmem:[#allocation2 + $0x10] sm:$0x1]
    %v45 = vsel %vm37, 0, %v44
    %46 = vst [vmem:[#allocation2 + $0x10] sm:$0x1] %v45
    %v47 = vld [vmem:[#allocation2 + $0x18] sm:$0x1]
    %v48 = vsel %vm37, 0, %v47
    %49 = vst [vmem:[#allocation2 + $0x18] sm:$0x1] %v48
    %v50 = vld [vmem:[#allocation2 + $0x20] sm:$0x1]
    %v51 = vsel %vm37, 0, %v50
    %52 = vst [vmem:[#allocation2 + $0x20] sm:$0x1] %v51
    %v53 = vld [vmem:[#allocation2 + $0x28] sm:$0x1]
    %v54 = vsel %vm37, 0, %v53
    %55 = vst [vmem:[#allocation2 + $0x28] sm:$0x1] %v54
    %v56 = vld [vmem:[#allocation2 + $0x30] sm:$0x1]
    %v57 = vsel %vm37, 0, %v56
    %58 = vst [vmem:[#allocation2 + $0x30] sm:$0x1] %v57
    %v59 = vld [vmem:[#allocation2 + $0x38] sm:$0x1]
    %v60 = vsel %vm37, 0, %v59
    %61 = vst [vmem:[#allocation2 + $0x38] sm:$0x1] %v60
    %v62 = vld [vmem:[#allocation2 + $0x40] sm:$0x1]
    %v63 = vsel %vm37, 0, %v62
    %64 = vst [vmem:[#allocation2 + $0x40] sm:$0x1] %v63
    %v65 = vld [vmem:[#allocation2 + $0x48] sm:$0x1]
    %v66 = vsel %vm37, 0, %v65
    %67 = vst [vmem:[#allocation2 + $0x48] sm:$0x1] %v66
    %v68 = vld [vmem:[#allocation2 + $0x50] sm:$0x1]
    %v69 = vsel %vm37, 0, %v68
    %70 = vst [vmem:[#allocation2 + $0x50] sm:$0x1] %v69
    %v71 = vld [vmem:[#allocation2 + $0x58] sm:$0x1]
    %v72 = vsel %vm37, 0, %v71
    %73 = vst [vmem:[#allocation2 + $0x58] sm:$0x1] %v72
    %v74 = vld [vmem:[#allocation2 + $0x60] sm:$0x1]
    %v75 = vsel %vm37, 0, %v74
    %76 = vst [vmem:[#allocation2 + $0x60] sm:$0x1] %v75
    %v77 = vld [vmem:[#allocation2 + $0x68] sm:$0x1]
    %v78 = vsel %vm37, 0, %v77
    %79 = vst [vmem:[#allocation2 + $0x68] sm:$0x1] %v78
    %v80 = vld [vmem:[#allocation2 + $0x70] sm:$0x1]
    %v81 = vsel %vm37, 0, %v80
    %82 = vst [vmem:[#allocation2 + $0x70] sm:$0x1] %v81
    %v83 = vld [vmem:[#allocation2 + $0x78] sm:$0x1]
    %v84 = vsel %vm37, 0, %v83
    %85 = vst [vmem:[#allocation2 + $0x78] sm:$0x1] %v84
    %v86 = vld [vmem:[#allocation2 + $0x80] sm:$0x1]
    %v87 = vsel %vm37, 0, %v86
    %88 = vst [vmem:[#allocation2 + $0x80] sm:$0x1] %v87
    %v89 = vld [vmem:[#allocation2 + $0x88] sm:$0x1]
    %v90 = vsel %vm37, 0, %v89
    %91 = vst [vmem:[#allocation2 + $0x88] sm:$0x1] %v90
    %v92 = vld [vmem:[#allocation2 + $0x90] sm:$0x1]
    %v93 = vsel %vm37, 0, %v92
    %94 = vst [vmem:[#allocation2 + $0x90] sm:$0x1] %v93
    %v95 = vld [vmem:[#allocation2 + $0x98] sm:$0x1]
    %v96 = vsel %vm37, 0, %v95
    %97 = vst [vmem:[#allocation2 + $0x98] sm:$0x1] %v96
    %vm98 = vsmask.f32 7938
    %vm99 = vmand %vm35, %vm98
    %v100 = vld [vmem:[#allocation2 + $0x4] sm:$0x1]
    %v101 = vsel %vm99, 0, %v100
    %102 = vst [vmem:[#allocation2 + $0x4] sm:$0x1] %v101
    %v103 = vld [vmem:[#allocation2 + $0xc] sm:$0x1]
    %v104 = vsel %vm99, 0, %v103
    %105 = vst [vmem:[#allocation2 + $0xc] sm:$0x1] %v104
    %v106 = vld [vmem:[#allocation2 + $0x14] sm:$0x1]
    %v107 = vsel %vm99, 0, %v106
    %108 = vst [vmem:[#allocation2 + $0x14] sm:$0x1] %v107
    %v109 = vld [vmem:[#allocation2 + $0x1c] sm:$0x1]
    %v110 = vsel %vm99, 0, %v109
    %111 = vst [vmem:[#allocation2 + $0x1c] sm:$0x1] %v110
    %v112 = vld [vmem:[#allocation2 + $0x24] sm:$0x1]
    %v113 = vsel %vm99, 0, %v112
    %114 = vst [vmem:[#allocation2 + $0x24] sm:$0x1] %v113
    %v115 = vld [vmem:[#allocation2 + $0x2c] sm:$0x1]
    %v116 = vsel %vm99, 0, %v115
    %117 = vst [vmem:[#allocation2 + $0x2c] sm:$0x1] %v116
    %v118 = vld [vmem:[#allocation2 + $0x34] sm:$0x1]
    %v119 = vsel %vm99, 0, %v118
    %120 = vst [vmem:[#allocation2 + $0x34] sm:$0x1] %v119
    %v121 = vld [vmem:[#allocation2 + $0x3c] sm:$0x1]
    %v122 = vsel %vm99, 0, %v121
    %123 = vst [vmem:[#allocation2 + $0x3c] sm:$0x1] %v122
    %v124 = vld [vmem:[#allocation2 + $0x44] sm:$0x1]
    %v125 = vsel %vm99, 0, %v124
    %126 = vst [vmem:[#allocation2 + $0x44] sm:$0x1] %v125
    %v127 = vld [vmem:[#allocation2 + $0x4c] sm:$0x1]
    %v128 = vsel %vm99, 0, %v127
    %129 = vst [vmem:[#allocation2 + $0x4c] sm:$0x1] %v128
    %v130 = vld [vmem:[#allocation2 + $0x54] sm:$0x1]
    %v131 = vsel %vm99, 0, %v130
    %132 = vst [vmem:[#allocation2 + $0x54] sm:$0x1] %v131
    %v133 = vld [vmem:[#allocation2 + $0x5c] sm:$0x1]
    %v134 = vsel %vm99, 0, %v133
    %135 = vst [vmem:[#allocation2 + $0x5c] sm:$0x1] %v134
    %v136 = vld [vmem:[#allocation2 + $0x64] sm:$0x1]
    %v137 = vsel %vm99, 0, %v136
    %138 = vst [vmem:[#allocation2 + $0x64] sm:$0x1] %v137
    %v139 = vld [vmem:[#allocation2 + $0x6c] sm:$0x1]
    %v140 = vsel %vm99, 0, %v139
    %141 = vst [vmem:[#allocation2 + $0x6c] sm:$0x1] %v140
    %v142 = vld [vmem:[#allocation2 + $0x74] sm:$0x1]
    %v143 = vsel %vm99, 0, %v142
    %144 = vst [vmem:[#allocation2 + $0x74] sm:$0x1] %v143
    %v145 = vld [vmem:[#allocation2 + $0x7c] sm:$0x1]
    %v146 = vsel %vm99, 0, %v145
    %147 = vst [vmem:[#allocation2 + $0x7c] sm:$0x1] %v146
    %v148 = vld [vmem:[#allocation2 + $0x84] sm:$0x1]
    %v149 = vsel %vm99, 0, %v148
    %150 = vst [vmem:[#allocation2 + $0x84] sm:$0x1] %v149
    %v151 = vld [vmem:[#allocation2 + $0x8c] sm:$0x1]
    %v152 = vsel %vm99, 0, %v151
    %153 = vst [vmem:[#allocation2 + $0x8c] sm:$0x1] %v152
    %v154 = vld [vmem:[#allocation2 + $0x94] sm:$0x1]
    %v155 = vsel %vm99, 0, %v154
    %156 = vst [vmem:[#allocation2 + $0x94] sm:$0x1] %v155
    %v157 = vld [vmem:[#allocation2 + $0x9c] sm:$0x1]
    %v158 = vsel %vm99, 0, %v157
    %159 = vst [vmem:[#allocation2 + $0x9c] sm:$0x1] %v158
    %vm160 = vcmask 58368
    %161 = vst.msk [vmem:[%s5] sm:$0x3] %vm160, 0.0
  $region21: #{_lambda_.4} parent=0 // pred_fallthru
    _
  %v162 = vld [vmem:[%s0] sm:$0xf]
  %v163 = vld [vmem:[%s0 + $0x4] sm:$0xf]
  %v164 = vld [vmem:[%s0 + $0x8] sm:$0xf]
  %v165 = vld [vmem:[%s0 + $0xc] sm:$0xf]
  %v166 = vld [vmem:[%s0 + $0x10] sm:$0xf]
  %v167 = vld [vmem:[%s0 + $0x14] sm:$0xf]
  %v168 = vld [vmem:[%s0 + $0x18] sm:$0xf]
  %v169 = vld [vmem:[%s0 + $0x1c] sm:$0xf]
  %v170 = vld [vmem:[%s0 + $0x20] sm:$0xf]
  %v171 = vld [vmem:[%s0 + $0x24] sm:$0xf]
  %v172 = vld [vmem:[%s0 + $0x28] sm:$0xf]
  %v173 = vld [vmem:[%s0 + $0x2c] sm:$0xf]
  %v174 = vld [vmem:[%s0 + $0x30] sm:$0xf]
  %v175 = vld [vmem:[%s0 + $0x34] sm:$0xf]
  %v176 = vld [vmem:[%s0 + $0x38] sm:$0xf]
  %v177 = vld [vmem:[%s0 + $0x3c] sm:$0xf]
  %v178 = vunpack.c.l.bf16 %v162
  %v179 = vunpack.c.l.bf16 %v163
  %v180 = vunpack.c.l.bf16 %v164
  %v181 = vunpack.c.l.bf16 %v165
  %v182 = vunpack.c.l.bf16 %v166
  %v183 = vunpack.c.l.bf16 %v167
  %v184 = vunpack.c.l.bf16 %v168
  %v185 = vunpack.c.l.bf16 %v169
  %v186 = vunpack.c.l.bf16 %v170
  %v187 = vunpack.c.l.bf16 %v171
  %v188 = vunpack.c.l.bf16 %v172
  %v189 = vunpack.c.l.bf16 %v173
  %v190 = vunpack.c.l.bf16 %v174
  %v191 = vunpack.c.l.bf16 %v175
  %v192 = vunpack.c.l.bf16 %v176
  %v193 = vunpack.c.l.bf16 %v177
  %v194 = vld [vmem:[%s1] sm:$0x1]
  %v196 = vlaneseq
  %v197 = vshrl.u32 %v196, 7
  %v198 = vsub.s32 0, %v197
  %v199 = vrot.slane %v194, %v198
  %v201 = vmul.f32 %v178, %v199
  %v202 = vmul.f32 %v179, %v199
  %v203 = vmul.f32 %v180, %v199
  %v204 = vmul.f32 %v181, %v199
  %v205 = vmul.f32 %v182, %v199
  %v206 = vmul.f32 %v183, %v199
  %v207 = vmul.f32 %v184, %v199
  %v208 = vmul.f32 %v185, %v199
  %v209 = vmul.f32 %v186, %v199
  %v210 = vmul.f32 %v187, %v199
  %v211 = vmul.f32 %v188, %v199
  %v212 = vmul.f32 %v189, %v199
  %v213 = vmul.f32 %v190, %v199
  %v214 = vmul.f32 %v191, %v199
  %v215 = vmul.f32 %v192, %v199
  %v216 = vmul.f32 %v193, %v199
  %v217 = vld [vmem:[%s2] sm:$0x1]
  %v219 = vlaneseq
  %v220 = vshrl.u32 %v219, 7
  %v221 = vsub.s32 0, %v220
  %v222 = vrot.slane %v217, %v221
  %v224 = vadd.f32 %v201, %v222
  %v225 = vadd.f32 %v202, %v222
  %v226 = vadd.f32 %v203, %v222
  %v227 = vadd.f32 %v204, %v222
  %v228 = vadd.f32 %v205, %v222
  %v229 = vadd.f32 %v206, %v222
  %v230 = vadd.f32 %v207, %v222
  %v231 = vadd.f32 %v208, %v222
  %v232 = vadd.f32 %v209, %v222
  %v233 = vadd.f32 %v210, %v222
  %v234 = vadd.f32 %v211, %v222
  %v235 = vadd.f32 %v212, %v222
  %v236 = vadd.f32 %v213, %v222
  %v237 = vadd.f32 %v214, %v222
  %v238 = vadd.f32 %v215, %v222
  %v239 = vadd.f32 %v216, %v222
  %v240 = vmax.f32 %v224, 0.0
  %v241 = vmax.f32 %v225, 0.0
  %v242 = vmax.f32 %v226, 0.0
  %v243 = vmax.f32 %v227, 0.0
  %v244 = vmax.f32 %v228, 0.0
  %v245 = vmax.f32 %v229, 0.0
  %v246 = vmax.f32 %v230, 0.0
  %v247 = vmax.f32 %v231, 0.0
  %v248 = vmax.f32 %v232, 0.0
  %v249 = vmax.f32 %v233, 0.0
  %v250 = vmax.f32 %v234, 0.0
  %v251 = vmax.f32 %v235, 0.0
  %v252 = vmax.f32 %v236, 0.0
  %v253 = vmax.f32 %v237, 0.0
  %v254 = vmax.f32 %v238, 0.0
  %v255 = vmax.f32 %v239, 0.0
  %v256 = vpack.c.bf16 %v240, %v240
  %v257 = vpack.c.bf16 %v241, %v241
  %v258 = vpack.c.bf16 %v242, %v242
  %v259 = vpack.c.bf16 %v243, %v243
  %v260 = vpack.c.bf16 %v244, %v244
  %v261 = vpack.c.bf16 %v245, %v245
  %v262 = vpack.c.bf16 %v246, %v246
  %v263 = vpack.c.bf16 %v247, %v247
  %v264 = vpack.c.bf16 %v248, %v248
  %v265 = vpack.c.bf16 %v249, %v249
  %v266 = vpack.c.bf16 %v250, %v250
  %v267 = vpack.c.bf16 %v251, %v251
  %v268 = vpack.c.bf16 %v252, %v252
  %v269 = vpack.c.bf16 %v253, %v253
  %v270 = vpack.c.bf16 %v254, %v254
  %v271 = vpack.c.bf16 %v255, %v255
  %v288 = vunpack.c.l.b16 %v256
  %v289 = vunpack.c.l.b16 %v257
  %v290 = vunpack.c.l.b16 %v258
  %v291 = vunpack.c.l.b16 %v259
  %v292 = vunpack.c.l.b16 %v260
  %v293 = vunpack.c.l.b16 %v261
  %v294 = vunpack.c.l.b16 %v262
  %v295 = vunpack.c.l.b16 %v263
  %v296 = vunpack.c.l.b16 %v264
  %v297 = vunpack.c.l.b16 %v265
  %v298 = vunpack.c.l.b16 %v266
  %v299 = vunpack.c.l.b16 %v267
  %v300 = vunpack.c.l.b16 %v268
  %v301 = vunpack.c.l.b16 %v269
  %v302 = vunpack.c.l.b16 %v270
  %v303 = vunpack.c.l.b16 %v271
  %v304 = vpack.c.b16 %v288, %v288
  %v305 = vpack.c.b16 %v289, %v289
  %v306 = vpack.c.b16 %v290, %v290
  %v307 = vpack.c.b16 %v291, %v291
  %v308 = vpack.c.b16 %v292, %v292
  %v309 = vpack.c.b16 %v293, %v293
  %v310 = vpack.c.b16 %v294, %v294
  %v311 = vpack.c.b16 %v295, %v295
  %v312 = vpack.c.b16 %v296, %v296
  %v313 = vpack.c.b16 %v297, %v297
  %v314 = vpack.c.b16 %v298, %v298
  %v315 = vpack.c.b16 %v299, %v299
  %v316 = vpack.c.b16 %v300, %v300
  %v317 = vpack.c.b16 %v301, %v301
  %v318 = vpack.c.b16 %v302, %v302
  %v319 = vpack.c.b16 %v303, %v303
  %v321 = vshrl.u32 %v304, 16
  %v323 = vrot.slane %v321, 7
  %v324 = vshll.u32 %v304, 16
  %v326 = vor.u32 %v323, %v324
  %v327 = vrot.slane %v323, 4
  %v329 = vshrl.u32 %v305, 16
  %v331 = vrot.slane %v329, 7
  %v332 = vshll.u32 %v305, 16
  %v334 = vor.u32 %v331, %v332
  %v335 = vrot.slane %v331, 4
  %v337 = vshrl.u32 %v306, 16
  %v339 = vrot.slane %v337, 7
  %v340 = vshll.u32 %v306, 16
  %v342 = vor.u32 %v339, %v340
  %v343 = vrot.slane %v339, 4
  %v345 = vshrl.u32 %v307, 16
  %v347 = vrot.slane %v345, 7
  %v348 = vshll.u32 %v307, 16
  %v350 = vor.u32 %v347, %v348
  %v351 = vrot.slane %v347, 4
  %v353 = vshrl.u32 %v308, 16
  %v355 = vrot.slane %v353, 7
  %v356 = vshll.u32 %v308, 16
  %v358 = vor.u32 %v355, %v356
  %v359 = vrot.slane %v355, 4
  %v361 = vshrl.u32 %v309, 16
  %v363 = vrot.slane %v361, 7
  %v364 = vshll.u32 %v309, 16
  %v366 = vor.u32 %v363, %v364
  %v367 = vrot.slane %v363, 4
  %v369 = vshrl.u32 %v310, 16
  %v371 = vrot.slane %v369, 7
  %v372 = vshll.u32 %v310, 16
  %v374 = vor.u32 %v371, %v372
  %v375 = vrot.slane %v371, 4
  %v377 = vshrl.u32 %v311, 16
  %v379 = vrot.slane %v377, 7
  %v380 = vshll.u32 %v311, 16
  %v382 = vor.u32 %v379, %v380
  %v383 = vrot.slane %v379, 4
  %v385 = vshrl.u32 %v312, 16
  %v387 = vrot.slane %v385, 7
  %v388 = vshll.u32 %v312, 16
  %v390 = vor.u32 %v387, %v388
  %v391 = vrot.slane %v387, 4
  %v393 = vshrl.u32 %v313, 16
  %v395 = vrot.slane %v393, 7
  %v396 = vshll.u32 %v313, 16
  %v398 = vor.u32 %v395, %v396
  %v399 = vrot.slane %v395, 4
  %v401 = vshrl.u32 %v314, 16
  %v403 = vrot.slane %v401, 7
  %v404 = vshll.u32 %v314, 16
  %v406 = vor.u32 %v403, %v404
  %v407 = vrot.slane %v403, 4
  %v409 = vshrl.u32 %v315, 16
  %v411 = vrot.slane %v409, 7
  %v412 = vshll.u32 %v315, 16
  %v414 = vor.u32 %v411, %v412
  %v415 = vrot.slane %v411, 4
  %v417 = vshrl.u32 %v316, 16
  %v419 = vrot.slane %v417, 7
  %v420 = vshll.u32 %v316, 16
  %v422 = vor.u32 %v419, %v420
  %v423 = vrot.slane %v419, 4
  %v425 = vshrl.u32 %v317, 16
  %v427 = vrot.slane %v425, 7
  %v428 = vshll.u32 %v317, 16
  %v430 = vor.u32 %v427, %v428
  %v431 = vrot.slane %v427, 4
  %v433 = vshrl.u32 %v318, 16
  %v435 = vrot.slane %v433, 7
  %v436 = vshll.u32 %v318, 16
  %v438 = vor.u32 %v435, %v436
  %v439 = vrot.slane %v435, 4
  %v441 = vshrl.u32 %v319, 16
  %v443 = vrot.slane %v441, 7
  %v444 = vshll.u32 %v319, 16
  %v446 = vor.u32 %v443, %v444
  %v447 = vrot.slane %v443, 4
  %s480 = scalar_lea.vmem [#allocation2], 8
  %vm481 = vcmask 60416
  %vm482 = vsmask.f32 7938
  %vm483 = vmand %vm481, %vm482
  %v484 = vld [vmem:[%s480] sm:$0xf]
  %v485 = vsel %vm483, %v326, %v484
  %486 = vst [vmem:[%s480] sm:$0xf] %v485
  %vm487 = vcmask 57344
  %vm488 = vsmask.f32 256
  %vm489 = vmand %vm487, %vm488
  %v490 = vld [vmem:[%s480 + $0x4] sm:$0x1]
  %v491 = vsel %vm489, %v327, %v490
  %492 = vst [vmem:[%s480 + $0x4] sm:$0x1] %v491
  %v493 = vld [vmem:[%s480 + $0x8] sm:$0xf]
  %v494 = vsel %vm483, %v334, %v493
  %495 = vst [vmem:[%s480 + $0x8] sm:$0xf] %v494
  %v496 = vld [vmem:[%s480 + $0xc] sm:$0x1]
  %v497 = vsel %vm489, %v335, %v496
  %498 = vst [vmem:[%s480 + $0xc] sm:$0x1] %v497
  %v499 = vld [vmem:[%s480 + $0x10] sm:$0xf]
  %v500 = vsel %vm483, %v342, %v499
  %501 = vst [vmem:[%s480 + $0x10] sm:$0xf] %v500
  %v502 = vld [vmem:[%s480 + $0x14] sm:$0x1]
  %v503 = vsel %vm489, %v343, %v502
  %504 = vst [vmem:[%s480 + $0x14] sm:$0x1] %v503
  %v505 = vld [vmem:[%s480 + $0x18] sm:$0xf]
  %v506 = vsel %vm483, %v350, %v505
  %507 = vst [vmem:[%s480 + $0x18] sm:$0xf] %v506
  %v508 = vld [vmem:[%s480 + $0x1c] sm:$0x1]
  %v509 = vsel %vm489, %v351, %v508
  %510 = vst [vmem:[%s480 + $0x1c] sm:$0x1] %v509
  %v511 = vld [vmem:[%s480 + $0x20] sm:$0xf]
  %v512 = vsel %vm483, %v358, %v511
  %513 = vst [vmem:[%s480 + $0x20] sm:$0xf] %v512
  %v514 = vld [vmem:[%s480 + $0x24] sm:$0x1]
  %v515 = vsel %vm489, %v359, %v514
  %516 = vst [vmem:[%s480 + $0x24] sm:$0x1] %v515
  %v517 = vld [vmem:[%s480 + $0x28] sm:$0xf]
  %v518 = vsel %vm483, %v366, %v517
  %519 = vst [vmem:[%s480 + $0x28] sm:$0xf] %v518
  %v520 = vld [vmem:[%s480 + $0x2c] sm:$0x1]
  %v521 = vsel %vm489, %v367, %v520
  %522 = vst [vmem:[%s480 + $0x2c] sm:$0x1] %v521
  %v523 = vld [vmem:[%s480 + $0x30] sm:$0xf]
  %v524 = vsel %vm483, %v374, %v523
  %525 = vst [vmem:[%s480 + $0x30] sm:$0xf] %v524
  %v526 = vld [vmem:[%s480 + $0x34] sm:$0x1]
  %v527 = vsel %vm489, %v375, %v526
  %528 = vst [vmem:[%s480 + $0x34] sm:$0x1] %v527
  %v529 = vld [vmem:[%s480 + $0x38] sm:$0xf]
  %v530 = vsel %vm483, %v382, %v529
  %531 = vst [vmem:[%s480 + $0x38] sm:$0xf] %v530
  %v532 = vld [vmem:[%s480 + $0x3c] sm:$0x1]
  %v533 = vsel %vm489, %v383, %v532
  %534 = vst [vmem:[%s480 + $0x3c] sm:$0x1] %v533
  %v535 = vld [vmem:[%s480 + $0x50] sm:$0xf]
  %v536 = vsel %vm483, %v390, %v535
  %537 = vst [vmem:[%s480 + $0x50] sm:$0xf] %v536
  %v538 = vld [vmem:[%s480 + $0x54] sm:$0x1]
  %v539 = vsel %vm489, %v391, %v538
  %540 = vst [vmem:[%s480 + $0x54] sm:$0x1] %v539
  %v541 = vld [vmem:[%s480 + $0x58] sm:$0xf]
  %v542 = vsel %vm483, %v398, %v541
  %543 = vst [vmem:[%s480 + $0x58] sm:$0xf] %v542
  %v544 = vld [vmem:[%s480 + $0x5c] sm:$0x1]
  %v545 = vsel %vm489, %v399, %v544
  %546 = vst [vmem:[%s480 + $0x5c] sm:$0x1] %v545
  %v547 = vld [vmem:[%s480 + $0x60] sm:$0xf]
  %v548 = vsel %vm483, %v406, %v547
  %549 = vst [vmem:[%s480 + $0x60] sm:$0xf] %v548
  %v550 = vld [vmem:[%s480 + $0x64] sm:$0x1]
  %v551 = vsel %vm489, %v407, %v550
  %552 = vst [vmem:[%s480 + $0x64] sm:$0x1] %v551
  %v553 = vld [vmem:[%s480 + $0x68] sm:$0xf]
  %v554 = vsel %vm483, %v414, %v553
  %555 = vst [vmem:[%s480 + $0x68] sm:$0xf] %v554
  %v556 = vld [vmem:[%s480 + $0x6c] sm:$0x1]
  %v557 = vsel %vm489, %v415, %v556
  %558 = vst [vmem:[%s480 + $0x6c] sm:$0x1] %v557
  %v559 = vld [vmem:[%s480 + $0x70] sm:$0xf]
  %v560 = vsel %vm483, %v422, %v559
  %561 = vst [vmem:[%s480 + $0x70] sm:$0xf] %v560
  %v562 = vld [vmem:[%s480 + $0x74] sm:$0x1]
  %v563 = vsel %vm489, %v423, %v562
  %564 = vst [vmem:[%s480 + $0x74] sm:$0x1] %v563
  %v565 = vld [vmem:[%s480 + $0x78] sm:$0xf]
  %v566 = vsel %vm483, %v430, %v565
  %567 = vst [vmem:[%s480 + $0x78] sm:$0xf] %v566
  %v568 = vld [vmem:[%s480 + $0x7c] sm:$0x1]
  %v569 = vsel %vm489, %v431, %v568
  %570 = vst [vmem:[%s480 + $0x7c] sm:$0x1] %v569
  %v571 = vld [vmem:[%s480 + $0x80] sm:$0xf]
  %v572 = vsel %vm483, %v438, %v571
  %573 = vst [vmem:[%s480 + $0x80] sm:$0xf] %v572
  %v574 = vld [vmem:[%s480 + $0x84] sm:$0x1]
  %v575 = vsel %vm489, %v439, %v574
  %576 = vst [vmem:[%s480 + $0x84] sm:$0x1] %v575
  %v577 = vld [vmem:[%s480 + $0x88] sm:$0xf]
  %v578 = vsel %vm483, %v446, %v577
  %579 = vst [vmem:[%s480 + $0x88] sm:$0xf] %v578
  %v580 = vld [vmem:[%s480 + $0x8c] sm:$0x1]
  %v581 = vsel %vm489, %v447, %v580
  %582 = vst [vmem:[%s480 + $0x8c] sm:$0x1] %v581
  %v583 = vld [vmem:[#allocation2] sm:$0xf]
  %v584 = vld [vmem:[#allocation2 + $0x8] sm:$0xf]
  %v585 = vld [vmem:[#allocation2 + $0x10] sm:$0xf]
  %v586 = vld [vmem:[#allocation2 + $0x18] sm:$0xf]
  %v587 = vld [vmem:[#allocation2 + $0x20] sm:$0xf]
  %v588 = vld [vmem:[#allocation2 + $0x28] sm:$0xf]
  %v589 = vld [vmem:[#allocation2 + $0x30] sm:$0xf]
  %v590 = vld [vmem:[#allocation2 + $0x38] sm:$0xf]
  %v591 = vld [vmem:[#allocation2 + $0x50] sm:$0xf]
  %v592 = vld [vmem:[#allocation2 + $0x58] sm:$0xf]
  %v593 = vld [vmem:[#allocation2 + $0x60] sm:$0xf]
  %v594 = vld [vmem:[#allocation2 + $0x68] sm:$0xf]
  %v595 = vld [vmem:[#allocation2 + $0x70] sm:$0xf]
  %v596 = vld [vmem:[#allocation2 + $0x78] sm:$0xf]
  %v597 = vld [vmem:[#allocation2 + $0x80] sm:$0xf]
  %v598 = vld [vmem:[#allocation2 + $0x88] sm:$0xf]
  %vm599 = vcmask 60416
  %600 = vst.msk [vmem:[#allocation3] sm:$0xf] %vm599, %v583
  %601 = vst.msk [vmem:[#allocation3 + $0x4] sm:$0xf] %vm599, %v584
  %602 = vst.msk [vmem:[#allocation3 + $0x8] sm:$0xf] %vm599, %v585
  %603 = vst.msk [vmem:[#allocation3 + $0xc] sm:$0xf] %vm599, %v586
  %604 = vst.msk [vmem:[#allocation3 + $0x10] sm:$0xf] %vm599, %v587
  %605 = vst.msk [vmem:[#allocation3 + $0x14] sm:$0xf] %vm599, %v588
  %606 = vst.msk [vmem:[#allocation3 + $0x18] sm:$0xf] %vm599, %v589
  %607 = vst.msk [vmem:[#allocation3 + $0x1c] sm:$0xf] %vm599, %v590
  %608 = vst.msk [vmem:[#allocation3 + $0x20] sm:$0xf] %vm599, %v591
  %609 = vst.msk [vmem:[#allocation3 + $0x24] sm:$0xf] %vm599, %v592
  %610 = vst.msk [vmem:[#allocation3 + $0x28] sm:$0xf] %vm599, %v593
  %611 = vst.msk [vmem:[#allocation3 + $0x2c] sm:$0xf] %vm599, %v594
  %612 = vst.msk [vmem:[#allocation3 + $0x30] sm:$0xf] %vm599, %v595
  %613 = vst.msk [vmem:[#allocation3 + $0x34] sm:$0xf] %vm599, %v596
  %614 = vst.msk [vmem:[#allocation3 + $0x38] sm:$0xf] %vm599, %v597
  %615 = vst.msk [vmem:[#allocation3 + $0x3c] sm:$0xf] %vm599, %v598
  %v616 = vld [vmem:[#allocation2] sm:$0xf]
  %v617 = vld [vmem:[#allocation2 + $0x4] sm:$0x1]
  %v618 = vld [vmem:[#allocation2 + $0x8] sm:$0xf]
  %v619 = vld [vmem:[#allocation2 + $0xc] sm:$0x1]
  %v620 = vld [vmem:[#allocation2 + $0x10] sm:$0xf]
  %v621 = vld [vmem:[#allocation2 + $0x14] sm:$0x1]
  %v622 = vld [vmem:[#allocation2 + $0x18] sm:$0xf]
  %v623 = vld [vmem:[#allocation2 + $0x1c] sm:$0x1]
  %v624 = vld [vmem:[#allocation2 + $0x20] sm:$0xf]
  %v625 = vld [vmem:[#allocation2 + $0x24] sm:$0x1]
  %v626 = vld [vmem:[#allocation2 + $0x28] sm:$0xf]
  %v627 = vld [vmem:[#allocation2 + $0x2c] sm:$0x1]
  %v628 = vld [vmem:[#allocation2 + $0x30] sm:$0xf]
  %v629 = vld [vmem:[#allocation2 + $0x34] sm:$0x1]
  %v630 = vld [vmem:[#allocation2 + $0x38] sm:$0xf]
  %v631 = vld [vmem:[#allocation2 + $0x3c] sm:$0x1]
  %v632 = vld [vmem:[#allocation2 + $0x50] sm:$0xf]
  %v633 = vld [vmem:[#allocation2 + $0x54] sm:$0x1]
  %v634 = vld [vmem:[#allocation2 + $0x58] sm:$0xf]
  %v635 = vld [vmem:[#allocation2 + $0x5c] sm:$0x1]
  %v636 = vld [vmem:[#allocation2 + $0x60] sm:$0xf]
  %v637 = vld [vmem:[#allocation2 + $0x64] sm:$0x1]
  %v638 = vld [vmem:[#allocation2 + $0x68] sm:$0xf]
  %v639 = vld [vmem:[#allocation2 + $0x6c] sm:$0x1]
  %v640 = vld [vmem:[#allocation2 + $0x70] sm:$0xf]
  %v641 = vld [vmem:[#allocation2 + $0x74] sm:$0x1]
  %v642 = vld [vmem:[#allocation2 + $0x78] sm:$0xf]
  %v643 = vld [vmem:[#allocation2 + $0x7c] sm:$0x1]
  %v644 = vld [vmem:[#allocation2 + $0x80] sm:$0xf]
  %v645 = vld [vmem:[#allocation2 + $0x84] sm:$0x1]
  %v646 = vld [vmem:[#allocation2 + $0x88] sm:$0xf]
  %v647 = vld [vmem:[#allocation2 + $0x8c] sm:$0x1]
  %vm648 = vsmask.f32 3328
  %vm649 = vsmask.f32 7440
  %vm650 = vmor %vm648, %vm649
  %v652 = vshrl.u32 %v616, 16
  %v654 = vrot.slane %v652, 4
  %v655 = vshll.u32 %v616, 16
  %v657 = vrot.slane %v655, 5
  %v658 = vor.u32 %v654, %v657
  %v659 = vrot.slane %v658, 4
  %v661 = vshll.u32 %v617, 16
  %v663 = vrot.slane %v661, 5
  %v664 = vsel %vm650, %v659, %v663
  %v666 = vshrl.u32 %v618, 16
  %v668 = vrot.slane %v666, 4
  %v669 = vshll.u32 %v618, 16
  %v671 = vrot.slane %v669, 5
  %v672 = vor.u32 %v668, %v671
  %v673 = vrot.slane %v672, 4
  %v675 = vshll.u32 %v619, 16
  %v677 = vrot.slane %v675, 5
  %v678 = vsel %vm650, %v673, %v677
  %v680 = vshrl.u32 %v620, 16
  %v682 = vrot.slane %v680, 4
  %v683 = vshll.u32 %v620, 16
  %v685 = vrot.slane %v683, 5
  %v686 = vor.u32 %v682, %v685
  %v687 = vrot.slane %v686, 4
  %v689 = vshll.u32 %v621, 16
  %v691 = vrot.slane %v689, 5
  %v692 = vsel %vm650, %v687, %v691
  %v694 = vshrl.u32 %v622, 16
  %v696 = vrot.slane %v694, 4
  %v697 = vshll.u32 %v622, 16
  %v699 = vrot.slane %v697, 5
  %v700 = vor.u32 %v696, %v699
  %v701 = vrot.slane %v700, 4
  %v703 = vshll.u32 %v623, 16
  %v705 = vrot.slane %v703, 5
  %v706 = vsel %vm650, %v701, %v705
  %v708 = vshrl.u32 %v624, 16
  %v710 = vrot.slane %v708, 4
  %v711 = vshll.u32 %v624, 16
  %v713 = vrot.slane %v711, 5
  %v714 = vor.u32 %v710, %v713
  %v715 = vrot.slane %v714, 4
  %v717 = vshll.u32 %v625, 16
  %v719 = vrot.slane %v717, 5
  %v720 = vsel %vm650, %v715, %v719
  %v722 = vshrl.u32 %v626, 16
  %v724 = vrot.slane %v722, 4
  %v725 = vshll.u32 %v626, 16
  %v727 = vrot.slane %v725, 5
  %v728 = vor.u32 %v724, %v727
  %v729 = vrot.slane %v728, 4
  %v731 = vshll.u32 %v627, 16
  %v733 = vrot.slane %v731, 5
  %v734 = vsel %vm650, %v729, %v733
  %v736 = vshrl.u32 %v628, 16
  %v738 = vrot.slane %v736, 4
  %v739 = vshll.u32 %v628, 16
  %v741 = vrot.slane %v739, 5
  %v742 = vor.u32 %v738, %v741
  %v743 = vrot.slane %v742, 4
  %v745 = vshll.u32 %v629, 16
  %v747 = vrot.slane %v745, 5
  %v748 = vsel %vm650, %v743, %v747
  %v750 = vshrl.u32 %v630, 16
  %v752 = vrot.slane %v750, 4
  %v753 = vshll.u32 %v630, 16
  %v755 = vrot.slane %v753, 5
  %v756 = vor.u32 %v752, %v755
  %v757 = vrot.slane %v756, 4
  %v759 = vshll.u32 %v631, 16
  %v761 = vrot.slane %v759, 5
  %v762 = vsel %vm650, %v757, %v761
  %v764 = vshrl.u32 %v632, 16
  %v766 = vrot.slane %v764, 4
  %v767 = vshll.u32 %v632, 16
  %v769 = vrot.slane %v767, 5
  %v770 = vor.u32 %v766, %v769
  %v771 = vrot.slane %v770, 4
  %v773 = vshll.u32 %v633, 16
  %v775 = vrot.slane %v773, 5
  %v776 = vsel %vm650, %v771, %v775
  %v778 = vshrl.u32 %v634, 16
  %v780 = vrot.slane %v778, 4
  %v781 = vshll.u32 %v634, 16
  %v783 = vrot.slane %v781, 5
  %v784 = vor.u32 %v780, %v783
  %v785 = vrot.slane %v784, 4
  %v787 = vshll.u32 %v635, 16
  %v789 = vrot.slane %v787, 5
  %v790 = vsel %vm650, %v785, %v789
  %v792 = vshrl.u32 %v636, 16
  %v794 = vrot.slane %v792, 4
  %v795 = vshll.u32 %v636, 16
  %v797 = vrot.slane %v795, 5
  %v798 = vor.u32 %v794, %v797
  %v799 = vrot.slane %v798, 4
  %v801 = vshll.u32 %v637, 16
  %v803 = vrot.slane %v801, 5
  %v804 = vsel %vm650, %v799, %v803
  %v806 = vshrl.u32 %v638, 16
  %v808 = vrot.slane %v806, 4
  %v809 = vshll.u32 %v638, 16
  %v811 = vrot.slane %v809, 5
  %v812 = vor.u32 %v808, %v811
  %v813 = vrot.slane %v812, 4
  %v815 = vshll.u32 %v639, 16
  %v817 = vrot.slane %v815, 5
  %v818 = vsel %vm650, %v813, %v817
  %v820 = vshrl.u32 %v640, 16
  %v822 = vrot.slane %v820, 4
  %v823 = vshll.u32 %v640, 16
  %v825 = vrot.slane %v823, 5
  %v826 = vor.u32 %v822, %v825
  %v827 = vrot.slane %v826, 4
  %v829 = vshll.u32 %v641, 16
  %v831 = vrot.slane %v829, 5
  %v832 = vsel %vm650, %v827, %v831
  %v834 = vshrl.u32 %v642, 16
  %v836 = vrot.slane %v834, 4
  %v837 = vshll.u32 %v642, 16
  %v839 = vrot.slane %v837, 5
  %v840 = vor.u32 %v836, %v839
  %v841 = vrot.slane %v840, 4
  %v843 = vshll.u32 %v643, 16
  %v845 = vrot.slane %v843, 5
  %v846 = vsel %vm650, %v841, %v845
  %v848 = vshrl.u32 %v644, 16
  %v850 = vrot.slane %v848, 4
  %v851 = vshll.u32 %v644, 16
  %v853 = vrot.slane %v851, 5
  %v854 = vor.u32 %v850, %v853
  %v855 = vrot.slane %v854, 4
  %v857 = vshll.u32 %v645, 16
  %v859 = vrot.slane %v857, 5
  %v860 = vsel %vm650, %v855, %v859
  %v862 = vshrl.u32 %v646, 16
  %v864 = vrot.slane %v862, 4
  %v865 = vshll.u32 %v646, 16
  %v867 = vrot.slane %v865, 5
  %v868 = vor.u32 %v864, %v867
  %v869 = vrot.slane %v868, 4
  %v871 = vshll.u32 %v647, 16
  %v873 = vrot.slane %v871, 5
  %v874 = vsel %vm650, %v869, %v873
  %875 = vrot.lane.b32.xlu0 %v664, 8
  %v876 = vpop.permute.xlu0 %875
  %877 = vrot.lane.b32.xlu0 %v678, 8
  %v878 = vpop.permute.xlu0 %877
  %879 = vrot.lane.b32.xlu0 %v692, 8
  %v880 = vpop.permute.xlu0 %879
  %881 = vrot.lane.b32.xlu0 %v706, 8
  %v882 = vpop.permute.xlu0 %881
  %883 = vrot.lane.b32.xlu0 %v720, 8
  %v884 = vpop.permute.xlu0 %883
  %885 = vrot.lane.b32.xlu0 %v734, 8
  %v886 = vpop.permute.xlu0 %885
  %887 = vrot.lane.b32.xlu0 %v748, 8
  %v888 = vpop.permute.xlu0 %887
  %889 = vrot.lane.b32.xlu0 %v762, 8
  %v890 = vpop.permute.xlu0 %889
  %891 = vrot.lane.b32.xlu0 %v776, 8
  %v892 = vpop.permute.xlu0 %891
  %893 = vrot.lane.b32.xlu0 %v790, 8
  %v894 = vpop.permute.xlu0 %893
  %895 = vrot.lane.b32.xlu0 %v804, 8
  %v896 = vpop.permute.xlu0 %895
  %897 = vrot.lane.b32.xlu0 %v818, 8
  %v898 = vpop.permute.xlu0 %897
  %899 = vrot.lane.b32.xlu0 %v832, 8
  %v900 = vpop.permute.xlu0 %899
  %901 = vrot.lane.b32.xlu0 %v846, 8
  %v902 = vpop.permute.xlu0 %901
  %903 = vrot.lane.b32.xlu0 %v860, 8
  %v904 = vpop.permute.xlu0 %903
  %905 = vrot.lane.b32.xlu0 %v874, 8
  %v906 = vpop.permute.xlu0 %905
  %vm923 = vcmask 126016
  %924 = vst.msk [vmem:[#allocation3] sm:$0xf] %vm923, %v876
  %925 = vst.msk [vmem:[#allocation3 + $0x4] sm:$0xf] %vm923, %v878
  %926 = vst.msk [vmem:[#allocation3 + $0x8] sm:$0xf] %vm923, %v880
  %927 = vst.msk [vmem:[#allocation3 + $0xc] sm:$0xf] %vm923, %v882
  %928 = vst.msk [vmem:[#allocation3 + $0x10] sm:$0xf] %vm923, %v884
  %929 = vst.msk [vmem:[#allocation3 + $0x14] sm:$0xf] %vm923, %v886
  %930 = vst.msk [vmem:[#allocation3 + $0x18] sm:$0xf] %vm923, %v888
  %931 = vst.msk [vmem:[#allocation3 + $0x1c] sm:$0xf] %vm923, %v890
  %932 = vst.msk [vmem:[#allocation3 + $0x20] sm:$0xf] %vm923, %v892
  %933 = vst.msk [vmem:[#allocation3 + $0x24] sm:$0xf] %vm923, %v894
  %934 = vst.msk [vmem:[#allocation3 + $0x28] sm:$0xf] %vm923, %v896
  %935 = vst.msk [vmem:[#allocation3 + $0x2c] sm:$0xf] %vm923, %v898
  %936 = vst.msk [vmem:[#allocation3 + $0x30] sm:$0xf] %vm923, %v900
  %937 = vst.msk [vmem:[#allocation3 + $0x34] sm:$0xf] %vm923, %v902
  %938 = vst.msk [vmem:[#allocation3 + $0x38] sm:$0xf] %vm923, %v904
  %939 = vst.msk [vmem:[#allocation3 + $0x3c] sm:$0xf] %vm923, %v906
  %v940 = vld [vmem:[#allocation2] sm:$0xe]
  %v941 = vld [vmem:[#allocation2 + $0x4] sm:$0x1]
  %v942 = vld [vmem:[#allocation2 + $0x8] sm:$0xe]
  %v943 = vld [vmem:[#allocation2 + $0xc] sm:$0x1]
  %v944 = vld [vmem:[#allocation2 + $0x10] sm:$0xe]
  %v945 = vld [vmem:[#allocation2 + $0x14] sm:$0x1]
  %v946 = vld [vmem:[#allocation2 + $0x18] sm:$0xe]
  %v947 = vld [vmem:[#allocation2 + $0x1c] sm:$0x1]
  %v948 = vld [vmem:[#allocation2 + $0x20] sm:$0xe]
  %v949 = vld [vmem:[#allocation2 + $0x24] sm:$0x1]
  %v950 = vld [vmem:[#allocation2 + $0x28] sm:$0xe]
  %v951 = vld [vmem:[#allocation2 + $0x2c] sm:$0x1]
  %v952 = vld [vmem:[#allocation2 + $0x30] sm:$0xe]
  %v953 = vld [vmem:[#allocation2 + $0x34] sm:$0x1]
  %v954 = vld [vmem:[#allocation2 + $0x38] sm:$0xe]
  %v955 = vld [vmem:[#allocation2 + $0x3c] sm:$0x1]
  %v956 = vld [vmem:[#allocation2 + $0x50] sm:$0xe]
  %v957 = vld [vmem:[#allocation2 + $0x54] sm:$0x1]
  %v958 = vld [vmem:[#allocation2 + $0x58] sm:$0xe]
  %v959 = vld [vmem:[#allocation2 + $0x5c] sm:$0x1]
  %v960 = vld [vmem:[#allocation2 + $0x60] sm:$0xe]
  %v961 = vld [vmem:[#allocation2 + $0x64] sm:$0x1]
  %v962 = vld [vmem:[#allocation2 + $0x68] sm:$0xe]
  %v963 = vld [vmem:[#allocation2 + $0x6c] sm:$0x1]
  %v964 = vld [vmem:[#allocation2 + $0x70] sm:$0xe]
  %v965 = vld [vmem:[#allocation2 + $0x74] sm:$0x1]
  %v966 = vld [vmem:[#allocation2 + $0x78] sm:$0xe]
  %v967 = vld [vmem:[#allocation2 + $0x7c] sm:$0x1]
  %v968 = vld [vmem:[#allocation2 + $0x80] sm:$0xe]
  %v969 = vld [vmem:[#allocation2 + $0x84] sm:$0x1]
  %v970 = vld [vmem:[#allocation2 + $0x88] sm:$0xe]
  %v971 = vld [vmem:[#allocation2 + $0x8c] sm:$0x1]
  %vm1004 = vcmask 1042432
  %vm1005 = vcmask 1046532
  %vm1006 = vmor %vm1004, %vm1005
  %v1007 = vrot.slane %v940, 5
  %v1008 = vrot.slane %v1007, 4
  %v1009 = vrot.slane %v941, 5
  %v1010 = vsel %vm1006, %v1008, %v1009
  %v1011 = vrot.slane %v942, 5
  %v1012 = vrot.slane %v1011, 4
  %v1013 = vrot.slane %v943, 5
  %v1014 = vsel %vm1006, %v1012, %v1013
  %v1015 = vrot.slane %v944, 5
  %v1016 = vrot.slane %v1015, 4
  %v1017 = vrot.slane %v945, 5
  %v1018 = vsel %vm1006, %v1016, %v1017
  %v1019 = vrot.slane %v946, 5
  %v1020 = vrot.slane %v1019, 4
  %v1021 = vrot.slane %v947, 5
  %v1022 = vsel %vm1006, %v1020, %v1021
  %v1023 = vrot.slane %v948, 5
  %v1024 = vrot.slane %v1023, 4
  %v1025 = vrot.slane %v949, 5
  %v1026 = vsel %vm1006, %v1024, %v1025
  %v1027 = vrot.slane %v950, 5
  %v1028 = vrot.slane %v1027, 4
  %v1029 = vrot.slane %v951, 5
  %v1030 = vsel %vm1006, %v1028, %v1029
  %v1031 = vrot.slane %v952, 5
  %v1032 = vrot.slane %v1031, 4
  %v1033 = vrot.slane %v953, 5
  %v1034 = vsel %vm1006, %v1032, %v1033
  %v1035 = vrot.slane %v954, 5
  %v1036 = vrot.slane %v1035, 4
  %v1037 = vrot.slane %v955, 5
  %v1038 = vsel %vm1006, %v1036, %v1037
  %v1039 = vrot.slane %v956, 5
  %v1040 = vrot.slane %v1039, 4
  %v1041 = vrot.slane %v957, 5
  %v1042 = vsel %vm1006, %v1040, %v1041
  %v1043 = vrot.slane %v958, 5
  %v1044 = vrot.slane %v1043, 4
  %v1045 = vrot.slane %v959, 5
  %v1046 = vsel %vm1006, %v1044, %v1045
  %v1047 = vrot.slane %v960, 5
  %v1048 = vrot.slane %v1047, 4
  %v1049 = vrot.slane %v961, 5
  %v1050 = vsel %vm1006, %v1048, %v1049
  %v1051 = vrot.slane %v962, 5
  %v1052 = vrot.slane %v1051, 4
  %v1053 = vrot.slane %v963, 5
  %v1054 = vsel %vm1006, %v1052, %v1053
  %v1055 = vrot.slane %v964, 5
  %v1056 = vrot.slane %v1055, 4
  %v1057 = vrot.slane %v965, 5
  %v1058 = vsel %vm1006, %v1056, %v1057
  %v1059 = vrot.slane %v966, 5
  %v1060 = vrot.slane %v1059, 4
  %v1061 = vrot.slane %v967, 5
  %v1062 = vsel %vm1006, %v1060, %v1061
  %v1063 = vrot.slane %v968, 5
  %v1064 = vrot.slane %v1063, 4
  %v1065 = vrot.slane %v969, 5
  %v1066 = vsel %vm1006, %v1064, %v1065
  %v1067 = vrot.slane %v970, 5
  %v1068 = vrot.slane %v1067, 4
  %v1069 = vrot.slane %v971, 5
  %v1070 = vsel %vm1006, %v1068, %v1069
  %1071 = vrot.lane.b32.xlu0 %v1010, 16
  %v1072 = vpop.permute.xlu0 %1071
  %1073 = vrot.lane.b32.xlu0 %v1014, 16
  %v1074 = vpop.permute.xlu0 %1073
  %1075 = vrot.lane.b32.xlu0 %v1018, 16
  %v1076 = vpop.permute.xlu0 %1075
  %1077 = vrot.lane.b32.xlu0 %v1022, 16
  %v1078 = vpop.permute.xlu0 %1077
  %1079 = vrot.lane.b32.xlu0 %v1026, 16
  %v1080 = vpop.permute.xlu0 %1079
  %1081 = vrot.lane.b32.xlu0 %v1030, 16
  %v1082 = vpop.permute.xlu0 %1081
  %1083 = vrot.lane.b32.xlu0 %v1034, 16
  %v1084 = vpop.permute.xlu0 %1083
  %1085 = vrot.lane.b32.xlu0 %v1038, 16
  %v1086 = vpop.permute.xlu0 %1085
  %1087 = vrot.lane.b32.xlu0 %v1042, 16
  %v1088 = vpop.permute.xlu0 %1087
  %1089 = vrot.lane.b32.xlu0 %v1046, 16
  %v1090 = vpop.permute.xlu0 %1089
  %1091 = vrot.lane.b32.xlu0 %v1050, 16
  %v1092 = vpop.permute.xlu0 %1091
  %1093 = vrot.lane.b32.xlu0 %v1054, 16
  %v1094 = vpop.permute.xlu0 %1093
  %1095 = vrot.lane.b32.xlu0 %v1058, 16
  %v1096 = vpop.permute.xlu0 %1095
  %1097 = vrot.lane.b32.xlu0 %v1062, 16
  %v1098 = vpop.permute.xlu0 %1097
  %1099 = vrot.lane.b32.xlu0 %v1066, 16
  %v1100 = vpop.permute.xlu0 %1099
  %1101 = vrot.lane.b32.xlu0 %v1070, 16
  %v1102 = vpop.permute.xlu0 %1101
  %vm1119 = vcmask 191616
  %1120 = vst.msk [vmem:[#allocation3] sm:$0xf] %vm1119, %v1072
  %1121 = vst.msk [vmem:[#allocation3 + $0x4] sm:$0xf] %vm1119, %v1074
  %1122 = vst.msk [vmem:[#allocation3 + $0x8] sm:$0xf] %vm1119, %v1076
  %1123 = vst.msk [vmem:[#allocation3 + $0xc] sm:$0xf] %vm1119, %v1078
  %1124 = vst.msk [vmem:[#allocation3 + $0x10] sm:$0xf] %vm1119, %v1080
  %1125 = vst.msk [vmem:[#allocation3 + $0x14] sm:$0xf] %vm1119, %v1082
  %1126 = vst.msk [vmem:[#allocation3 + $0x18] sm:$0xf] %vm1119, %v1084
  %1127 = vst.msk [vmem:[#allocation3 + $0x1c] sm:$0xf] %vm1119, %v1086
  %1128 = vst.msk [vmem:[#allocation3 + $0x20] sm:$0xf] %vm1119, %v1088
  %1129 = vst.msk [vmem:[#allocation3 + $0x24] sm:$0xf] %vm1119, %v1090
  %1130 = vst.msk [vmem:[#allocation3 + $0x28] sm:$0xf] %vm1119, %v1092
  %1131 = vst.msk [vmem:[#allocation3 + $0x2c] sm:$0xf] %vm1119, %v1094
  %1132 = vst.msk [vmem:[#allocation3 + $0x30] sm:$0xf] %vm1119, %v1096
  %1133 = vst.msk [vmem:[#allocation3 + $0x34] sm:$0xf] %vm1119, %v1098
  %1134 = vst.msk [vmem:[#allocation3 + $0x38] sm:$0xf] %vm1119, %v1100
  %1135 = vst.msk [vmem:[#allocation3 + $0x3c] sm:$0xf] %vm1119, %v1102
  %v1136 = vld [vmem:[%s480] sm:$0xf]
  %v1137 = vld [vmem:[%s480 + $0x8] sm:$0xf]
  %v1138 = vld [vmem:[%s480 + $0x10] sm:$0xf]
  %v1139 = vld [vmem:[%s480 + $0x18] sm:$0xf]
  %v1140 = vld [vmem:[%s480 + $0x20] sm:$0xf]
  %v1141 = vld [vmem:[%s480 + $0x28] sm:$0xf]
  %v1142 = vld [vmem:[%s480 + $0x30] sm:$0xf]
  %v1143 = vld [vmem:[%s480 + $0x38] sm:$0xf]
  %v1144 = vld [vmem:[%s480 + $0x50] sm:$0xf]
  %v1145 = vld [vmem:[%s480 + $0x58] sm:$0xf]
  %v1146 = vld [vmem:[%s480 + $0x60] sm:$0xf]
  %v1147 = vld [vmem:[%s480 + $0x68] sm:$0xf]
  %v1148 = vld [vmem:[%s480 + $0x70] sm:$0xf]
  %v1149 = vld [vmem:[%s480 + $0x78] sm:$0xf]
  %v1150 = vld [vmem:[%s480 + $0x80] sm:$0xf]
  %v1151 = vld [vmem:[%s480 + $0x88] sm:$0xf]
  %1168 = vrot.lane.b32.xlu0 %v1136, 24
  %v1169 = vpop.permute.xlu0 %1168
  %1170 = vrot.lane.b32.xlu0 %v1137, 24
  %v1171 = vpop.permute.xlu0 %1170
  %1172 = vrot.lane.b32.xlu0 %v1138, 24
  %v1173 = vpop.permute.xlu0 %1172
  %1174 = vrot.lane.b32.xlu0 %v1139, 24
  %v1175 = vpop.permute.xlu0 %1174
  %1176 = vrot.lane.b32.xlu0 %v1140, 24
  %v1177 = vpop.permute.xlu0 %1176
  %1178 = vrot.lane.b32.xlu0 %v1141, 24
  %v1179 = vpop.permute.xlu0 %1178
  %1180 = vrot.lane.b32.xlu0 %v1142, 24
  %v1181 = vpop.permute.xlu0 %1180
  %1182 = vrot.lane.b32.xlu0 %v1143, 24
  %v1183 = vpop.permute.xlu0 %1182
  %1184 = vrot.lane.b32.xlu0 %v1144, 24
  %v1185 = vpop.permute.xlu0 %1184
  %1186 = vrot.lane.b32.xlu0 %v1145, 24
  %v1187 = vpop.permute.xlu0 %1186
  %1188 = vrot.lane.b32.xlu0 %v1146, 24
  %v1189 = vpop.permute.xlu0 %1188
  %1190 = vrot.lane.b32.xlu0 %v1147, 24
  %v1191 = vpop.permute.xlu0 %1190
  %1192 = vrot.lane.b32.xlu0 %v1148, 24
  %v1193 = vpop.permute.xlu0 %1192
  %1194 = vrot.lane.b32.xlu0 %v1149, 24
  %v1195 = vpop.permute.xlu0 %1194
  %1196 = vrot.lane.b32.xlu0 %v1150, 24
  %v1197 = vpop.permute.xlu0 %1196
  %1198 = vrot.lane.b32.xlu0 %v1151, 24
  %v1199 = vpop.permute.xlu0 %1198
  %vm1216 = vcmask 257216
  %1217 = vst.msk [vmem:[#allocation3] sm:$0xf] %vm1216, %v1169
  %1218 = vst.msk [vmem:[#allocation3 + $0x4] sm:$0xf] %vm1216, %v1171
  %1219 = vst.msk [vmem:[#allocation3 + $0x8] sm:$0xf] %vm1216, %v1173
  %1220 = vst.msk [vmem:[#allocation3 + $0xc] sm:$0xf] %vm1216, %v1175
  %1221 = vst.msk [vmem:[#allocation3 + $0x10] sm:$0xf] %vm1216, %v1177
  %1222 = vst.msk [vmem:[#allocation3 + $0x14] sm:$0xf] %vm1216, %v1179
  %1223 = vst.msk [vmem:[#allocation3 + $0x18] sm:$0xf] %vm1216, %v1181
  %1224 = vst.msk [vmem:[#allocation3 + $0x1c] sm:$0xf] %vm1216, %v1183
  %1225 = vst.msk [vmem:[#allocation3 + $0x20] sm:$0xf] %vm1216, %v1185
  %1226 = vst.msk [vmem:[#allocation3 + $0x24] sm:$0xf] %vm1216, %v1187
  %1227 = vst.msk [vmem:[#allocation3 + $0x28] sm:$0xf] %vm1216, %v1189
  %1228 = vst.msk [vmem:[#allocation3 + $0x2c] sm:$0xf] %vm1216, %v1191
  %1229 = vst.msk [vmem:[#allocation3 + $0x30] sm:$0xf] %vm1216, %v1193
  %1230 = vst.msk [vmem:[#allocation3 + $0x34] sm:$0xf] %vm1216, %v1195
  %1231 = vst.msk [vmem:[#allocation3 + $0x38] sm:$0xf] %vm1216, %v1197
  %1232 = vst.msk [vmem:[#allocation3 + $0x3c] sm:$0xf] %vm1216, %v1199
  %v1233 = vld [vmem:[%s480] sm:$0xf]
  %v1234 = vld [vmem:[%s480 + $0x4] sm:$0x1]
  %v1235 = vld [vmem:[%s480 + $0x8] sm:$0xf]
  %v1236 = vld [vmem:[%s480 + $0xc] sm:$0x1]
  %v1237 = vld [vmem:[%s480 + $0x10] sm:$0xf]
  %v1238 = vld [vmem:[%s480 + $0x14] sm:$0x1]
  %v1239 = vld [vmem:[%s480 + $0x18] sm:$0xf]
  %v1240 = vld [vmem:[%s480 + $0x1c] sm:$0x1]
  %v1241 = vld [vmem:[%s480 + $0x20] sm:$0xf]
  %v1242 = vld [vmem:[%s480 + $0x24] sm:$0x1]
  %v1243 = vld [vmem:[%s480 + $0x28] sm:$0xf]
  %v1244 = vld [vmem:[%s480 + $0x2c] sm:$0x1]
  %v1245 = vld [vmem:[%s480 + $0x30] sm:$0xf]
  %v1246 = vld [vmem:[%s480 + $0x34] sm:$0x1]
  %v1247 = vld [vmem:[%s480 + $0x38] sm:$0xf]
  %v1248 = vld [vmem:[%s480 + $0x3c] sm:$0x1]
  %v1249 = vld [vmem:[%s480 + $0x50] sm:$0xf]
  %v1250 = vld [vmem:[%s480 + $0x54] sm:$0x1]
  %v1251 = vld [vmem:[%s480 + $0x58] sm:$0xf]
  %v1252 = vld [vmem:[%s480 + $0x5c] sm:$0x1]
  %v1253 = vld [vmem:[%s480 + $0x60] sm:$0xf]
  %v1254 = vld [vmem:[%s480 + $0x64] sm:$0x1]
  %v1255 = vld [vmem:[%s480 + $0x68] sm:$0xf]
  %v1256 = vld [vmem:[%s480 + $0x6c] sm:$0x1]
  %v1257 = vld [vmem:[%s480 + $0x70] sm:$0xf]
  %v1258 = vld [vmem:[%s480 + $0x74] sm:$0x1]
  %v1259 = vld [vmem:[%s480 + $0x78] sm:$0xf]
  %v1260 = vld [vmem:[%s480 + $0x7c] sm:$0x1]
  %v1261 = vld [vmem:[%s480 + $0x80] sm:$0xf]
  %v1262 = vld [vmem:[%s480 + $0x84] sm:$0x1]
  %v1263 = vld [vmem:[%s480 + $0x88] sm:$0xf]
  %v1264 = vld [vmem:[%s480 + $0x8c] sm:$0x1]
  %v1266 = vshrl.u32 %v1233, 16
  %v1268 = vrot.slane %v1266, 4
  %v1269 = vshll.u32 %v1233, 16
  %v1271 = vrot.slane %v1269, 5
  %v1272 = vor.u32 %v1268, %v1271
  %v1273 = vrot.slane %v1272, 4
  %v1275 = vshll.u32 %v1234, 16
  %v1277 = vrot.slane %v1275, 5
  %v1278 = vsel %vm650, %v1273, %v1277
  %v1280 = vshrl.u32 %v1235, 16
  %v1282 = vrot.slane %v1280, 4
  %v1283 = vshll.u32 %v1235, 16
  %v1285 = vrot.slane %v1283, 5
  %v1286 = vor.u32 %v1282, %v1285
  %v1287 = vrot.slane %v1286, 4
  %v1289 = vshll.u32 %v1236, 16
  %v1291 = vrot.slane %v1289, 5
  %v1292 = vsel %vm650, %v1287, %v1291
  %v1294 = vshrl.u32 %v1237, 16
  %v1296 = vrot.slane %v1294, 4
  %v1297 = vshll.u32 %v1237, 16
  %v1299 = vrot.slane %v1297, 5
  %v1300 = vor.u32 %v1296, %v1299
  %v1301 = vrot.slane %v1300, 4
  %v1303 = vshll.u32 %v1238, 16
  %v1305 = vrot.slane %v1303, 5
  %v1306 = vsel %vm650, %v1301, %v1305
  %v1308 = vshrl.u32 %v1239, 16
  %v1310 = vrot.slane %v1308, 4
  %v1311 = vshll.u32 %v1239, 16
  %v1313 = vrot.slane %v1311, 5
  %v1314 = vor.u32 %v1310, %v1313
  %v1315 = vrot.slane %v1314, 4
  %v1317 = vshll.u32 %v1240, 16
  %v1319 = vrot.slane %v1317, 5
  %v1320 = vsel %vm650, %v1315, %v1319
  %v1322 = vshrl.u32 %v1241, 16
  %v1324 = vrot.slane %v1322, 4
  %v1325 = vshll.u32 %v1241, 16
  %v1327 = vrot.slane %v1325, 5
  %v1328 = vor.u32 %v1324, %v1327
  %v1329 = vrot.slane %v1328, 4
  %v1331 = vshll.u32 %v1242, 16
  %v1333 = vrot.slane %v1331, 5
  %v1334 = vsel %vm650, %v1329, %v1333
  %v1336 = vshrl.u32 %v1243, 16
  %v1338 = vrot.slane %v1336, 4
  %v1339 = vshll.u32 %v1243, 16
  %v1341 = vrot.slane %v1339, 5
  %v1342 = vor.u32 %v1338, %v1341
  %v1343 = vrot.slane %v1342, 4
  %v1345 = vshll.u32 %v1244, 16
  %v1347 = vrot.slane %v1345, 5
  %v1348 = vsel %vm650, %v1343, %v1347
  %v1350 = vshrl.u32 %v1245, 16
  %v1352 = vrot.slane %v1350, 4
  %v1353 = vshll.u32 %v1245, 16
  %v1355 = vrot.slane %v1353, 5
  %v1356 = vor.u32 %v1352, %v1355
  %v1357 = vrot.slane %v1356, 4
  %v1359 = vshll.u32 %v1246, 16
  %v1361 = vrot.slane %v1359, 5
  %v1362 = vsel %vm650, %v1357, %v1361
  %v1364 = vshrl.u32 %v1247, 16
  %v1366 = vrot.slane %v1364, 4
  %v1367 = vshll.u32 %v1247, 16
  %v1369 = vrot.slane %v1367, 5
  %v1370 = vor.u32 %v1366, %v1369
  %v1371 = vrot.slane %v1370, 4
  %v1373 = vshll.u32 %v1248, 16
  %v1375 = vrot.slane %v1373, 5
  %v1376 = vsel %vm650, %v1371, %v1375
  %v1378 = vshrl.u32 %v1249, 16
  %v1380 = vrot.slane %v1378, 4
  %v1381 = vshll.u32 %v1249, 16
  %v1383 = vrot.slane %v1381, 5
  %v1384 = vor.u32 %v1380, %v1383
  %v1385 = vrot.slane %v1384, 4
  %v1387 = vshll.u32 %v1250, 16
  %v1389 = vrot.slane %v1387, 5
  %v1390 = vsel %vm650, %v1385, %v1389
  %v1392 = vshrl.u32 %v1251, 16
  %v1394 = vrot.slane %v1392, 4
  %v1395 = vshll.u32 %v1251, 16
  %v1397 = vrot.slane %v1395, 5
  %v1398 = vor.u32 %v1394, %v1397
  %v1399 = vrot.slane %v1398, 4
  %v1401 = vshll.u32 %v1252, 16
  %v1403 = vrot.slane %v1401, 5
  %v1404 = vsel %vm650, %v1399, %v1403
  %v1406 = vshrl.u32 %v1253, 16
  %v1408 = vrot.slane %v1406, 4
  %v1409 = vshll.u32 %v1253, 16
  %v1411 = vrot.slane %v1409, 5
  %v1412 = vor.u32 %v1408, %v1411
  %v1413 = vrot.slane %v1412, 4
  %v1415 = vshll.u32 %v1254, 16
  %v1417 = vrot.slane %v1415, 5
  %v1418 = vsel %vm650, %v1413, %v1417
  %v1420 = vshrl.u32 %v1255, 16
  %v1422 = vrot.slane %v1420, 4
  %v1423 = vshll.u32 %v1255, 16
  %v1425 = vrot.slane %v1423, 5
  %v1426 = vor.u32 %v1422, %v1425
  %v1427 = vrot.slane %v1426, 4
  %v1429 = vshll.u32 %v1256, 16
  %v1431 = vrot.slane %v1429, 5
  %v1432 = vsel %vm650, %v1427, %v1431
  %v1434 = vshrl.u32 %v1257, 16
  %v1436 = vrot.slane %v1434, 4
  %v1437 = vshll.u32 %v1257, 16
  %v1439 = vrot.slane %v1437, 5
  %v1440 = vor.u32 %v1436, %v1439
  %v1441 = vrot.slane %v1440, 4
  %v1443 = vshll.u32 %v1258, 16
  %v1445 = vrot.slane %v1443, 5
  %v1446 = vsel %vm650, %v1441, %v1445
  %v1448 = vshrl.u32 %v1259, 16
  %v1450 = vrot.slane %v1448, 4
  %v1451 = vshll.u32 %v1259, 16
  %v1453 = vrot.slane %v1451, 5
  %v1454 = vor.u32 %v1450, %v1453
  %v1455 = vrot.slane %v1454, 4
  %v1457 = vshll.u32 %v1260, 16
  %v1459 = vrot.slane %v1457, 5
  %v1460 = vsel %vm650, %v1455, %v1459
  %v1462 = vshrl.u32 %v1261, 16
  %v1464 = vrot.slane %v1462, 4
  %v1465 = vshll.u32 %v1261, 16
  %v1467 = vrot.slane %v1465, 5
  %v1468 = vor.u32 %v1464, %v1467
  %v1469 = vrot.slane %v1468, 4
  %v1471 = vshll.u32 %v1262, 16
  %v1473 = vrot.slane %v1471, 5
  %v1474 = vsel %vm650, %v1469, %v1473
  %v1476 = vshrl.u32 %v1263, 16
  %v1478 = vrot.slane %v1476, 4
  %v1479 = vshll.u32 %v1263, 16
  %v1481 = vrot.slane %v1479, 5
  %v1482 = vor.u32 %v1478, %v1481
  %v1483 = vrot.slane %v1482, 4
  %v1485 = vshll.u32 %v1264, 16
  %v1487 = vrot.slane %v1485, 5
  %v1488 = vsel %vm650, %v1483, %v1487
  %1489 = vrot.lane.b32.xlu0 %v1278, 32
  %v1490 = vpop.permute.xlu0 %1489
  %1491 = vrot.lane.b32.xlu0 %v1292, 32
  %v1492 = vpop.permute.xlu0 %1491
  %1493 = vrot.lane.b32.xlu0 %v1306, 32
  %v1494 = vpop.permute.xlu0 %1493
  %1495 = vrot.lane.b32.xlu0 %v1320, 32
  %v1496 = vpop.permute.xlu0 %1495
  %1497 = vrot.lane.b32.xlu0 %v1334, 32
  %v1498 = vpop.permute.xlu0 %1497
  %1499 = vrot.lane.b32.xlu0 %v1348, 32
  %v1500 = vpop.permute.xlu0 %1499
  %1501 = vrot.lane.b32.xlu0 %v1362, 32
  %v1502 = vpop.permute.xlu0 %1501
  %1503 = vrot.lane.b32.xlu0 %v1376, 32
  %v1504 = vpop.permute.xlu0 %1503
  %1505 = vrot.lane.b32.xlu0 %v1390, 32
  %v1506 = vpop.permute.xlu0 %1505
  %1507 = vrot.lane.b32.xlu0 %v1404, 32
  %v1508 = vpop.permute.xlu0 %1507
  %1509 = vrot.lane.b32.xlu0 %v1418, 32
  %v1510 = vpop.permute.xlu0 %1509
  %1511 = vrot.lane.b32.xlu0 %v1432, 32
  %v1512 = vpop.permute.xlu0 %1511
  %1513 = vrot.lane.b32.xlu0 %v1446, 32
  %v1514 = vpop.permute.xlu0 %1513
  %1515 = vrot.lane.b32.xlu0 %v1460, 32
  %v1516 = vpop.permute.xlu0 %1515
  %1517 = vrot.lane.b32.xlu0 %v1474, 32
  %v1518 = vpop.permute.xlu0 %1517
  %1519 = vrot.lane.b32.xlu0 %v1488, 32
  %v1520 = vpop.permute.xlu0 %1519
  %vm1537 = vcmask 322816
  %1538 = vst.msk [vmem:[#allocation3] sm:$0xf] %vm1537, %v1490
  %1539 = vst.msk [vmem:[#allocation3 + $0x4] sm:$0xf] %vm1537, %v1492
  %1540 = vst.msk [vmem:[#allocation3 + $0x8] sm:$0xf] %vm1537, %v1494
  %1541 = vst.msk [vmem:[#allocation3 + $0xc] sm:$0xf] %vm1537, %v1496
  %1542 = vst.msk [vmem:[#allocation3 + $0x10] sm:$0xf] %vm1537, %v1498
  %1543 = vst.msk [vmem:[#allocation3 + $0x14] sm:$0xf] %vm1537, %v1500
  %1544 = vst.msk [vmem:[#allocation3 + $0x18] sm:$0xf] %vm1537, %v1502
  %1545 = vst.msk [vmem:[#allocation3 + $0x1c] sm:$0xf] %vm1537, %v1504
  %1546 = vst.msk [vmem:[#allocation3 + $0x20] sm:$0xf] %vm1537, %v1506
  %1547 = vst.msk [vmem:[#allocation3 + $0x24] sm:$0xf] %vm1537, %v1508
  %1548 = vst.msk [vmem:[#allocation3 + $0x28] sm:$0xf] %vm1537, %v1510
  %1549 = vst.msk [vmem:[#allocation3 + $0x2c] sm:$0xf] %vm1537, %v1512
  %1550 = vst.msk [vmem:[#allocation3 + $0x30] sm:$0xf] %vm1537, %v1514
  %1551 = vst.msk [vmem:[#allocation3 + $0x34] sm:$0xf] %vm1537, %v1516
  %1552 = vst.msk [vmem:[#allocation3 + $0x38] sm:$0xf] %vm1537, %v1518
  %1553 = vst.msk [vmem:[#allocation3 + $0x3c] sm:$0xf] %vm1537, %v1520
  %v1554 = vld [vmem:[%s480] sm:$0xe]
  %v1555 = vld [vmem:[%s480 + $0x4] sm:$0x1]
  %v1556 = vld [vmem:[%s480 + $0x8] sm:$0xe]
  %v1557 = vld [vmem:[%s480 + $0xc] sm:$0x1]
  %v1558 = vld [vmem:[%s480 + $0x10] sm:$0xe]
  %v1559 = vld [vmem:[%s480 + $0x14] sm:$0x1]
  %v1560 = vld [vmem:[%s480 + $0x18] sm:$0xe]
  %v1561 = vld [vmem:[%s480 + $0x1c] sm:$0x1]
  %v1562 = vld [vmem:[%s480 + $0x20] sm:$0xe]
  %v1563 = vld [vmem:[%s480 + $0x24] sm:$0x1]
  %v1564 = vld [vmem:[%s480 + $0x28] sm:$0xe]
  %v1565 = vld [vmem:[%s480 + $0x2c] sm:$0x1]
  %v1566 = vld [vmem:[%s480 + $0x30] sm:$0xe]
  %v1567 = vld [vmem:[%s480 + $0x34] sm:$0x1]
  %v1568 = vld [vmem:[%s480 + $0x38] sm:$0xe]
  %v1569 = vld [vmem:[%s480 + $0x3c] sm:$0x1]
  %v1570 = vld [vmem:[%s480 + $0x50] sm:$0xe]
  %v1571 = vld [vmem:[%s480 + $0x54] sm:$0x1]
  %v1572 = vld [vmem:[%s480 + $0x58] sm:$0xe]
  %v1573 = vld [vmem:[%s480 + $0x5c] sm:$0x1]
  %v1574 = vld [vmem:[%s480 + $0x60] sm:$0xe]
  %v1575 = vld [vmem:[%s480 + $0x64] sm:$0x1]
  %v1576 = vld [vmem:[%s480 + $0x68] sm:$0xe]
  %v1577 = vld [vmem:[%s480 + $0x6c] sm:$0x1]
  %v1578 = vld [vmem:[%s480 + $0x70] sm:$0xe]
  %v1579 = vld [vmem:[%s480 + $0x74] sm:$0x1]
  %v1580 = vld [vmem:[%s480 + $0x78] sm:$0xe]
  %v1581 = vld [vmem:[%s480 + $0x7c] sm:$0x1]
  %v1582 = vld [vmem:[%s480 + $0x80] sm:$0xe]
  %v1583 = vld [vmem:[%s480 + $0x84] sm:$0x1]
  %v1584 = vld [vmem:[%s480 + $0x88] sm:$0xe]
  %v1585 = vld [vmem:[%s480 + $0x8c] sm:$0x1]
  %v1618 = vrot.slane %v1554, 5
  %v1619 = vrot.slane %v1618, 4
  %v1620 = vrot.slane %v1555, 5
  %v1621 = vsel %vm1006, %v1619, %v1620
  %v1622 = vrot.slane %v1556, 5
  %v1623 = vrot.slane %v1622, 4
  %v1624 = vrot.slane %v1557, 5
  %v1625 = vsel %vm1006, %v1623, %v1624
  %v1626 = vrot.slane %v1558, 5
  %v1627 = vrot.slane %v1626, 4
  %v1628 = vrot.slane %v1559, 5
  %v1629 = vsel %vm1006, %v1627, %v1628
  %v1630 = vrot.slane %v1560, 5
  %v1631 = vrot.slane %v1630, 4
  %v1632 = vrot.slane %v1561, 5
  %v1633 = vsel %vm1006, %v1631, %v1632
  %v1634 = vrot.slane %v1562, 5
  %v1635 = vrot.slane %v1634, 4
  %v1636 = vrot.slane %v1563, 5
  %v1637 = vsel %vm1006, %v1635, %v1636
  %v1638 = vrot.slane %v1564, 5
  %v1639 = vrot.slane %v1638, 4
  %v1640 = vrot.slane %v1565, 5
  %v1641 = vsel %vm1006, %v1639, %v1640
  %v1642 = vrot.slane %v1566, 5
  %v1643 = vrot.slane %v1642, 4
  %v1644 = vrot.slane %v1567, 5
  %v1645 = vsel %vm1006, %v1643, %v1644
  %v1646 = vrot.slane %v1568, 5
  %v1647 = vrot.slane %v1646, 4
  %v1648 = vrot.slane %v1569, 5
  %v1649 = vsel %vm1006, %v1647, %v1648
  %v1650 = vrot.slane %v1570, 5
  %v1651 = vrot.slane %v1650, 4
  %v1652 = vrot.slane %v1571, 5
  %v1653 = vsel %vm1006, %v1651, %v1652
  %v1654 = vrot.slane %v1572, 5
  %v1655 = vrot.slane %v1654, 4
  %v1656 = vrot.slane %v1573, 5
  %v1657 = vsel %vm1006, %v1655, %v1656
  %v1658 = vrot.slane %v1574, 5
  %v1659 = vrot.slane %v1658, 4
  %v1660 = vrot.slane %v1575, 5
  %v1661 = vsel %vm1006, %v1659, %v1660
  %v1662 = vrot.slane %v1576, 5
  %v1663 = vrot.slane %v1662, 4
  %v1664 = vrot.slane %v1577, 5
  %v1665 = vsel %vm1006, %v1663, %v1664
  %v1666 = vrot.slane %v1578, 5
  %v1667 = vrot.slane %v1666, 4
  %v1668 = vrot.slane %v1579, 5
  %v1669 = vsel %vm1006, %v1667, %v1668
  %v1670 = vrot.slane %v1580, 5
  %v1671 = vrot.slane %v1670, 4
  %v1672 = vrot.slane %v1581, 5
  %v1673 = vsel %vm1006, %v1671, %v1672
  %v1674 = vrot.slane %v1582, 5
  %v1675 = vrot.slane %v1674, 4
  %v1676 = vrot.slane %v1583, 5
  %v1677 = vsel %vm1006, %v1675, %v1676
  %v1678 = vrot.slane %v1584, 5
  %v1679 = vrot.slane %v1678, 4
  %v1680 = vrot.slane %v1585, 5
  %v1681 = vsel %vm1006, %v1679, %v1680
  %1682 = vrot.lane.b32.xlu0 %v1621, 40
  %v1683 = vpop.permute.xlu0 %1682
  %1684 = vrot.lane.b32.xlu0 %v1625, 40
  %v1685 = vpop.permute.xlu0 %1684
  %1686 = vrot.lane.b32.xlu0 %v1629, 40
  %v1687 = vpop.permute.xlu0 %1686
  %1688 = vrot.lane.b32.xlu0 %v1633, 40
  %v1689 = vpop.permute.xlu0 %1688
  %1690 = vrot.lane.b32.xlu0 %v1637, 40
  %v1691 = vpop.permute.xlu0 %1690
  %1692 = vrot.lane.b32.xlu0 %v1641, 40
  %v1693 = vpop.permute.xlu0 %1692
  %1694 = vrot.lane.b32.xlu0 %v1645, 40
  %v1695 = vpop.permute.xlu0 %1694
  %1696 = vrot.lane.b32.xlu0 %v1649, 40
  %v1697 = vpop.permute.xlu0 %1696
  %1698 = vrot.lane.b32.xlu0 %v1653, 40
  %v1699 = vpop.permute.xlu0 %1698
  %1700 = vrot.lane.b32.xlu0 %v1657, 40
  %v1701 = vpop.permute.xlu0 %1700
  %1702 = vrot.lane.b32.xlu0 %v1661, 40
  %v1703 = vpop.permute.xlu0 %1702
  %1704 = vrot.lane.b32.xlu0 %v1665, 40
  %v1705 = vpop.permute.xlu0 %1704
  %1706 = vrot.lane.b32.xlu0 %v1669, 40
  %v1707 = vpop.permute.xlu0 %1706
  %1708 = vrot.lane.b32.xlu0 %v1673, 40
  %v1709 = vpop.permute.xlu0 %1708
  %1710 = vrot.lane.b32.xlu0 %v1677, 40
  %v1711 = vpop.permute.xlu0 %1710
  %1712 = vrot.lane.b32.xlu0 %v1681, 40
  %v1713 = vpop.permute.xlu0 %1712
  %vm1730 = vcmask 388416
  %1731 = vst.msk [vmem:[#allocation3] sm:$0xf] %vm1730, %v1683
  %1732 = vst.msk [vmem:[#allocation3 + $0x4] sm:$0xf] %vm1730, %v1685
  %1733 = vst.msk [vmem:[#allocation3 + $0x8] sm:$0xf] %vm1730, %v1687
  %1734 = vst.msk [vmem:[#allocation3 + $0xc] sm:$0xf] %vm1730, %v1689
  %1735 = vst.msk [vmem:[#allocation3 + $0x10] sm:$0xf] %vm1730, %v1691
  %1736 = vst.msk [vmem:[#allocation3 + $0x14] sm:$0xf] %vm1730, %v1693
  %1737 = vst.msk [vmem:[#allocation3 + $0x18] sm:$0xf] %vm1730, %v1695
  %1738 = vst.msk [vmem:[#allocation3 + $0x1c] sm:$0xf] %vm1730, %v1697
  %1739 = vst.msk [vmem:[#allocation3 + $0x20] sm:$0xf] %vm1730, %v1699
  %1740 = vst.msk [vmem:[#allocation3 + $0x24] sm:$0xf] %vm1730, %v1701
  %1741 = vst.msk [vmem:[#allocation3 + $0x28] sm:$0xf] %vm1730, %v1703
  %1742 = vst.msk [vmem:[#allocation3 + $0x2c] sm:$0xf] %vm1730, %v1705
  %1743 = vst.msk [vmem:[#allocation3 + $0x30] sm:$0xf] %vm1730, %v1707
  %1744 = vst.msk [vmem:[#allocation3 + $0x34] sm:$0xf] %vm1730, %v1709
  %1745 = vst.msk [vmem:[#allocation3 + $0x38] sm:$0xf] %vm1730, %v1711
  %1746 = vst.msk [vmem:[#allocation3 + $0x3c] sm:$0xf] %vm1730, %v1713
  %s1747 = scalar_lea.vmem [#allocation2], 16
  %v1748 = vld [vmem:[%s1747] sm:$0xf]
  %v1749 = vld [vmem:[%s1747 + $0x8] sm:$0xf]
  %v1750 = vld [vmem:[%s1747 + $0x10] sm:$0xf]
  %v1751 = vld [vmem:[%s1747 + $0x18] sm:$0xf]
  %v1752 = vld [vmem:[%s1747 + $0x20] sm:$0xf]
  %v1753 = vld [vmem:[%s1747 + $0x28] sm:$0xf]
  %v1754 = vld [vmem:[%s1747 + $0x30] sm:$0xf]
  %v1755 = vld [vmem:[%s1747 + $0x38] sm:$0xf]
  %v1756 = vld [vmem:[%s1747 + $0x50] sm:$0xf]
  %v1757 = vld [vmem:[%s1747 + $0x58] sm:$0xf]
  %v1758 = vld [vmem:[%s1747 + $0x60] sm:$0xf]
  %v1759 = vld [vmem:[%s1747 + $0x68] sm:$0xf]
  %v1760 = vld [vmem:[%s1747 + $0x70] sm:$0xf]
  %v1761 = vld [vmem:[%s1747 + $0x78] sm:$0xf]
  %v1762 = vld [vmem:[%s1747 + $0x80] sm:$0xf]
  %v1763 = vld [vmem:[%s1747 + $0x88] sm:$0xf]
  %1780 = vrot.lane.b32.xlu0 %v1748, 48
  %v1781 = vpop.permute.xlu0 %1780
  %1782 = vrot.lane.b32.xlu0 %v1749, 48
  %v1783 = vpop.permute.xlu0 %1782
  %1784 = vrot.lane.b32.xlu0 %v1750, 48
  %v1785 = vpop.permute.xlu0 %1784
  %1786 = vrot.lane.b32.xlu0 %v1751, 48
  %v1787 = vpop.permute.xlu0 %1786
  %1788 = vrot.lane.b32.xlu0 %v1752, 48
  %v1789 = vpop.permute.xlu0 %1788
  %1790 = vrot.lane.b32.xlu0 %v1753, 48
  %v1791 = vpop.permute.xlu0 %1790
  %1792 = vrot.lane.b32.xlu0 %v1754, 48
  %v1793 = vpop.permute.xlu0 %1792
  %1794 = vrot.lane.b32.xlu0 %v1755, 48
  %v1795 = vpop.permute.xlu0 %1794
  %1796 = vrot.lane.b32.xlu0 %v1756, 48
  %v1797 = vpop.permute.xlu0 %1796
  %1798 = vrot.lane.b32.xlu0 %v1757, 48
  %v1799 = vpop.permute.xlu0 %1798
  %1800 = vrot.lane.b32.xlu0 %v1758, 48
  %v1801 = vpop.permute.xlu0 %1800
  %1802 = vrot.lane.b32.xlu0 %v1759, 48
  %v1803 = vpop.permute.xlu0 %1802
  %1804 = vrot.lane.b32.xlu0 %v1760, 48
  %v1805 = vpop.permute.xlu0 %1804
  %1806 = vrot.lane.b32.xlu0 %v1761, 48
  %v1807 = vpop.permute.xlu0 %1806
  %1808 = vrot.lane.b32.xlu0 %v1762, 48
  %v1809 = vpop.permute.xlu0 %1808
  %1810 = vrot.lane.b32.xlu0 %v1763, 48
  %v1811 = vpop.permute.xlu0 %1810
  %vm1828 = vcmask 454016
  %1829 = vst.msk [vmem:[#allocation3] sm:$0xf] %vm1828, %v1781
  %1830 = vst.msk [vmem:[#allocation3 + $0x4] sm:$0xf] %vm1828, %v1783
  %1831 = vst.msk [vmem:[#allocation3 + $0x8] sm:$0xf] %vm1828, %v1785
  %1832 = vst.msk [vmem:[#allocation3 + $0xc] sm:$0xf] %vm1828, %v1787
  %1833 = vst.msk [vmem:[#allocation3 + $0x10] sm:$0xf] %vm1828, %v1789
  %1834 = vst.msk [vmem:[#allocation3 + $0x14] sm:$0xf] %vm1828, %v1791
  %1835 = vst.msk [vmem:[#allocation3 + $0x18] sm:$0xf] %vm1828, %v1793
  %1836 = vst.msk [vmem:[#allocation3 + $0x1c] sm:$0xf] %vm1828, %v1795
  %1837 = vst.msk [vmem:[#allocation3 + $0x20] sm:$0xf] %vm1828, %v1797
  %1838 = vst.msk [vmem:[#allocation3 + $0x24] sm:$0xf] %vm1828, %v1799
  %1839 = vst.msk [vmem:[#allocation3 + $0x28] sm:$0xf] %vm1828, %v1801
  %1840 = vst.msk [vmem:[#allocation3 + $0x2c] sm:$0xf] %vm1828, %v1803
  %1841 = vst.msk [vmem:[#allocation3 + $0x30] sm:$0xf] %vm1828, %v1805
  %1842 = vst.msk [vmem:[#allocation3 + $0x34] sm:$0xf] %vm1828, %v1807
  %1843 = vst.msk [vmem:[#allocation3 + $0x38] sm:$0xf] %vm1828, %v1809
  %1844 = vst.msk [vmem:[#allocation3 + $0x3c] sm:$0xf] %vm1828, %v1811
  %v1845 = vld [vmem:[%s1747] sm:$0xf]
  %v1846 = vld [vmem:[%s1747 + $0x4] sm:$0x1]
  %v1847 = vld [vmem:[%s1747 + $0x8] sm:$0xf]
  %v1848 = vld [vmem:[%s1747 + $0xc] sm:$0x1]
  %v1849 = vld [vmem:[%s1747 + $0x10] sm:$0xf]
  %v1850 = vld [vmem:[%s1747 + $0x14] sm:$0x1]
  %v1851 = vld [vmem:[%s1747 + $0x18] sm:$0xf]
  %v1852 = vld [vmem:[%s1747 + $0x1c] sm:$0x1]
  %v1853 = vld [vmem:[%s1747 + $0x20] sm:$0xf]
  %v1854 = vld [vmem:[%s1747 + $0x24] sm:$0x1]
  %v1855 = vld [vmem:[%s1747 + $0x28] sm:$0xf]
  %v1856 = vld [vmem:[%s1747 + $0x2c] sm:$0x1]
  %v1857 = vld [vmem:[%s1747 + $0x30] sm:$0xf]
  %v1858 = vld [vmem:[%s1747 + $0x34] sm:$0x1]
  %v1859 = vld [vmem:[%s1747 + $0x38] sm:$0xf]
  %v1860 = vld [vmem:[%s1747 + $0x3c] sm:$0x1]
  %v1861 = vld [vmem:[%s1747 + $0x50] sm:$0xf]
  %v1862 = vld [vmem:[%s1747 + $0x54] sm:$0x1]
  %v1863 = vld [vmem:[%s1747 + $0x58] sm:$0xf]
  %v1864 = vld [vmem:[%s1747 + $0x5c] sm:$0x1]
  %v1865 = vld [vmem:[%s1747 + $0x60] sm:$0xf]
  %v1866 = vld [vmem:[%s1747 + $0x64] sm:$0x1]
  %v1867 = vld [vmem:[%s1747 + $0x68] sm:$0xf]
  %v1868 = vld [vmem:[%s1747 + $0x6c] sm:$0x1]
  %v1869 = vld [vmem:[%s1747 + $0x70] sm:$0xf]
  %v1870 = vld [vmem:[%s1747 + $0x74] sm:$0x1]
  %v1871 = vld [vmem:[%s1747 + $0x78] sm:$0xf]
  %v1872 = vld [vmem:[%s1747 + $0x7c] sm:$0x1]
  %v1873 = vld [vmem:[%s1747 + $0x80] sm:$0xf]
  %v1874 = vld [vmem:[%s1747 + $0x84] sm:$0x1]
  %v1875 = vld [vmem:[%s1747 + $0x88] sm:$0xf]
  %v1876 = vld [vmem:[%s1747 + $0x8c] sm:$0x1]
  %v1878 = vshrl.u32 %v1845, 16
  %v1880 = vrot.slane %v1878, 4
  %v1881 = vshll.u32 %v1845, 16
  %v1883 = vrot.slane %v1881, 5
  %v1884 = vor.u32 %v1880, %v1883
  %v1885 = vrot.slane %v1884, 4
  %v1887 = vshll.u32 %v1846, 16
  %v1889 = vrot.slane %v1887, 5
  %v1890 = vsel %vm650, %v1885, %v1889
  %v1892 = vshrl.u32 %v1847, 16
  %v1894 = vrot.slane %v1892, 4
  %v1895 = vshll.u32 %v1847, 16
  %v1897 = vrot.slane %v1895, 5
  %v1898 = vor.u32 %v1894, %v1897
  %v1899 = vrot.slane %v1898, 4
  %v1901 = vshll.u32 %v1848, 16
  %v1903 = vrot.slane %v1901, 5
  %v1904 = vsel %vm650, %v1899, %v1903
  %v1906 = vshrl.u32 %v1849, 16
  %v1908 = vrot.slane %v1906, 4
  %v1909 = vshll.u32 %v1849, 16
  %v1911 = vrot.slane %v1909, 5
  %v1912 = vor.u32 %v1908, %v1911
  %v1913 = vrot.slane %v1912, 4
  %v1915 = vshll.u32 %v1850, 16
  %v1917 = vrot.slane %v1915, 5
  %v1918 = vsel %vm650, %v1913, %v1917
  %v1920 = vshrl.u32 %v1851, 16
  %v1922 = vrot.slane %v1920, 4
  %v1923 = vshll.u32 %v1851, 16
  %v1925 = vrot.slane %v1923, 5
  %v1926 = vor.u32 %v1922, %v1925
  %v1927 = vrot.slane %v1926, 4
  %v1929 = vshll.u32 %v1852, 16
  %v1931 = vrot.slane %v1929, 5
  %v1932 = vsel %vm650, %v1927, %v1931
  %v1934 = vshrl.u32 %v1853, 16
  %v1936 = vrot.slane %v1934, 4
  %v1937 = vshll.u32 %v1853, 16
  %v1939 = vrot.slane %v1937, 5
  %v1940 = vor.u32 %v1936, %v1939
  %v1941 = vrot.slane %v1940, 4
  %v1943 = vshll.u32 %v1854, 16
  %v1945 = vrot.slane %v1943, 5
  %v1946 = vsel %vm650, %v1941, %v1945
  %v1948 = vshrl.u32 %v1855, 16
  %v1950 = vrot.slane %v1948, 4
  %v1951 = vshll.u32 %v1855, 16
  %v1953 = vrot.slane %v1951, 5
  %v1954 = vor.u32 %v1950, %v1953
  %v1955 = vrot.slane %v1954, 4
  %v1957 = vshll.u32 %v1856, 16
  %v1959 = vrot.slane %v1957, 5
  %v1960 = vsel %vm650, %v1955, %v1959
  %v1962 = vshrl.u32 %v1857, 16
  %v1964 = vrot.slane %v1962, 4
  %v1965 = vshll.u32 %v1857, 16
  %v1967 = vrot.slane %v1965, 5
  %v1968 = vor.u32 %v1964, %v1967
  %v1969 = vrot.slane %v1968, 4
  %v1971 = vshll.u32 %v1858, 16
  %v1973 = vrot.slane %v1971, 5
  %v1974 = vsel %vm650, %v1969, %v1973
  %v1976 = vshrl.u32 %v1859, 16
  %v1978 = vrot.slane %v1976, 4
  %v1979 = vshll.u32 %v1859, 16
  %v1981 = vrot.slane %v1979, 5
  %v1982 = vor.u32 %v1978, %v1981
  %v1983 = vrot.slane %v1982, 4
  %v1985 = vshll.u32 %v1860, 16
  %v1987 = vrot.slane %v1985, 5
  %v1988 = vsel %vm650, %v1983, %v1987
  %v1990 = vshrl.u32 %v1861, 16
  %v1992 = vrot.slane %v1990, 4
  %v1993 = vshll.u32 %v1861, 16
  %v1995 = vrot.slane %v1993, 5
  %v1996 = vor.u32 %v1992, %v1995
  %v1997 = vrot.slane %v1996, 4
  %v1999 = vshll.u32 %v1862, 16
  %v2001 = vrot.slane %v1999, 5
  %v2002 = vsel %vm650, %v1997, %v2001
  %v2004 = vshrl.u32 %v1863, 16
  %v2006 = vrot.slane %v2004, 4
  %v2007 = vshll.u32 %v1863, 16
  %v2009 = vrot.slane %v2007, 5
  %v2010 = vor.u32 %v2006, %v2009
  %v2011 = vrot.slane %v2010, 4
  %v2013 = vshll.u32 %v1864, 16
  %v2015 = vrot.slane %v2013, 5
  %v2016 = vsel %vm650, %v2011, %v2015
  %v2018 = vshrl.u32 %v1865, 16
  %v2020 = vrot.slane %v2018, 4
  %v2021 = vshll.u32 %v1865, 16
  %v2023 = vrot.slane %v2021, 5
  %v2024 = vor.u32 %v2020, %v2023
  %v2025 = vrot.slane %v2024, 4
  %v2027 = vshll.u32 %v1866, 16
  %v2029 = vrot.slane %v2027, 5
  %v2030 = vsel %vm650, %v2025, %v2029
  %v2032 = vshrl.u32 %v1867, 16
  %v2034 = vrot.slane %v2032, 4
  %v2035 = vshll.u32 %v1867, 16
  %v2037 = vrot.slane %v2035, 5
  %v2038 = vor.u32 %v2034, %v2037
  %v2039 = vrot.slane %v2038, 4
  %v2041 = vshll.u32 %v1868, 16
  %v2043 = vrot.slane %v2041, 5
  %v2044 = vsel %vm650, %v2039, %v2043
  %v2046 = vshrl.u32 %v1869, 16
  %v2048 = vrot.slane %v2046, 4
  %v2049 = vshll.u32 %v1869, 16
  %v2051 = vrot.slane %v2049, 5
  %v2052 = vor.u32 %v2048, %v2051
  %v2053 = vrot.slane %v2052, 4
  %v2055 = vshll.u32 %v1870, 16
  %v2057 = vrot.slane %v2055, 5
  %v2058 = vsel %vm650, %v2053, %v2057
  %v2060 = vshrl.u32 %v1871, 16
  %v2062 = vrot.slane %v2060, 4
  %v2063 = vshll.u32 %v1871, 16
  %v2065 = vrot.slane %v2063, 5
  %v2066 = vor.u32 %v2062, %v2065
  %v2067 = vrot.slane %v2066, 4
  %v2069 = vshll.u32 %v1872, 16
  %v2071 = vrot.slane %v2069, 5
  %v2072 = vsel %vm650, %v2067, %v2071
  %v2074 = vshrl.u32 %v1873, 16
  %v2076 = vrot.slane %v2074, 4
  %v2077 = vshll.u32 %v1873, 16
  %v2079 = vrot.slane %v2077, 5
  %v2080 = vor.u32 %v2076, %v2079
  %v2081 = vrot.slane %v2080, 4
  %v2083 = vshll.u32 %v1874, 16
  %v2085 = vrot.slane %v2083, 5
  %v2086 = vsel %vm650, %v2081, %v2085
  %v2088 = vshrl.u32 %v1875, 16
  %v2090 = vrot.slane %v2088, 4
  %v2091 = vshll.u32 %v1875, 16
  %v2093 = vrot.slane %v2091, 5
  %v2094 = vor.u32 %v2090, %v2093
  %v2095 = vrot.slane %v2094, 4
  %v2097 = vshll.u32 %v1876, 16
  %v2099 = vrot.slane %v2097, 5
  %v2100 = vsel %vm650, %v2095, %v2099
  %2101 = vrot.lane.b32.xlu0 %v1890, 56
  %v2102 = vpop.permute.xlu0 %2101
  %2103 = vrot.lane.b32.xlu0 %v1904, 56
  %v2104 = vpop.permute.xlu0 %2103
  %2105 = vrot.lane.b32.xlu0 %v1918, 56
  %v2106 = vpop.permute.xlu0 %2105
  %2107 = vrot.lane.b32.xlu0 %v1932, 56
  %v2108 = vpop.permute.xlu0 %2107
  %2109 = vrot.lane.b32.xlu0 %v1946, 56
  %v2110 = vpop.permute.xlu0 %2109
  %2111 = vrot.lane.b32.xlu0 %v1960, 56
  %v2112 = vpop.permute.xlu0 %2111
  %2113 = vrot.lane.b32.xlu0 %v1974, 56
  %v2114 = vpop.permute.xlu0 %2113
  %2115 = vrot.lane.b32.xlu0 %v1988, 56
  %v2116 = vpop.permute.xlu0 %2115
  %2117 = vrot.lane.b32.xlu0 %v2002, 56
  %v2118 = vpop.permute.xlu0 %2117
  %2119 = vrot.lane.b32.xlu0 %v2016, 56
  %v2120 = vpop.permute.xlu0 %2119
  %2121 = vrot.lane.b32.xlu0 %v2030, 56
  %v2122 = vpop.permute.xlu0 %2121
  %2123 = vrot.lane.b32.xlu0 %v2044, 56
  %v2124 = vpop.permute.xlu0 %2123
  %2125 = vrot.lane.b32.xlu0 %v2058, 56
  %v2126 = vpop.permute.xlu0 %2125
  %2127 = vrot.lane.b32.xlu0 %v2072, 56
  %v2128 = vpop.permute.xlu0 %2127
  %2129 = vrot.lane.b32.xlu0 %v2086, 56
  %v2130 = vpop.permute.xlu0 %2129
  %2131 = vrot.lane.b32.xlu0 %v2100, 56
  %v2132 = vpop.permute.xlu0 %2131
  %vm2149 = vcmask 519616
  %2150 = vst.msk [vmem:[#allocation3] sm:$0xf] %vm2149, %v2102
  %2151 = vst.msk [vmem:[#allocation3 + $0x4] sm:$0xf] %vm2149, %v2104
  %2152 = vst.msk [vmem:[#allocation3 + $0x8] sm:$0xf] %vm2149, %v2106
  %2153 = vst.msk [vmem:[#allocation3 + $0xc] sm:$0xf] %vm2149, %v2108
  %2154 = vst.msk [vmem:[#allocation3 + $0x10] sm:$0xf] %vm2149, %v2110
  %2155 = vst.msk [vmem:[#allocation3 + $0x14] sm:$0xf] %vm2149, %v2112
  %2156 = vst.msk [vmem:[#allocation3 + $0x18] sm:$0xf] %vm2149, %v2114
  %2157 = vst.msk [vmem:[#allocation3 + $0x1c] sm:$0xf] %vm2149, %v2116
  %2158 = vst.msk [vmem:[#allocation3 + $0x20] sm:$0xf] %vm2149, %v2118
  %2159 = vst.msk [vmem:[#allocation3 + $0x24] sm:$0xf] %vm2149, %v2120
  %2160 = vst.msk [vmem:[#allocation3 + $0x28] sm:$0xf] %vm2149, %v2122
  %2161 = vst.msk [vmem:[#allocation3 + $0x2c] sm:$0xf] %vm2149, %v2124
  %2162 = vst.msk [vmem:[#allocation3 + $0x30] sm:$0xf] %vm2149, %v2126
  %2163 = vst.msk [vmem:[#allocation3 + $0x34] sm:$0xf] %vm2149, %v2128
  %2164 = vst.msk [vmem:[#allocation3 + $0x38] sm:$0xf] %vm2149, %v2130
  %2165 = vst.msk [vmem:[#allocation3 + $0x3c] sm:$0xf] %vm2149, %v2132
  %v2166 = vld [vmem:[%s1747] sm:$0xe]
  %v2167 = vld [vmem:[%s1747 + $0x4] sm:$0x1]
  %v2168 = vld [vmem:[%s1747 + $0x8] sm:$0xe]
  %v2169 = vld [vmem:[%s1747 + $0xc] sm:$0x1]
  %v2170 = vld [vmem:[%s1747 + $0x10] sm:$0xe]
  %v2171 = vld [vmem:[%s1747 + $0x14] sm:$0x1]
  %v2172 = vld [vmem:[%s1747 + $0x18] sm:$0xe]
  %v2173 = vld [vmem:[%s1747 + $0x1c] sm:$0x1]
  %v2174 = vld [vmem:[%s1747 + $0x20] sm:$0xe]
  %v2175 = vld [vmem:[%s1747 + $0x24] sm:$0x1]
  %v2176 = vld [vmem:[%s1747 + $0x28] sm:$0xe]
  %v2177 = vld [vmem:[%s1747 + $0x2c] sm:$0x1]
  %v2178 = vld [vmem:[%s1747 + $0x30] sm:$0xe]
  %v2179 = vld [vmem:[%s1747 + $0x34] sm:$0x1]
  %v2180 = vld [vmem:[%s1747 + $0x38] sm:$0xe]
  %v2181 = vld [vmem:[%s1747 + $0x3c] sm:$0x1]
  %v2182 = vld [vmem:[%s1747 + $0x50] sm:$0xe]
  %v2183 = vld [vmem:[%s1747 + $0x54] sm:$0x1]
  %v2184 = vld [vmem:[%s1747 + $0x58] sm:$0xe]
  %v2185 = vld [vmem:[%s1747 + $0x5c] sm:$0x1]
  %v2186 = vld [vmem:[%s1747 + $0x60] sm:$0xe]
  %v2187 = vld [vmem:[%s1747 + $0x64] sm:$0x1]
  %v2188 = vld [vmem:[%s1747 + $0x68] sm:$0xe]
  %v2189 = vld [vmem:[%s1747 + $0x6c] sm:$0x1]
  %v2190 = vld [vmem:[%s1747 + $0x70] sm:$0xe]
  %v2191 = vld [vmem:[%s1747 + $0x74] sm:$0x1]
  %v2192 = vld [vmem:[%s1747 + $0x78] sm:$0xe]
  %v2193 = vld [vmem:[%s1747 + $0x7c] sm:$0x1]
  %v2194 = vld [vmem:[%s1747 + $0x80] sm:$0xe]
  %v2195 = vld [vmem:[%s1747 + $0x84] sm:$0x1]
  %v2196 = vld [vmem:[%s1747 + $0x88] sm:$0xe]
  %v2197 = vld [vmem:[%s1747 + $0x8c] sm:$0x1]
  %v2230 = vrot.slane %v2166, 5
  %v2231 = vrot.slane %v2230, 4
  %v2232 = vrot.slane %v2167, 5
  %v2233 = vsel %vm1006, %v2231, %v2232
  %v2234 = vrot.slane %v2168, 5
  %v2235 = vrot.slane %v2234, 4
  %v2236 = vrot.slane %v2169, 5
  %v2237 = vsel %vm1006, %v2235, %v2236
  %v2238 = vrot.slane %v2170, 5
  %v2239 = vrot.slane %v2238, 4
  %v2240 = vrot.slane %v2171, 5
  %v2241 = vsel %vm1006, %v2239, %v2240
  %v2242 = vrot.slane %v2172, 5
  %v2243 = vrot.slane %v2242, 4
  %v2244 = vrot.slane %v2173, 5
  %v2245 = vsel %vm1006, %v2243, %v2244
  %v2246 = vrot.slane %v2174, 5
  %v2247 = vrot.slane %v2246, 4
  %v2248 = vrot.slane %v2175, 5
  %v2249 = vsel %vm1006, %v2247, %v2248
  %v2250 = vrot.slane %v2176, 5
  %v2251 = vrot.slane %v2250, 4
  %v2252 = vrot.slane %v2177, 5
  %v2253 = vsel %vm1006, %v2251, %v2252
  %v2254 = vrot.slane %v2178, 5
  %v2255 = vrot.slane %v2254, 4
  %v2256 = vrot.slane %v2179, 5
  %v2257 = vsel %vm1006, %v2255, %v2256
  %v2258 = vrot.slane %v2180, 5
  %v2259 = vrot.slane %v2258, 4
  %v2260 = vrot.slane %v2181, 5
  %v2261 = vsel %vm1006, %v2259, %v2260
  %v2262 = vrot.slane %v2182, 5
  %v2263 = vrot.slane %v2262, 4
  %v2264 = vrot.slane %v2183, 5
  %v2265 = vsel %vm1006, %v2263, %v2264
  %v2266 = vrot.slane %v2184, 5
  %v2267 = vrot.slane %v2266, 4
  %v2268 = vrot.slane %v2185, 5
  %v2269 = vsel %vm1006, %v2267, %v2268
  %v2270 = vrot.slane %v2186, 5
  %v2271 = vrot.slane %v2270, 4
  %v2272 = vrot.slane %v2187, 5
  %v2273 = vsel %vm1006, %v2271, %v2272
  %v2274 = vrot.slane %v2188, 5
  %v2275 = vrot.slane %v2274, 4
  %v2276 = vrot.slane %v2189, 5
  %v2277 = vsel %vm1006, %v2275, %v2276
  %v2278 = vrot.slane %v2190, 5
  %v2279 = vrot.slane %v2278, 4
  %v2280 = vrot.slane %v2191, 5
  %v2281 = vsel %vm1006, %v2279, %v2280
  %v2282 = vrot.slane %v2192, 5
  %v2283 = vrot.slane %v2282, 4
  %v2284 = vrot.slane %v2193, 5
  %v2285 = vsel %vm1006, %v2283, %v2284
  %v2286 = vrot.slane %v2194, 5
  %v2287 = vrot.slane %v2286, 4
  %v2288 = vrot.slane %v2195, 5
  %v2289 = vsel %vm1006, %v2287, %v2288
  %v2290 = vrot.slane %v2196, 5
  %v2291 = vrot.slane %v2290, 4
  %v2292 = vrot.slane %v2197, 5
  %v2293 = vsel %vm1006, %v2291, %v2292
  %2294 = vrot.lane.b32.xlu0 %v2233, 64
  %v2295 = vpop.permute.xlu0 %2294
  %2296 = vrot.lane.b32.xlu0 %v2237, 64
  %v2297 = vpop.permute.xlu0 %2296
  %2298 = vrot.lane.b32.xlu0 %v2241, 64
  %v2299 = vpop.permute.xlu0 %2298
  %2300 = vrot.lane.b32.xlu0 %v2245, 64
  %v2301 = vpop.permute.xlu0 %2300
  %2302 = vrot.lane.b32.xlu0 %v2249, 64
  %v2303 = vpop.permute.xlu0 %2302
  %2304 = vrot.lane.b32.xlu0 %v2253, 64
  %v2305 = vpop.permute.xlu0 %2304
  %2306 = vrot.lane.b32.xlu0 %v2257, 64
  %v2307 = vpop.permute.xlu0 %2306
  %2308 = vrot.lane.b32.xlu0 %v2261, 64
  %v2309 = vpop.permute.xlu0 %2308
  %2310 = vrot.lane.b32.xlu0 %v2265, 64
  %v2311 = vpop.permute.xlu0 %2310
  %2312 = vrot.lane.b32.xlu0 %v2269, 64
  %v2313 = vpop.permute.xlu0 %2312
  %2314 = vrot.lane.b32.xlu0 %v2273, 64
  %v2315 = vpop.permute.xlu0 %2314
  %2316 = vrot.lane.b32.xlu0 %v2277, 64
  %v2317 = vpop.permute.xlu0 %2316
  %2318 = vrot.lane.b32.xlu0 %v2281, 64
  %v2319 = vpop.permute.xlu0 %2318
  %2320 = vrot.lane.b32.xlu0 %v2285, 64
  %v2321 = vpop.permute.xlu0 %2320
  %2322 = vrot.lane.b32.xlu0 %v2289, 64
  %v2323 = vpop.permute.xlu0 %2322
  %2324 = vrot.lane.b32.xlu0 %v2293, 64
  %v2325 = vpop.permute.xlu0 %2324
  %vm2342 = vcmask 585216
  %2343 = vst.msk [vmem:[#allocation3] sm:$0xf] %vm2342, %v2295
  %2344 = vst.msk [vmem:[#allocation3 + $0x4] sm:$0xf] %vm2342, %v2297
  %2345 = vst.msk [vmem:[#allocation3 + $0x8] sm:$0xf] %vm2342, %v2299
  %2346 = vst.msk [vmem:[#allocation3 + $0xc] sm:$0xf] %vm2342, %v2301
  %2347 = vst.msk [vmem:[#allocation3 + $0x10] sm:$0xf] %vm2342, %v2303
  %2348 = vst.msk [vmem:[#allocation3 + $0x14] sm:$0xf] %vm2342, %v2305
  %2349 = vst.msk [vmem:[#allocation3 + $0x18] sm:$0xf] %vm2342, %v2307
  %2350 = vst.msk [vmem:[#allocation3 + $0x1c] sm:$0xf] %vm2342, %v2309
  %2351 = vst.msk [vmem:[#allocation3 + $0x20] sm:$0xf] %vm2342, %v2311
  %2352 = vst.msk [vmem:[#allocation3 + $0x24] sm:$0xf] %vm2342, %v2313
  %2353 = vst.msk [vmem:[#allocation3 + $0x28] sm:$0xf] %vm2342, %v2315
  %2354 = vst.msk [vmem:[#allocation3 + $0x2c] sm:$0xf] %vm2342, %v2317
  %2355 = vst.msk [vmem:[#allocation3 + $0x30] sm:$0xf] %vm2342, %v2319
  %2356 = vst.msk [vmem:[#allocation3 + $0x34] sm:$0xf] %vm2342, %v2321
  %2357 = vst.msk [vmem:[#allocation3 + $0x38] sm:$0xf] %vm2342, %v2323
  %2358 = vst.msk [vmem:[#allocation3 + $0x3c] sm:$0xf] %vm2342, %v2325
  %v2359 = vld [vmem:[#allocation3] sm:$0xf]
  %v2360 = vld [vmem:[#allocation3 + $0x4] sm:$0xf]
  %v2361 = vld [vmem:[#allocation3 + $0x8] sm:$0xf]
  %v2362 = vld [vmem:[#allocation3 + $0xc] sm:$0xf]
  %v2363 = vld [vmem:[#allocation3 + $0x10] sm:$0xf]
  %v2364 = vld [vmem:[#allocation3 + $0x14] sm:$0xf]
  %v2365 = vld [vmem:[#allocation3 + $0x18] sm:$0xf]
  %v2366 = vld [vmem:[#allocation3 + $0x1c] sm:$0xf]
  %v2367 = vld [vmem:[#allocation3 + $0x20] sm:$0xf]
  %v2368 = vld [vmem:[#allocation3 + $0x24] sm:$0xf]
  %v2369 = vld [vmem:[#allocation3 + $0x28] sm:$0xf]
  %v2370 = vld [vmem:[#allocation3 + $0x2c] sm:$0xf]
  %v2371 = vld [vmem:[#allocation3 + $0x30] sm:$0xf]
  %v2372 = vld [vmem:[#allocation3 + $0x34] sm:$0xf]
  %v2373 = vld [vmem:[#allocation3 + $0x38] sm:$0xf]
  %v2374 = vld [vmem:[#allocation3 + $0x3c] sm:$0xf]
  %v2375 = vld [vmem:[%s3] sm:$0xf]
  %v2376 = vld [vmem:[%s3 + $0x4] sm:$0xf]
  %v2377 = vld [vmem:[%s3 + $0x8] sm:$0xf]
  %v2378 = vld [vmem:[%s3 + $0xc] sm:$0xf]
  %v2379 = vld [vmem:[%s3 + $0x10] sm:$0xf]
  %v2380 = vld [vmem:[%s3 + $0x14] sm:$0xf]
  %v2381 = vld [vmem:[%s3 + $0x18] sm:$0xf]
  %v2382 = vld [vmem:[%s3 + $0x1c] sm:$0xf]
  %v2383 = vld [vmem:[%s3 + $0x20] sm:$0xf]
  %v2400 = vunpack.c.l.b16 %v2359
  %v2401 = vunpack.c.l.b16 %v2360
  %v2402 = vunpack.c.l.b16 %v2361
  %v2403 = vunpack.c.l.b16 %v2362
  %v2404 = vunpack.c.l.b16 %v2363
  %v2405 = vunpack.c.l.b16 %v2364
  %v2406 = vunpack.c.l.b16 %v2365
  %v2407 = vunpack.c.l.b16 %v2366
  %v2408 = vunpack.c.l.b16 %v2367
  %v2409 = vunpack.c.l.b16 %v2368
  %v2410 = vunpack.c.l.b16 %v2369
  %v2411 = vunpack.c.l.b16 %v2370
  %v2412 = vunpack.c.l.b16 %v2371
  %v2413 = vunpack.c.l.b16 %v2372
  %v2414 = vunpack.c.l.b16 %v2373
  %v2415 = vunpack.c.l.b16 %v2374
  %v2416 = vpack.c.b16 %v2401, %v2400
  %v2417 = vpack.c.b16 %v2403, %v2402
  %v2418 = vpack.c.b16 %v2405, %v2404
  %v2419 = vpack.c.b16 %v2407, %v2406
  %v2420 = vpack.c.b16 %v2409, %v2408
  %v2421 = vpack.c.b16 %v2411, %v2410
  %v2422 = vpack.c.b16 %v2413, %v2412
  %v2423 = vpack.c.b16 %v2415, %v2414
  %v2433 = vunpack.c.l.b16 %v2375
  %v2434 = vunpack.c.l.b16 %v2376
  %v2435 = vunpack.c.l.b16 %v2377
  %v2436 = vunpack.c.l.b16 %v2378
  %v2437 = vunpack.c.l.b16 %v2379
  %v2438 = vunpack.c.l.b16 %v2380
  %v2439 = vunpack.c.l.b16 %v2381
  %v2440 = vunpack.c.l.b16 %v2382
  %v2441 = vunpack.c.l.b16 %v2383
  %v2442 = vpack.c.b16 %v2434, %v2433
  %v2443 = vpack.c.b16 %v2436, %v2435
  %v2444 = vpack.c.b16 %v2438, %v2437
  %v2445 = vpack.c.b16 %v2440, %v2439
  %v2446 = vpack.c.b16 %v2441, %v2441
  %vm2451 = vcmask 588800
  %v2453 = vsel %vm2451, %v2416, 0
  %v2456 = vsel %vm2451, %v2417, 0
  %v2459 = vsel %vm2451, %v2418, 0
  %v2462 = vsel %vm2451, %v2419, 0
  %v2465 = vsel %vm2451, %v2420, 0
  %v2468 = vsel %vm2451, %v2421, 0
  %v2471 = vsel %vm2451, %v2422, 0
  %v2474 = vsel %vm2451, %v2423, 0
  %vm2476 = vcmask 1043456
  %v2478 = vsel %vm2476, %v2446, 0
  %2480 = vmatprep.subr.bf16.mxu0 0
  %2481 = vmatpush1.bf16.msra.mxu0 0
  %2482 = vmatprep.subr.bf16.mxu0 0
  %2483 = vmatpush1.bf16.msra.mxu0 0
  %2484 = vmatprep.subr.bf16.mxu0 0
  %2485 = vmatpush1.bf16.msra.mxu0 0
  %2486 = vmatprep.subr.bf16.mxu0 0
  %2487 = vmatpush1.bf16.msra.mxu0 %v2478
  %2488 = vmatprep.subr.bf16.mxu0 0
  %2489 = vmatpush1.bf16.msra.mxu0 %v2445
  %2490 = vmatprep.subr.bf16.mxu0 0
  %2491 = vmatpush1.bf16.msra.mxu0 %v2444
  %2492 = vmatprep.subr.bf16.mxu0 0
  %2493 = vmatpush1.bf16.msra.mxu0 %v2443
  %2494 = vmatprep.subr.bf16.mxu0 0
  %2495 = vmatpush1.bf16.msra.mxu0 %v2442
  %2496 = vmatprep.subr.bf16.mxu0 0
  %2497 = vmatpush2.bf16.msra.mxu0 0
  %2498 = vmatprep.subr.bf16.mxu0 0
  %2499 = vmatpush2.bf16.msra.mxu0 0
  %2500 = vmatprep.subr.bf16.mxu0 0
  %2501 = vmatpush2.bf16.msra.mxu0 0
  %2502 = vmatprep.subr.bf16.mxu0 0
  %2503 = vmatpush2.bf16.msra.mxu0 0
  %2504 = vmatprep.subr.bf16.mxu0 0
  %2505 = vmatpush2.bf16.msra.mxu0 0
  %2506 = vmatprep.subr.bf16.mxu0 0
  %2507 = vmatpush2.bf16.msra.mxu0 0
  %2508 = vmatprep.subr.bf16.mxu0 0
  %2509 = vmatpush2.bf16.msra.mxu0 0
  %2510 = vmatprep.subr.bf16.mxu0 0
  %2511 = vmatpush2.bf16.msra.mxu0 0
  %2512 = vmatprep.mubr.bf16.mxu0 0
  %2513 = vmatmul.mubr.bf16.gmra.mxu0 %v2453
  %v2514 = vpop.f32.mrf.mxu0
  %v2515 = vadd.f32 0.0, %v2514
  %v2516 = vpop.f32.mrf.mxu0
  %v2517 = vpop.f32.mrf.mxu0
  %v2518 = vadd.f32 0.0, %v2517
  %v2519 = vpop.f32.mrf.mxu0
  %2520 = vmatprep.mubr.bf16.mxu0 0
  %2521 = vmatmul.mubr.bf16.gmra.mxu0 %v2456
  %v2522 = vpop.f32.mrf.mxu0
  %v2523 = vadd.f32 0.0, %v2522
  %v2524 = vpop.f32.mrf.mxu0
  %v2525 = vpop.f32.mrf.mxu0
  %v2526 = vadd.f32 0.0, %v2525
  %v2527 = vpop.f32.mrf.mxu0
  %2528 = vmatprep.mubr.bf16.mxu0 0
  %2529 = vmatmul.mubr.bf16.gmra.mxu0 %v2459
  %v2530 = vpop.f32.mrf.mxu0
  %v2531 = vadd.f32 0.0, %v2530
  %v2532 = vpop.f32.mrf.mxu0
  %v2533 = vpop.f32.mrf.mxu0
  %v2534 = vadd.f32 0.0, %v2533
  %v2535 = vpop.f32.mrf.mxu0
  %2536 = vmatprep.mubr.bf16.mxu0 0
  %2537 = vmatmul.mubr.bf16.gmra.mxu0 %v2462
  %v2538 = vpop.f32.mrf.mxu0
  %v2539 = vadd.f32 0.0, %v2538
  %v2540 = vpop.f32.mrf.mxu0
  %v2541 = vpop.f32.mrf.mxu0
  %v2542 = vadd.f32 0.0, %v2541
  %v2543 = vpop.f32.mrf.mxu0
  %2544 = vmatprep.mubr.bf16.mxu0 0
  %2545 = vmatmul.mubr.bf16.gmra.mxu0 %v2465
  %v2546 = vpop.f32.mrf.mxu0
  %v2547 = vadd.f32 0.0, %v2546
  %v2548 = vpop.f32.mrf.mxu0
  %v2549 = vpop.f32.mrf.mxu0
  %v2550 = vadd.f32 0.0, %v2549
  %v2551 = vpop.f32.mrf.mxu0
  %2552 = vmatprep.mubr.bf16.mxu0 0
  %2553 = vmatmul.mubr.bf16.gmra.mxu0 %v2468
  %v2554 = vpop.f32.mrf.mxu0
  %v2555 = vadd.f32 0.0, %v2554
  %v2556 = vpop.f32.mrf.mxu0
  %v2557 = vpop.f32.mrf.mxu0
  %v2558 = vadd.f32 0.0, %v2557
  %v2559 = vpop.f32.mrf.mxu0
  %2560 = vmatprep.mubr.bf16.mxu0 0
  %2561 = vmatmul.mubr.bf16.gmra.mxu0 %v2471
  %v2562 = vpop.f32.mrf.mxu0
  %v2563 = vadd.f32 0.0, %v2562
  %v2564 = vpop.f32.mrf.mxu0
  %v2565 = vpop.f32.mrf.mxu0
  %v2566 = vadd.f32 0.0, %v2565
  %v2567 = vpop.f32.mrf.mxu0
  %2568 = vmatprep.mubr.bf16.mxu0 0
  %2569 = vmatmul.mubr.bf16.gmra.mxu0 %v2474
  %v2570 = vpop.f32.mrf.mxu0
  %v2571 = vadd.f32 0.0, %v2570
  %v2572 = vpop.f32.mrf.mxu0
  %v2573 = vpop.f32.mrf.mxu0
  %v2574 = vadd.f32 0.0, %v2573
  %v2575 = vpop.f32.mrf.mxu0
  %2576 = vdwg.mxu0
  %v2577 = vpack.c.bf16 %v2515, %v2515
  %v2578 = vpack.c.bf16 %v2518, %v2518
  %v2579 = vpack.c.bf16 %v2523, %v2523
  %v2580 = vpack.c.bf16 %v2526, %v2526
  %v2581 = vpack.c.bf16 %v2531, %v2531
  %v2582 = vpack.c.bf16 %v2534, %v2534
  %v2583 = vpack.c.bf16 %v2539, %v2539
  %v2584 = vpack.c.bf16 %v2542, %v2542
  %v2585 = vpack.c.bf16 %v2547, %v2547
  %v2586 = vpack.c.bf16 %v2550, %v2550
  %v2587 = vpack.c.bf16 %v2555, %v2555
  %v2588 = vpack.c.bf16 %v2558, %v2558
  %v2589 = vpack.c.bf16 %v2563, %v2563
  %v2590 = vpack.c.bf16 %v2566, %v2566
  %v2591 = vpack.c.bf16 %v2571, %v2571
  %v2592 = vpack.c.bf16 %v2574, %v2574
  %2593 = vst.msk [vmem:[%s4] sm:$0xf] %vm599, %v2577
  %2594 = vst.msk [vmem:[%s4 + $0x4] sm:$0xf] %vm599, %v2578
  %2595 = vst.msk [vmem:[%s4 + $0x8] sm:$0xf] %vm599, %v2579
  %2596 = vst.msk [vmem:[%s4 + $0xc] sm:$0xf] %vm599, %v2580
  %2597 = vst.msk [vmem:[%s4 + $0x10] sm:$0xf] %vm599, %v2581
  %2598 = vst.msk [vmem:[%s4 + $0x14] sm:$0xf] %vm599, %v2582
  %2599 = vst.msk [vmem:[%s4 + $0x18] sm:$0xf] %vm599, %v2583
  %2600 = vst.msk [vmem:[%s4 + $0x1c] sm:$0xf] %vm599, %v2584
  %2601 = vst.msk [vmem:[%s4 + $0x20] sm:$0xf] %vm599, %v2585
  %2602 = vst.msk [vmem:[%s4 + $0x24] sm:$0xf] %vm599, %v2586
  %2603 = vst.msk [vmem:[%s4 + $0x28] sm:$0xf] %vm599, %v2587
  %2604 = vst.msk [vmem:[%s4 + $0x2c] sm:$0xf] %vm599, %v2588
  %2605 = vst.msk [vmem:[%s4 + $0x30] sm:$0xf] %vm599, %v2589
  %2606 = vst.msk [vmem:[%s4 + $0x34] sm:$0xf] %vm599, %v2590
  %2607 = vst.msk [vmem:[%s4 + $0x38] sm:$0xf] %vm599, %v2591
  %2608 = vst.msk [vmem:[%s4 + $0x3c] sm:$0xf] %vm599, %v2592
  %v2609 = vld [vmem:[%s5] sm:$0x1]
  %vm2610 = vcmask 64512
  %v2611 = vsel %vm2610, %v2515, 0.0
  %v2612 = vsel %vm2610, %v2518, 0.0
  %v2613 = vadd.f32 %v2611, %v2612
  %v2614 = vsel %vm2610, %v2523, 0.0
  %v2615 = vadd.f32 %v2613, %v2614
  %v2616 = vsel %vm2610, %v2526, 0.0
  %v2617 = vadd.f32 %v2615, %v2616
  %v2618 = vsel %vm2610, %v2531, 0.0
  %v2619 = vadd.f32 %v2617, %v2618
  %v2620 = vsel %vm2610, %v2534, 0.0
  %v2621 = vadd.f32 %v2619, %v2620
  %v2622 = vsel %vm2610, %v2539, 0.0
  %v2623 = vadd.f32 %v2621, %v2622
  %v2624 = vsel %vm2610, %v2542, 0.0
  %v2625 = vadd.f32 %v2623, %v2624
  %v2626 = vsel %vm2610, %v2547, 0.0
  %v2627 = vadd.f32 %v2625, %v2626
  %v2628 = vsel %vm2610, %v2550, 0.0
  %v2629 = vadd.f32 %v2627, %v2628
  %v2630 = vsel %vm2610, %v2555, 0.0
  %v2631 = vadd.f32 %v2629, %v2630
  %v2632 = vsel %vm2610, %v2558, 0.0
  %v2633 = vadd.f32 %v2631, %v2632
  %v2634 = vsel %vm2610, %v2563, 0.0
  %v2635 = vadd.f32 %v2633, %v2634
  %v2636 = vsel %vm2610, %v2566, 0.0
  %v2637 = vadd.f32 %v2635, %v2636
  %v2638 = vsel %vm2610, %v2571, 0.0
  %v2639 = vadd.f32 %v2637, %v2638
  %v2640 = vsel %vm2610, %v2574, 0.0
  %v2641 = vadd.f32 %v2639, %v2640
  %v2642 = vrot.slane %v2641, 4
  %v2643 = vadd.f32 %v2641, %v2642
  %v2644 = vrot.slane %v2643, 2
  %v2645 = vadd.f32 %v2643, %v2644
  %v2646 = vrot.slane %v2645, 1
  %v2647 = vadd.f32 %v2645, %v2646
  %v2648 = vadd.f32 %v2609, %v2647
  %vm2649 = vcmask 57344
  %2650 = vst.msk [vmem:[%s5] sm:$0x1] %vm2649, %v2648
  %v2651 = vld [vmem:[%s5 + $0x1] sm:$0x1]
  %v2652 = vmul.f32 %v2515, %v2515
  %v2653 = vmul.f32 %v2518, %v2518
  %v2654 = vmul.f32 %v2523, %v2523
  %v2655 = vmul.f32 %v2526, %v2526
  %v2656 = vmul.f32 %v2531, %v2531
  %v2657 = vmul.f32 %v2534, %v2534
  %v2658 = vmul.f32 %v2539, %v2539
  %v2659 = vmul.f32 %v2542, %v2542
  %v2660 = vmul.f32 %v2547, %v2547
  %v2661 = vmul.f32 %v2550, %v2550
  %v2662 = vmul.f32 %v2555, %v2555
  %v2663 = vmul.f32 %v2558, %v2558
  %v2664 = vmul.f32 %v2563, %v2563
  %v2665 = vmul.f32 %v2566, %v2566
  %v2666 = vmul.f32 %v2571, %v2571
  %v2667 = vmul.f32 %v2574, %v2574
  %v2668 = vsel %vm2610, %v2652, 0.0
  %v2669 = vsel %vm2610, %v2653, 0.0
  %v2670 = vadd.f32 %v2668, %v2669
  %v2671 = vsel %vm2610, %v2654, 0.0
  %v2672 = vadd.f32 %v2670, %v2671
  %v2673 = vsel %vm2610, %v2655, 0.0
  %v2674 = vadd.f32 %v2672, %v2673
  %v2675 = vsel %vm2610, %v2656, 0.0
  %v2676 = vadd.f32 %v2674, %v2675
  %v2677 = vsel %vm2610, %v2657, 0.0
  %v2678 = vadd.f32 %v2676, %v2677
  %v2679 = vsel %vm2610, %v2658, 0.0
  %v2680 = vadd.f32 %v2678, %v2679
  %v2681 = vsel %vm2610, %v2659, 0.0
  %v2682 = vadd.f32 %v2680, %v2681
  %v2683 = vsel %vm2610, %v2660, 0.0
  %v2684 = vadd.f32 %v2682, %v2683
  %v2685 = vsel %vm2610, %v2661, 0.0
  %v2686 = vadd.f32 %v2684, %v2685
  %v2687 = vsel %vm2610, %v2662, 0.0
  %v2688 = vadd.f32 %v2686, %v2687
  %v2689 = vsel %vm2610, %v2663, 0.0
  %v2690 = vadd.f32 %v2688, %v2689
  %v2691 = vsel %vm2610, %v2664, 0.0
  %v2692 = vadd.f32 %v2690, %v2691
  %v2693 = vsel %vm2610, %v2665, 0.0
  %v2694 = vadd.f32 %v2692, %v2693
  %v2695 = vsel %vm2610, %v2666, 0.0
  %v2696 = vadd.f32 %v2694, %v2695
  %v2697 = vsel %vm2610, %v2667, 0.0
  %v2698 = vadd.f32 %v2696, %v2697
  %v2699 = vrot.slane %v2698, 4
  %v2700 = vadd.f32 %v2698, %v2699
  %v2701 = vrot.slane %v2700, 2
  %v2702 = vadd.f32 %v2700, %v2701
  %v2703 = vrot.slane %v2702, 1
  %v2704 = vadd.f32 %v2702, %v2703
  %v2705 = vadd.f32 %v2651, %v2704
  %2706 = vst.msk [vmem:[%s5 + $0x1] sm:$0x1] %vm2649, %v2705
  // Predicated region
  $region22: #{_lambda_.4} parent=0 // pred_check
    _
  $region23: #{_lambda_.4} parent=0 // pred_check_branch
    %2708 = sbr.rel (0) target = $region25
  $region24: #{_lambda_.4} parent=0 // pred_region
    _
  $region25: #{_lambda_.4} parent=0 // pred_fallthru
    _
  // Predicated region
  $region26: #{_lambda_.4} parent=0 // pred_check
    _
  $region27: #{_lambda_.4} parent=0 // pred_check_branch
    %2710 = sbr.rel (0) target = $region29
  $region28: #{_lambda_.4} parent=0 // pred_region
    _
  $region29: #{_lambda_.4} parent=0 // pred_fallthru
    _
  // Predicated region
  $region30: #{_lambda_.4} parent=0 // pred_check
    _
  $region31: #{_lambda_.4} parent=0 // pred_check_branch
    %2712 = sbr.rel (0) target = $region33
  $region32: #{_lambda_.4} parent=0 // pred_region
    _
  $region33: #{_lambda_.4} parent=0 // pred_fallthru
    _
  // Predicated region
  $region34: #{_lambda_.4} parent=0 // pred_check
    _
  $region35: #{_lambda_.4} parent=0 // pred_check_branch
    %2714 = sbr.rel (0) target = $region37
  $region36: #{_lambda_.4} parent=0 // pred_region
    _
  $region37: #{_lambda_.4} parent=0 // pred_fallthru
    _

// kernel: _lambda_.3
$region0: #{_lambda_.3}
  #allocation0 [shape = 'u32[]', space=smem, size = 0x4, offset = 0x4, fixed_abs, tag = 'smem constant byte address 0x4 - core index']
  #allocation1 [shape = 'u32[144,128]{1,0:T(1,128)}', space=vmem, size = 0x12000, scoped, tag = 'internal scratch']
  #allocation2 [shape = 'bf16[2,10,10,4]{3,2,1,0:T(8,128)(2,1)}', space=vmem, size = 0x14000, scoped, tag = 'scratch operand']
  #allocation3 [shape = 'bf16[2,8,8,36]{3,2,1,0:T(8,128)(2,1)}', space=vmem, size = 0x8000, scoped, tag = 'scratch operand']
  %s0 = inlined_call_operand.vmem [shape: f32[2,16,16,4], index: 0, kind: input, shape index: {}]
  %s1 = inlined_call_operand.vmem [shape: bf16[36,8], index: 1, kind: input, shape index: {}]
  %s2 = inlined_call_operand.vmem [shape: bf16[2,8,8,8], index: 2, kind: output, shape index: {0}]
  %s3 = inlined_call_operand.vmem [shape: f32[2,8], index: 3, kind: output, shape index: {1}]
  %4 = xla_tuple %s2, %s3
  %s5 = sld [smem:[#allocation0]]
  $region30: #{_lambda_.3} parent=0
    _
  %s7 = ssub.s32 1, %s5
  %s8 = scalar_select 0, %s7, %s5
  // Predicated region
  $region2: #{_lambda_.3} parent=0 // pred_check
    _
  $region3: #{_lambda_.3} parent=0 // pred_check_branch
    %10 = sbr.rel (0) target = $region5
  $region4: #{_lambda_.3} parent=0 // pred_region
    _
  $region5: #{_lambda_.3} parent=0 // pred_fallthru
    _
  // Predicated region
  $region6: #{_lambda_.3} parent=0 // pred_check
    _
  $region7: #{_lambda_.3} parent=0 // pred_check_branch
    %12 = sbr.rel (0) target = $region9
  $region8: #{_lambda_.3} parent=0 // pred_region
    _
  $region9: #{_lambda_.3} parent=0 // pred_fallthru
    _
  %p14 = scmp.eq.s32.totalorder 0, 0
  // Predicated region
  $region10: #{_lambda_.3} parent=0 // pred_check
    %p15 = pneg %p14
  $region11: #{_lambda_.3} parent=0 // pred_check_branch
    %17 = sbr.rel (%p15) target = $region13
  $region12: #{_lambda_.3} parent=0 // pred_region
    %vm18 = vcmask 27648
    %19 = vst.msk [vmem:[#allocation2] sm:$0xf] %vm18, 0
    %vm20 = vcmask 24576
    %21 = vst.msk [vmem:[#allocation2 + $0x4] sm:$0x1] %vm20, 0
    %22 = vst.msk [vmem:[#allocation2 + $0x50] sm:$0xf] %vm18, 0
    %23 = vst.msk [vmem:[#allocation2 + $0x54] sm:$0x1] %vm20, 0
    %s24 = scalar_lea.vmem [#allocation2], 72
    %25 = vst.msk [vmem:[%s24] sm:$0xf] %vm18, 0
    %26 = vst.msk [vmem:[%s24 + $0x4] sm:$0x1] %vm20, 0
    %27 = vst.msk [vmem:[%s24 + $0x50] sm:$0xf] %vm18, 0
    %28 = vst.msk [vmem:[%s24 + $0x54] sm:$0x1] %vm20, 0
    %vm29 = vcmask 24576
    %vm30 = vsmask.f32 256
    %vm31 = vmand %vm29, %vm30
    %v32 = vld [vmem:[#allocation2] sm:$0x1]
    %v33 = vsel %vm31, 0, %v32
    %34 = vst [vmem:[#allocation2] sm:$0x1] %v33
    %v35 = vld [vmem:[#allocation2 + $0x8] sm:$0x1]
    %v36 = vsel %vm31, 0, %v35
    %37 = vst [vmem:[#allocation2 + $0x8] sm:$0x1] %v36
    %v38 = vld [vmem:[#allocation2 + $0x10] sm:$0x1]
    %v39 = vsel %vm31, 0, %v38
    %40 = vst [vmem:[#allocation2 + $0x10] sm:$0x1] %v39
    %v41 = vld [vmem:[#allocation2 + $0x18] sm:$0x1]
    %v42 = vsel %vm31, 0, %v41
    %43 = vst [vmem:[#allocation2 + $0x18] sm:$0x1] %v42
    %v44 = vld [vmem:[#allocation2 + $0x20] sm:$0x1]
    %v45 = vsel %vm31, 0, %v44
    %46 = vst [vmem:[#allocation2 + $0x20] sm:$0x1] %v45
    %v47 = vld [vmem:[#allocation2 + $0x28] sm:$0x1]
    %v48 = vsel %vm31, 0, %v47
    %49 = vst [vmem:[#allocation2 + $0x28] sm:$0x1] %v48
    %v50 = vld [vmem:[#allocation2 + $0x30] sm:$0x1]
    %v51 = vsel %vm31, 0, %v50
    %52 = vst [vmem:[#allocation2 + $0x30] sm:$0x1] %v51
    %v53 = vld [vmem:[#allocation2 + $0x38] sm:$0x1]
    %v54 = vsel %vm31, 0, %v53
    %55 = vst [vmem:[#allocation2 + $0x38] sm:$0x1] %v54
    %v56 = vld [vmem:[#allocation2 + $0x40] sm:$0x1]
    %v57 = vsel %vm31, 0, %v56
    %58 = vst [vmem:[#allocation2 + $0x40] sm:$0x1] %v57
    %v59 = vld [vmem:[#allocation2 + $0x48] sm:$0x1]
    %v60 = vsel %vm31, 0, %v59
    %61 = vst [vmem:[#allocation2 + $0x48] sm:$0x1] %v60
    %v62 = vld [vmem:[#allocation2 + $0x50] sm:$0x1]
    %v63 = vsel %vm31, 0, %v62
    %64 = vst [vmem:[#allocation2 + $0x50] sm:$0x1] %v63
    %v65 = vld [vmem:[#allocation2 + $0x58] sm:$0x1]
    %v66 = vsel %vm31, 0, %v65
    %67 = vst [vmem:[#allocation2 + $0x58] sm:$0x1] %v66
    %v68 = vld [vmem:[#allocation2 + $0x60] sm:$0x1]
    %v69 = vsel %vm31, 0, %v68
    %70 = vst [vmem:[#allocation2 + $0x60] sm:$0x1] %v69
    %v71 = vld [vmem:[#allocation2 + $0x68] sm:$0x1]
    %v72 = vsel %vm31, 0, %v71
    %73 = vst [vmem:[#allocation2 + $0x68] sm:$0x1] %v72
    %v74 = vld [vmem:[#allocation2 + $0x70] sm:$0x1]
    %v75 = vsel %vm31, 0, %v74
    %76 = vst [vmem:[#allocation2 + $0x70] sm:$0x1] %v75
    %v77 = vld [vmem:[#allocation2 + $0x78] sm:$0x1]
    %v78 = vsel %vm31, 0, %v77
    %79 = vst [vmem:[#allocation2 + $0x78] sm:$0x1] %v78
    %v80 = vld [vmem:[#allocation2 + $0x80] sm:$0x1]
    %v81 = vsel %vm31, 0, %v80
    %82 = vst [vmem:[#allocation2 + $0x80] sm:$0x1] %v81
    %v83 = vld [vmem:[#allocation2 + $0x88] sm:$0x1]
    %v84 = vsel %vm31, 0, %v83
    %85 = vst [vmem:[#allocation2 + $0x88] sm:$0x1] %v84
    %v86 = vld [vmem:[#allocation2 + $0x90] sm:$0x1]
    %v87 = vsel %vm31, 0, %v86
    %88 = vst [vmem:[#allocation2 + $0x90] sm:$0x1] %v87
    %v89 = vld [vmem:[#allocation2 + $0x98] sm:$0x1]
    %v90 = vsel %vm31, 0, %v89
    %91 = vst [vmem:[#allocation2 + $0x98] sm:$0x1] %v90
    %vm92 = vsmask.f32 7938
    %vm93 = vmand %vm29, %vm92
    %v94 = vld [vmem:[#allocation2 + $0x4] sm:$0x1]
    %v95 = vsel %vm93, 0, %v94
    %96 = vst [vmem:[#allocation2 + $0x4] sm:$0x1] %v95
    %v97 = vld [vmem:[#allocation2 + $0xc] sm:$0x1]
    %v98 = vsel %vm93, 0, %v97
    %99 = vst [vmem:[#allocation2 + $0xc] sm:$0x1] %v98
    %v100 = vld [vmem:[#allocation2 + $0x14] sm:$0x1]
    %v101 = vsel %vm93, 0, %v100
    %102 = vst [vmem:[#allocation2 + $0x14] sm:$0x1] %v101
    %v103 = vld [vmem:[#allocation2 + $0x1c] sm:$0x1]
    %v104 = vsel %vm93, 0, %v103
    %105 = vst [vmem:[#allocation2 + $0x1c] sm:$0x1] %v104
    %v106 = vld [vmem:[#allocation2 + $0x24] sm:$0x1]
    %v107 = vsel %vm93, 0, %v106
    %108 = vst [vmem:[#allocation2 + $0x24] sm:$0x1] %v107
    %v109 = vld [vmem:[#allocation2 + $0x2c] sm:$0x1]
    %v110 = vsel %vm93, 0, %v109
    %111 = vst [vmem:[#allocation2 + $0x2c] sm:$0x1] %v110
    %v112 = vld [vmem:[#allocation2 + $0x34] sm:$0x1]
    %v113 = vsel %vm93, 0, %v112
    %114 = vst [vmem:[#allocation2 + $0x34] sm:$0x1] %v113
    %v115 = vld [vmem:[#allocation2 + $0x3c] sm:$0x1]
    %v116 = vsel %vm93, 0, %v115
    %117 = vst [vmem:[#allocation2 + $0x3c] sm:$0x1] %v116
    %v118 = vld [vmem:[#allocation2 + $0x44] sm:$0x1]
    %v119 = vsel %vm93, 0, %v118
    %120 = vst [vmem:[#allocation2 + $0x44] sm:$0x1] %v119
    %v121 = vld [vmem:[#allocation2 + $0x4c] sm:$0x1]
    %v122 = vsel %vm93, 0, %v121
    %123 = vst [vmem:[#allocation2 + $0x4c] sm:$0x1] %v122
    %v124 = vld [vmem:[#allocation2 + $0x54] sm:$0x1]
    %v125 = vsel %vm93, 0, %v124
    %126 = vst [vmem:[#allocation2 + $0x54] sm:$0x1] %v125
    %v127 = vld [vmem:[#allocation2 + $0x5c] sm:$0x1]
    %v128 = vsel %vm93, 0, %v127
    %129 = vst [vmem:[#allocation2 + $0x5c] sm:$0x1] %v128
    %v130 = vld [vmem:[#allocation2 + $0x64] sm:$0x1]
    %v131 = vsel %vm93, 0, %v130
    %132 = vst [vmem:[#allocation2 + $0x64] sm:$0x1] %v131
    %v133 = vld [vmem:[#allocation2 + $0x6c] sm:$0x1]
    %v134 = vsel %vm93, 0, %v133
    %135 = vst [vmem:[#allocation2 + $0x6c] sm:$0x1] %v134
    %v136 = vld [vmem:[#allocation2 + $0x74] sm:$0x1]
    %v137 = vsel %vm93, 0, %v136
    %138 = vst [vmem:[#allocation2 + $0x74] sm:$0x1] %v137
    %v139 = vld [vmem:[#allocation2 + $0x7c] sm:$0x1]
    %v140 = vsel %vm93, 0, %v139
    %141 = vst [vmem:[#allocation2 + $0x7c] sm:$0x1] %v140
    %v142 = vld [vmem:[#allocation2 + $0x84] sm:$0x1]
    %v143 = vsel %vm93, 0, %v142
    %144 = vst [vmem:[#allocation2 + $0x84] sm:$0x1] %v143
    %v145 = vld [vmem:[#allocation2 + $0x8c] sm:$0x1]
    %v146 = vsel %vm93, 0, %v145
    %147 = vst [vmem:[#allocation2 + $0x8c] sm:$0x1] %v146
    %v148 = vld [vmem:[#allocation2 + $0x94] sm:$0x1]
    %v149 = vsel %vm93, 0, %v148
    %150 = vst [vmem:[#allocation2 + $0x94] sm:$0x1] %v149
    %v151 = vld [vmem:[#allocation2 + $0x9c] sm:$0x1]
    %v152 = vsel %vm93, 0, %v151
    %153 = vst [vmem:[#allocation2 + $0x9c] sm:$0x1] %v152
    %vm154 = vcmask 58368
    %155 = vst.msk [vmem:[%s3] sm:$0x3] %vm154, 0.0
  $region13: #{_lambda_.3} parent=0 // pred_fallthru
    _
  %v156 = vld [vmem:[%s0] ss:$2 sm:$0xff]
  %s157 = scalar_lea.vmem %s0, 32
  %v158 = vld [vmem:[%s157] ss:$2 sm:$0xff]
  %s159 = scalar_lea.vmem %s0, 64
  %v160 = vld [vmem:[%s159] ss:$2 sm:$0xff]
  %s161 = scalar_lea.vmem %s0, 96
  %v162 = vld [vmem:[%s161] ss:$2 sm:$0xff]
  %s163 = scalar_lea.vmem %s0, 128
  %v164 = vld [vmem:[%s163] ss:$2 sm:$0xff]
  %s165 = scalar_lea.vmem %s0, 160
  %v166 = vld [vmem:[%s165] ss:$2 sm:$0xff]
  %s167 = scalar_lea.vmem %s0, 192
  %v168 = vld [vmem:[%s167] ss:$2 sm:$0xff]
  %s169 = scalar_lea.vmem %s0, 224
  %v170 = vld [vmem:[%s169] ss:$2 sm:$0xff]
  %s171 = scalar_lea.vmem %s0, 256
  %v172 = vld [vmem:[%s171] ss:$2 sm:$0xff]
  %s173 = scalar_lea.vmem %s0, 288
  %v174 = vld [vmem:[%s173] ss:$2 sm:$0xff]
  %s175 = scalar_lea.vmem %s0, 320
  %v176 = vld [vmem:[%s175] ss:$2 sm:$0xff]
  %s177 = scalar_lea.vmem %s0, 352
  %v178 = vld [vmem:[%s177] ss:$2 sm:$0xff]
  %s179 = scalar_lea.vmem %s0, 384
  %v180 = vld [vmem:[%s179] ss:$2 sm:$0xff]
  %s181 = scalar_lea.vmem %s0, 416
  %v182 = vld [vmem:[%s181] ss:$2 sm:$0xff]
  %s183 = scalar_lea.vmem %s0, 448
  %v184 = vld [vmem:[%s183] ss:$2 sm:$0xff]
  %s185 = scalar_lea.vmem %s0, 480
  %v186 = vld [vmem:[%s185] ss:$2 sm:$0xff]
  %s187 = scalar_lea.vmem %s0, 1
  %v188 = vld [vmem:[%s187] ss:$2 sm:$0xff]
  %s189 = scalar_lea.vmem %s0, 33
  %v190 = vld [vmem:[%s189] ss:$2 sm:$0xff]
  %s191 = scalar_lea.vmem %s0, 65
  %v192 = vld [vmem:[%s191] ss:$2 sm:$0xff]
  %s193 = scalar_lea.vmem %s0, 97
  %v194 = vld [vmem:[%s193] ss:$2 sm:$0xff]
  %s195 = scalar_lea.vmem %s0, 129
  %v196 = vld [vmem:[%s195] ss:$2 sm:$0xff]
  %s197 = scalar_lea.vmem %s0, 161
  %v198 = vld [vmem:[%s197] ss:$2 sm:$0xff]
  %s199 = scalar_lea.vmem %s0, 193
  %v200 = vld [vmem:[%s199] ss:$2 sm:$0xff]
  %s201 = scalar_lea.vmem %s0, 225
  %v202 = vld [vmem:[%s201] ss:$2 sm:$0xff]
  %s203 = scalar_lea.vmem %s0, 257
  %v204 = vld [vmem:[%s203] ss:$2 sm:$0xff]
  %s205 = scalar_lea.vmem %s0, 289
  %v206 = vld [vmem:[%s205] ss:$2 sm:$0xff]
  %s207 = scalar_lea.vmem %s0, 321
  %v208 = vld [vmem:[%s207] ss:$2 sm:$0xff]
  %s209 = scalar_lea.vmem %s0, 353
  %v210 = vld [vmem:[%s209] ss:$2 sm:$0xff]
  %s211 = scalar_lea.vmem %s0, 385
  %v212 = vld [vmem:[%s211] ss:$2 sm:$0xff]
  %s213 = scalar_lea.vmem %s0, 417
  %v214 = vld [vmem:[%s213] ss:$2 sm:$0xff]
  %s215 = scalar_lea.vmem %s0, 449
  %v216 = vld [vmem:[%s215] ss:$2 sm:$0xff]
  %s217 = scalar_lea.vmem %s0, 481
  %v218 = vld [vmem:[%s217] ss:$2 sm:$0xff]
  %s219 = scalar_lea.vmem %s0, 16
  %v220 = vld [vmem:[%s219] ss:$2 sm:$0xff]
  %s221 = scalar_lea.vmem %s219, 32
  %v222 = vld [vmem:[%s221] ss:$2 sm:$0xff]
  %s223 = scalar_lea.vmem %s219, 64
  %v224 = vld [vmem:[%s223] ss:$2 sm:$0xff]
  %s225 = scalar_lea.vmem %s219, 96
  %v226 = vld [vmem:[%s225] ss:$2 sm:$0xff]
  %s227 = scalar_lea.vmem %s219, 128
  %v228 = vld [vmem:[%s227] ss:$2 sm:$0xff]
  %s229 = scalar_lea.vmem %s219, 160
  %v230 = vld [vmem:[%s229] ss:$2 sm:$0xff]
  %s231 = scalar_lea.vmem %s219, 192
  %v232 = vld [vmem:[%s231] ss:$2 sm:$0xff]
  %s233 = scalar_lea.vmem %s219, 224
  %v234 = vld [vmem:[%s233] ss:$2 sm:$0xff]
  %s235 = scalar_lea.vmem %s219, 256
  %v236 = vld [vmem:[%s235] ss:$2 sm:$0xff]
  %s237 = scalar_lea.vmem %s219, 288
  %v238 = vld [vmem:[%s237] ss:$2 sm:$0xff]
  %s239 = scalar_lea.vmem %s219, 320
  %v240 = vld [vmem:[%s239] ss:$2 sm:$0xff]
  %s241 = scalar_lea.vmem %s219, 352
  %v242 = vld [vmem:[%s241] ss:$2 sm:$0xff]
  %s243 = scalar_lea.vmem %s219, 384
  %v244 = vld [vmem:[%s243] ss:$2 sm:$0xff]
  %s245 = scalar_lea.vmem %s219, 416
  %v246 = vld [vmem:[%s245] ss:$2 sm:$0xff]
  %s247 = scalar_lea.vmem %s219, 448
  %v248 = vld [vmem:[%s247] ss:$2 sm:$0xff]
  %s249 = scalar_lea.vmem %s219, 480
  %v250 = vld [vmem:[%s249] ss:$2 sm:$0xff]
  %s251 = scalar_lea.vmem %s219, 1
  %v252 = vld [vmem:[%s251] ss:$2 sm:$0xff]
  %s253 = scalar_lea.vmem %s219, 33
  %v254 = vld [vmem:[%s253] ss:$2 sm:$0xff]
  %s255 = scalar_lea.vmem %s219, 65
  %v256 = vld [vmem:[%s255] ss:$2 sm:$0xff]
  %s257 = scalar_lea.vmem %s219, 97
  %v258 = vld [vmem:[%s257] ss:$2 sm:$0xff]
  %s259 = scalar_lea.vmem %s219, 129
  %v260 = vld [vmem:[%s259] ss:$2 sm:$0xff]
  %s261 = scalar_lea.vmem %s219, 161
  %v262 = vld [vmem:[%s261] ss:$2 sm:$0xff]
  %s263 = scalar_lea.vmem %s219, 193
  %v264 = vld [vmem:[%s263] ss:$2 sm:$0xff]
  %s265 = scalar_lea.vmem %s219, 225
  %v266 = vld [vmem:[%s265] ss:$2 sm:$0xff]
  %s267 = scalar_lea.vmem %s219, 257
  %v268 = vld [vmem:[%s267] ss:$2 sm:$0xff]
  %s269 = scalar_lea.vmem %s219, 289
  %v270 = vld [vmem:[%s269] ss:$2 sm:$0xff]
  %s271 = scalar_lea.vmem %s219, 321
  %v272 = vld [vmem:[%s271] ss:$2 sm:$0xff]
  %s273 = scalar_lea.vmem %s219, 353
  %v274 = vld [vmem:[%s273] ss:$2 sm:$0xff]
  %s275 = scalar_lea.vmem %s219, 385
  %v276 = vld [vmem:[%s275] ss:$2 sm:$0xff]
  %s277 = scalar_lea.vmem %s219, 417
  %v278 = vld [vmem:[%s277] ss:$2 sm:$0xff]
  %s279 = scalar_lea.vmem %s219, 449
  %v280 = vld [vmem:[%s279] ss:$2 sm:$0xff]
  %s281 = scalar_lea.vmem %s219, 481
  %v282 = vld [vmem:[%s281] ss:$2 sm:$0xff]
  %v283 = vmax.f32 %v156, %v188
  %v284 = vmax.f32 %v158, %v190
  %v285 = vmax.f32 %v160, %v192
  %v286 = vmax.f32 %v162, %v194
  %v287 = vmax.f32 %v164, %v196
  %v288 = vmax.f32 %v166, %v198
  %v289 = vmax.f32 %v168, %v200
  %v290 = vmax.f32 %v170, %v202
  %v291 = vmax.f32 %v172, %v204
  %v292 = vmax.f32 %v174, %v206
  %v293 = vmax.f32 %v176, %v208
  %v294 = vmax.f32 %v178, %v210
  %v295 = vmax.f32 %v180, %v212
  %v296 = vmax.f32 %v182, %v214
  %v297 = vmax.f32 %v184, %v216
  %v298 = vmax.f32 %v186, %v218
  %v299 = vmax.f32 %v220, %v252
  %v300 = vmax.f32 %v222, %v254
  %v301 = vmax.f32 %v224, %v256
  %v302 = vmax.f32 %v226, %v258
  %v303 = vmax.f32 %v228, %v260
  %v304 = vmax.f32 %v230, %v262
  %v305 = vmax.f32 %v232, %v264
  %v306 = vmax.f32 %v234, %v266
  %v307 = vmax.f32 %v236, %v268
  %v308 = vmax.f32 %v238, %v270
  %v309 = vmax.f32 %v240, %v272
  %v310 = vmax.f32 %v242, %v274
  %v311 = vmax.f32 %v244, %v276
  %v312 = vmax.f32 %v246, %v278
  %v313 = vmax.f32 %v248, %v280
  %v314 = vmax.f32 %v250, %v282
  %v315 = vmax.f32 %v283, %v299
  %v316 = vmax.f32 %v284, %v300
  %v317 = vmax.f32 %v285, %v301
  %v318 = vmax.f32 %v286, %v302
  %v319 = vmax.f32 %v287, %v303
  %v320 = vmax.f32 %v288, %v304
  %v321 = vmax.f32 %v289, %v305
  %v322 = vmax.f32 %v290, %v306
  %v323 = vmax.f32 %v291, %v307
  %v324 = vmax.f32 %v292, %v308
  %v325 = vmax.f32 %v293, %v309
  %v326 = vmax.f32 %v294, %v310
  %v327 = vmax.f32 %v295, %v311
  %v328 = vmax.f32 %v296, %v312
  %v329 = vmax.f32 %v297, %v313
  %v330 = vmax.f32 %v298, %v314
  %v331 = vpack.c.bf16 %v315, %v315
  %v332 = vpack.c.bf16 %v316, %v316
  %v333 = vpack.c.bf16 %v317, %v317
  %v334 = vpack.c.bf16 %v318, %v318
  %v335 = vpack.c.bf16 %v319, %v319
  %v336 = vpack.c.bf16 %v320, %v320
  %v337 = vpack.c.bf16 %v321, %v321
  %v338 = vpack.c.bf16 %v322, %v322
  %v339 = vpack.c.bf16 %v323, %v323
  %v340 = vpack.c.bf16 %v324, %v324
  %v341 = vpack.c.bf16 %v325, %v325
  %v342 = vpack.c.bf16 %v326, %v326
  %v343 = vpack.c.bf16 %v327, %v327
  %v344 = vpack.c.bf16 %v328, %v328
  %v345 = vpack.c.bf16 %v329, %v329
  %v346 = vpack.c.bf16 %v330, %v330
  %v363 = vunpack.c.l.b16 %v331
  %v364 = vunpack.c.l.b16 %v332
  %v365 = vunpack.c.l.b16 %v333
  %v366 = vunpack.c.l.b16 %v334
  %v367 = vunpack.c.l.b16 %v335
  %v368 = vunpack.c.l.b16 %v336
  %v369 = vunpack.c.l.b16 %v337
  %v370 = vunpack.c.l.b16 %v338
  %v371 = vunpack.c.l.b16 %v339
  %v372 = vunpack.c.l.b16 %v340
  %v373 = vunpack.c.l.b16 %v341
  %v374 = vunpack.c.l.b16 %v342
  %v375 = vunpack.c.l.b16 %v343
  %v376 = vunpack.c.l.b16 %v344
  %v377 = vunpack.c.l.b16 %v345
  %v378 = vunpack.c.l.b16 %v346
  %v379 = vpack.c.b16 %v363, %v363
  %v380 = vpack.c.b16 %v364, %v364
  %v381 = vpack.c.b16 %v365, %v365
  %v382 = vpack.c.b16 %v366, %v366
  %v383 = vpack.c.b16 %v367, %v367
  %v384 = vpack.c.b16 %v368, %v368
  %v385 = vpack.c.b16 %v369, %v369
  %v386 = vpack.c.b16 %v370, %v370
  %v387 = vpack.c.b16 %v371, %v371
  %v388 = vpack.c.b16 %v372, %v372
  %v389 = vpack.c.b16 %v373, %v373
  %v390 = vpack.c.b16 %v374, %v374
  %v391 = vpack.c.b16 %v375, %v375
  %v392 = vpack.c.b16 %v376, %v376
  %v393 = vpack.c.b16 %v377, %v377
  %v394 = vpack.c.b16 %v378, %v378
  %v396 = vshrl.u32 %v379, 16
  %v398 = vrot.slane %v396, 7
  %v399 = vshll.u32 %v379, 16
  %v401 = vor.u32 %v398, %v399
  %v402 = vrot.slane %v398, 4
  %v404 = vshrl.u32 %v380, 16
  %v406 = vrot.slane %v404, 7
  %v407 = vshll.u32 %v380, 16
  %v409 = vor.u32 %v406, %v407
  %v410 = vrot.slane %v406, 4
  %v412 = vshrl.u32 %v381, 16
  %v414 = vrot.slane %v412, 7
  %v415 = vshll.u32 %v381, 16
  %v417 = vor.u32 %v414, %v415
  %v418 = vrot.slane %v414, 4
  %v420 = vshrl.u32 %v382, 16
  %v422 = vrot.slane %v420, 7
  %v423 = vshll.u32 %v382, 16
  %v425 = vor.u32 %v422, %v423
  %v426 = vrot.slane %v422, 4
  %v428 = vshrl.u32 %v383, 16
  %v430 = vrot.slane %v428, 7
  %v431 = vshll.u32 %v383, 16
  %v433 = vor.u32 %v430, %v431
  %v434 = vrot.slane %v430, 4
  %v436 = vshrl.u32 %v384, 16
  %v438 = vrot.slane %v436, 7
  %v439 = vshll.u32 %v384, 16
  %v441 = vor.u32 %v438, %v439
  %v442 = vrot.slane %v438, 4
  %v444 = vshrl.u32 %v385, 16
  %v446 = vrot.slane %v444, 7
  %v447 = vshll.u32 %v385, 16
  %v449 = vor.u32 %v446, %v447
  %v450 = vrot.slane %v446, 4
  %v452 = vshrl.u32 %v386, 16
  %v454 = vrot.slane %v452, 7
  %v455 = vshll.u32 %v386, 16
  %v457 = vor.u32 %v454, %v455
  %v458 = vrot.slane %v454, 4
  %v460 = vshrl.u32 %v387, 16
  %v462 = vrot.slane %v460, 7
  %v463 = vshll.u32 %v387, 16
  %v465 = vor.u32 %v462, %v463
  %v466 = vrot.slane %v462, 4
  %v468 = vshrl.u32 %v388, 16
  %v470 = vrot.slane %v468, 7
  %v471 = vshll.u32 %v388, 16
  %v473 = vor.u32 %v470, %v471
  %v474 = vrot.slane %v470, 4
  %v476 = vshrl.u32 %v389, 16
  %v478 = vrot.slane %v476, 7
  %v479 = vshll.u32 %v389, 16
  %v481 = vor.u32 %v478, %v479
  %v482 = vrot.slane %v478, 4
  %v484 = vshrl.u32 %v390, 16
  %v486 = vrot.slane %v484, 7
  %v487 = vshll.u32 %v390, 16
  %v489 = vor.u32 %v486, %v487
  %v490 = vrot.slane %v486, 4
  %v492 = vshrl.u32 %v391, 16
  %v494 = vrot.slane %v492, 7
  %v495 = vshll.u32 %v391, 16
  %v497 = vor.u32 %v494, %v495
  %v498 = vrot.slane %v494, 4
  %v500 = vshrl.u32 %v392, 16
  %v502 = vrot.slane %v500, 7
  %v503 = vshll.u32 %v392, 16
  %v505 = vor.u32 %v502, %v503
  %v506 = vrot.slane %v502, 4
  %v508 = vshrl.u32 %v393, 16
  %v510 = vrot.slane %v508, 7
  %v511 = vshll.u32 %v393, 16
  %v513 = vor.u32 %v510, %v511
  %v514 = vrot.slane %v510, 4
  %v516 = vshrl.u32 %v394, 16
  %v518 = vrot.slane %v516, 7
  %v519 = vshll.u32 %v394, 16
  %v521 = vor.u32 %v518, %v519
  %v522 = vrot.slane %v518, 4
  %s555 = scalar_lea.vmem [#allocation2], 8
  %vm556 = vcmask 27648
  %vm557 = vsmask.f32 7938
  %vm558 = vmand %vm556, %vm557
  %v559 = vld [vmem:[%s555] sm:$0xf]
  %v560 = vsel %vm558, %v401, %v559
  %561 = vst [vmem:[%s555] sm:$0xf] %v560
  %vm562 = vcmask 24576
  %vm563 = vsmask.f32 256
  %vm564 = vmand %vm562, %vm563
  %v565 = vld [vmem:[%s555 + $0x4] sm:$0x1]
  %v566 = vsel %vm564, %v402, %v565
  %567 = vst [vmem:[%s555 + $0x4] sm:$0x1] %v566
  %v568 = vld [vmem:[%s555 + $0x8] sm:$0xf]
  %v569 = vsel %vm558, %v409, %v568
  %570 = vst [vmem:[%s555 + $0x8] sm:$0xf] %v569
  %v571 = vld [vmem:[%s555 + $0xc] sm:$0x1]
  %v572 = vsel %vm564, %v410, %v571
  %573 = vst [vmem:[%s555 + $0xc] sm:$0x1] %v572
  %v574 = vld [vmem:[%s555 + $0x10] sm:$0xf]
  %v575 = vsel %vm558, %v417, %v574
  %576 = vst [vmem:[%s555 + $0x10] sm:$0xf] %v575
  %v577 = vld [vmem:[%s555 + $0x14] sm:$0x1]
  %v578 = vsel %vm564, %v418, %v577
  %579 = vst [vmem:[%s555 + $0x14] sm:$0x1] %v578
  %v580 = vld [vmem:[%s555 + $0x18] sm:$0xf]
  %v581 = vsel %vm558, %v425, %v580
  %582 = vst [vmem:[%s555 + $0x18] sm:$0xf] %v581
  %v583 = vld [vmem:[%s555 + $0x1c] sm:$0x1]
  %v584 = vsel %vm564, %v426, %v583
  %585 = vst [vmem:[%s555 + $0x1c] sm:$0x1] %v584
  %v586 = vld [vmem:[%s555 + $0x20] sm:$0xf]
  %v587 = vsel %vm558, %v433, %v586
  %588 = vst [vmem:[%s555 + $0x20] sm:$0xf] %v587
  %v589 = vld [vmem:[%s555 + $0x24] sm:$0x1]
  %v590 = vsel %vm564, %v434, %v589
  %591 = vst [vmem:[%s555 + $0x24] sm:$0x1] %v590
  %v592 = vld [vmem:[%s555 + $0x28] sm:$0xf]
  %v593 = vsel %vm558, %v441, %v592
  %594 = vst [vmem:[%s555 + $0x28] sm:$0xf] %v593
  %v595 = vld [vmem:[%s555 + $0x2c] sm:$0x1]
  %v596 = vsel %vm564, %v442, %v595
  %597 = vst [vmem:[%s555 + $0x2c] sm:$0x1] %v596
  %v598 = vld [vmem:[%s555 + $0x30] sm:$0xf]
  %v599 = vsel %vm558, %v449, %v598
  %600 = vst [vmem:[%s555 + $0x30] sm:$0xf] %v599
  %v601 = vld [vmem:[%s555 + $0x34] sm:$0x1]
  %v602 = vsel %vm564, %v450, %v601
  %603 = vst [vmem:[%s555 + $0x34] sm:$0x1] %v602
  %v604 = vld [vmem:[%s555 + $0x38] sm:$0xf]
  %v605 = vsel %vm558, %v457, %v604
  %606 = vst [vmem:[%s555 + $0x38] sm:$0xf] %v605
  %v607 = vld [vmem:[%s555 + $0x3c] sm:$0x1]
  %v608 = vsel %vm564, %v458, %v607
  %609 = vst [vmem:[%s555 + $0x3c] sm:$0x1] %v608
  %v610 = vld [vmem:[%s555 + $0x50] sm:$0xf]
  %v611 = vsel %vm558, %v465, %v610
  %612 = vst [vmem:[%s555 + $0x50] sm:$0xf] %v611
  %v613 = vld [vmem:[%s555 + $0x54] sm:$0x1]
  %v614 = vsel %vm564, %v466, %v613
  %615 = vst [vmem:[%s555 + $0x54] sm:$0x1] %v614
  %v616 = vld [vmem:[%s555 + $0x58] sm:$0xf]
  %v617 = vsel %vm558, %v473, %v616
  %618 = vst [vmem:[%s555 + $0x58] sm:$0xf] %v617
  %v619 = vld [vmem:[%s555 + $0x5c] sm:$0x1]
  %v620 = vsel %vm564, %v474, %v619
  %621 = vst [vmem:[%s555 + $0x5c] sm:$0x1] %v620
  %v622 = vld [vmem:[%s555 + $0x60] sm:$0xf]
  %v623 = vsel %vm558, %v481, %v622
  %624 = vst [vmem:[%s555 + $0x60] sm:$0xf] %v623
  %v625 = vld [vmem:[%s555 + $0x64] sm:$0x1]
  %v626 = vsel %vm564, %v482, %v625
  %627 = vst [vmem:[%s555 + $0x64] sm:$0x1] %v626
  %v628 = vld [vmem:[%s555 + $0x68] sm:$0xf]
  %v629 = vsel %vm558, %v489, %v628
  %630 = vst [vmem:[%s555 + $0x68] sm:$0xf] %v629
  %v631 = vld [vmem:[%s555 + $0x6c] sm:$0x1]
  %v632 = vsel %vm564, %v490, %v631
  %633 = vst [vmem:[%s555 + $0x6c] sm:$0x1] %v632
  %v634 = vld [vmem:[%s555 + $0x70] sm:$0xf]
  %v635 = vsel %vm558, %v497, %v634
  %636 = vst [vmem:[%s555 + $0x70] sm:$0xf] %v635
  %v637 = vld [vmem:[%s555 + $0x74] sm:$0x1]
  %v638 = vsel %vm564, %v498, %v637
  %639 = vst [vmem:[%s555 + $0x74] sm:$0x1] %v638
  %v640 = vld [vmem:[%s555 + $0x78] sm:$0xf]
  %v641 = vsel %vm558, %v505, %v640
  %642 = vst [vmem:[%s555 + $0x78] sm:$0xf] %v641
  %v643 = vld [vmem:[%s555 + $0x7c] sm:$0x1]
  %v644 = vsel %vm564, %v506, %v643
  %645 = vst [vmem:[%s555 + $0x7c] sm:$0x1] %v644
  %v646 = vld [vmem:[%s555 + $0x80] sm:$0xf]
  %v647 = vsel %vm558, %v513, %v646
  %648 = vst [vmem:[%s555 + $0x80] sm:$0xf] %v647
  %v649 = vld [vmem:[%s555 + $0x84] sm:$0x1]
  %v650 = vsel %vm564, %v514, %v649
  %651 = vst [vmem:[%s555 + $0x84] sm:$0x1] %v650
  %v652 = vld [vmem:[%s555 + $0x88] sm:$0xf]
  %v653 = vsel %vm558, %v521, %v652
  %654 = vst [vmem:[%s555 + $0x88] sm:$0xf] %v653
  %v655 = vld [vmem:[%s555 + $0x8c] sm:$0x1]
  %v656 = vsel %vm564, %v522, %v655
  %657 = vst [vmem:[%s555 + $0x8c] sm:$0x1] %v656
  %v658 = vld [vmem:[#allocation2] sm:$0xf]
  %v659 = vld [vmem:[#allocation2 + $0x8] sm:$0xf]
  %v660 = vld [vmem:[#allocation2 + $0x10] sm:$0xf]
  %v661 = vld [vmem:[#allocation2 + $0x18] sm:$0xf]
  %v662 = vld [vmem:[#allocation2 + $0x20] sm:$0xf]
  %v663 = vld [vmem:[#allocation2 + $0x28] sm:$0xf]
  %v664 = vld [vmem:[#allocation2 + $0x30] sm:$0xf]
  %v665 = vld [vmem:[#allocation2 + $0x38] sm:$0xf]
  %v666 = vld [vmem:[#allocation2 + $0x50] sm:$0xf]
  %v667 = vld [vmem:[#allocation2 + $0x58] sm:$0xf]
  %v668 = vld [vmem:[#allocation2 + $0x60] sm:$0xf]
  %v669 = vld [vmem:[#allocation2 + $0x68] sm:$0xf]
  %v670 = vld [vmem:[#allocation2 + $0x70] sm:$0xf]
  %v671 = vld [vmem:[#allocation2 + $0x78] sm:$0xf]
  %v672 = vld [vmem:[#allocation2 + $0x80] sm:$0xf]
  %v673 = vld [vmem:[#allocation2 + $0x88] sm:$0xf]
  %vm674 = vcmask 27648
  %675 = vst.msk [vmem:[#allocation3] sm:$0xf] %vm674, %v658
  %676 = vst.msk [vmem:[#allocation3 + $0x4] sm:$0xf] %vm674, %v659
  %677 = vst.msk [vmem:[#allocation3 + $0x8] sm:$0xf] %vm674, %v660
  %678 = vst.msk [vmem:[#allocation3 + $0xc] sm:$0xf] %vm674, %v661
  %679 = vst.msk [vmem:[#allocation3 + $0x10] sm:$0xf] %vm674, %v662
  %680 = vst.msk [vmem:[#allocation3 + $0x14] sm:$0xf] %vm674, %v663
  %681 = vst.msk [vmem:[#allocation3 + $0x18] sm:$0xf] %vm674, %v664
  %682 = vst.msk [vmem:[#allocation3 + $0x1c] sm:$0xf] %vm674, %v665
  %683 = vst.msk [vmem:[#allocation3 + $0x20] sm:$0xf] %vm674, %v666
  %684 = vst.msk [vmem:[#allocation3 + $0x24] sm:$0xf] %vm674, %v667
  %685 = vst.msk [vmem:[#allocation3 + $0x28] sm:$0xf] %vm674, %v668
  %686 = vst.msk [vmem:[#allocation3 + $0x2c] sm:$0xf] %vm674, %v669
  %687 = vst.msk [vmem:[#allocation3 + $0x30] sm:$0xf] %vm674, %v670
  %688 = vst.msk [vmem:[#allocation3 + $0x34] sm:$0xf] %vm674, %v671
  %689 = vst.msk [vmem:[#allocation3 + $0x38] sm:$0xf] %vm674, %v672
  %690 = vst.msk [vmem:[#allocation3 + $0x3c] sm:$0xf] %vm674, %v673
  %v691 = vld [vmem:[#allocation2] sm:$0xf]
  %v692 = vld [vmem:[#allocation2 + $0x4] sm:$0x1]
  %v693 = vld [vmem:[#allocation2 + $0x8] sm:$0xf]
  %v694 = vld [vmem:[#allocation2 + $0xc] sm:$0x1]
  %v695 = vld [vmem:[#allocation2 + $0x10] sm:$0xf]
  %v696 = vld [vmem:[#allocation2 + $0x14] sm:$0x1]
  %v697 = vld [vmem:[#allocation2 + $0x18] sm:$0xf]
  %v698 = vld [vmem:[#allocation2 + $0x1c] sm:$0x1]
  %v699 = vld [vmem:[#allocation2 + $0x20] sm:$0xf]
  %v700 = vld [vmem:[#allocation2 + $0x24] sm:$0x1]
  %v701 = vld [vmem:[#allocation2 + $0x28] sm:$0xf]
  %v702 = vld [vmem:[#allocation2 + $0x2c] sm:$0x1]
  %v703 = vld [vmem:[#allocation2 + $0x30] sm:$0xf]
  %v704 = vld [vmem:[#allocation2 + $0x34] sm:$0x1]
  %v705 = vld [vmem:[#allocation2 + $0x38] sm:$0xf]
  %v706 = vld [vmem:[#allocation2 + $0x3c] sm:$0x1]
  %v707 = vld [vmem:[#allocation2 + $0x50] sm:$0xf]
  %v708 = vld [vmem:[#allocation2 + $0x54] sm:$0x1]
  %v709 = vld [vmem:[#allocation2 + $0x58] sm:$0xf]
  %v710 = vld [vmem:[#allocation2 + $0x5c] sm:$0x1]
  %v711 = vld [vmem:[#allocation2 + $0x60] sm:$0xf]
  %v712 = vld [vmem:[#allocation2 + $0x64] sm:$0x1]
  %v713 = vld [vmem:[#allocation2 + $0x68] sm:$0xf]
  %v714 = vld [vmem:[#allocation2 + $0x6c] sm:$0x1]
  %v715 = vld [vmem:[#allocation2 + $0x70] sm:$0xf]
  %v716 = vld [vmem:[#allocation2 + $0x74] sm:$0x1]
  %v717 = vld [vmem:[#allocation2 + $0x78] sm:$0xf]
  %v718 = vld [vmem:[#allocation2 + $0x7c] sm:$0x1]
  %v719 = vld [vmem:[#allocation2 + $0x80] sm:$0xf]
  %v720 = vld [vmem:[#allocation2 + $0x84] sm:$0x1]
  %v721 = vld [vmem:[#allocation2 + $0x88] sm:$0xf]
  %v722 = vld [vmem:[#allocation2 + $0x8c] sm:$0x1]
  %vm723 = vsmask.f32 3328
  %vm724 = vsmask.f32 7440
  %vm725 = vmor %vm723, %vm724
  %v727 = vshrl.u32 %v691, 16
  %v729 = vrot.slane %v727, 4
  %v730 = vshll.u32 %v691, 16
  %v732 = vrot.slane %v730, 5
  %v733 = vor.u32 %v729, %v732
  %v734 = vrot.slane %v733, 4
  %v736 = vshll.u32 %v692, 16
  %v738 = vrot.slane %v736, 5
  %v739 = vsel %vm725, %v734, %v738
  %v741 = vshrl.u32 %v693, 16
  %v743 = vrot.slane %v741, 4
  %v744 = vshll.u32 %v693, 16
  %v746 = vrot.slane %v744, 5
  %v747 = vor.u32 %v743, %v746
  %v748 = vrot.slane %v747, 4
  %v750 = vshll.u32 %v694, 16
  %v752 = vrot.slane %v750, 5
  %v753 = vsel %vm725, %v748, %v752
  %v755 = vshrl.u32 %v695, 16
  %v757 = vrot.slane %v755, 4
  %v758 = vshll.u32 %v695, 16
  %v760 = vrot.slane %v758, 5
  %v761 = vor.u32 %v757, %v760
  %v762 = vrot.slane %v761, 4
  %v764 = vshll.u32 %v696, 16
  %v766 = vrot.slane %v764, 5
  %v767 = vsel %vm725, %v762, %v766
  %v769 = vshrl.u32 %v697, 16
  %v771 = vrot.slane %v769, 4
  %v772 = vshll.u32 %v697, 16
  %v774 = vrot.slane %v772, 5
  %v775 = vor.u32 %v771, %v774
  %v776 = vrot.slane %v775, 4
  %v778 = vshll.u32 %v698, 16
  %v780 = vrot.slane %v778, 5
  %v781 = vsel %vm725, %v776, %v780
  %v783 = vshrl.u32 %v699, 16
  %v785 = vrot.slane %v783, 4
  %v786 = vshll.u32 %v699, 16
  %v788 = vrot.slane %v786, 5
  %v789 = vor.u32 %v785, %v788
  %v790 = vrot.slane %v789, 4
  %v792 = vshll.u32 %v700, 16
  %v794 = vrot.slane %v792, 5
  %v795 = vsel %vm725, %v790, %v794
  %v797 = vshrl.u32 %v701, 16
  %v799 = vrot.slane %v797, 4
  %v800 = vshll.u32 %v701, 16
  %v802 = vrot.slane %v800, 5
  %v803 = vor.u32 %v799, %v802
  %v804 = vrot.slane %v803, 4
  %v806 = vshll.u32 %v702, 16
  %v808 = vrot.slane %v806, 5
  %v809 = vsel %vm725, %v804, %v808
  %v811 = vshrl.u32 %v703, 16
  %v813 = vrot.slane %v811, 4
  %v814 = vshll.u32 %v703, 16
  %v816 = vrot.slane %v814, 5
  %v817 = vor.u32 %v813, %v816
  %v818 = vrot.slane %v817, 4
  %v820 = vshll.u32 %v704, 16
  %v822 = vrot.slane %v820, 5
  %v823 = vsel %vm725, %v818, %v822
  %v825 = vshrl.u32 %v705, 16
  %v827 = vrot.slane %v825, 4
  %v828 = vshll.u32 %v705, 16
  %v830 = vrot.slane %v828, 5
  %v831 = vor.u32 %v827, %v830
  %v832 = vrot.slane %v831, 4
  %v834 = vshll.u32 %v706, 16
  %v836 = vrot.slane %v834, 5
  %v837 = vsel %vm725, %v832, %v836
  %v839 = vshrl.u32 %v707, 16
  %v841 = vrot.slane %v839, 4
  %v842 = vshll.u32 %v707, 16
  %v844 = vrot.slane %v842, 5
  %v845 = vor.u32 %v841, %v844
  %v846 = vrot.slane %v845, 4
  %v848 = vshll.u32 %v708, 16
  %v850 = vrot.slane %v848, 5
  %v851 = vsel %vm725, %v846, %v850
  %v853 = vshrl.u32 %v709, 16
  %v855 = vrot.slane %v853, 4
  %v856 = vshll.u32 %v709, 16
  %v858 = vrot.slane %v856, 5
  %v859 = vor.u32 %v855, %v858
  %v860 = vrot.slane %v859, 4
  %v862 = vshll.u32 %v710, 16
  %v864 = vrot.slane %v862, 5
  %v865 = vsel %vm725, %v860, %v864
  %v867 = vshrl.u32 %v711, 16
  %v869 = vrot.slane %v867, 4
  %v870 = vshll.u32 %v711, 16
  %v872 = vrot.slane %v870, 5
  %v873 = vor.u32 %v869, %v872
  %v874 = vrot.slane %v873, 4
  %v876 = vshll.u32 %v712, 16
  %v878 = vrot.slane %v876, 5
  %v879 = vsel %vm725, %v874, %v878
  %v881 = vshrl.u32 %v713, 16
  %v883 = vrot.slane %v881, 4
  %v884 = vshll.u32 %v713, 16
  %v886 = vrot.slane %v884, 5
  %v887 = vor.u32 %v883, %v886
  %v888 = vrot.slane %v887, 4
  %v890 = vshll.u32 %v714, 16
  %v892 = vrot.slane %v890, 5
  %v893 = vsel %vm725, %v888, %v892
  %v895 = vshrl.u32 %v715, 16
  %v897 = vrot.slane %v895, 4
  %v898 = vshll.u32 %v715, 16
  %v900 = vrot.slane %v898, 5
  %v901 = vor.u32 %v897, %v900
  %v902 = vrot.slane %v901, 4
  %v904 = vshll.u32 %v716, 16
  %v906 = vrot.slane %v904, 5
  %v907 = vsel %vm725, %v902, %v906
  %v909 = vshrl.u32 %v717, 16
  %v911 = vrot.slane %v909, 4
  %v912 = vshll.u32 %v717, 16
  %v914 = vrot.slane %v912, 5
  %v915 = vor.u32 %v911, %v914
  %v916 = vrot.slane %v915, 4
  %v918 = vshll.u32 %v718, 16
  %v920 = vrot.slane %v918, 5
  %v921 = vsel %vm725, %v916, %v920
  %v923 = vshrl.u32 %v719, 16
  %v925 = vrot.slane %v923, 4
  %v926 = vshll.u32 %v719, 16
  %v928 = vrot.slane %v926, 5
  %v929 = vor.u32 %v925, %v928
  %v930 = vrot.slane %v929, 4
  %v932 = vshll.u32 %v720, 16
  %v934 = vrot.slane %v932, 5
  %v935 = vsel %vm725, %v930, %v934
  %v937 = vshrl.u32 %v721, 16
  %v939 = vrot.slane %v937, 4
  %v940 = vshll.u32 %v721, 16
  %v942 = vrot.slane %v940, 5
  %v943 = vor.u32 %v939, %v942
  %v944 = vrot.slane %v943, 4
  %v946 = vshll.u32 %v722, 16
  %v948 = vrot.slane %v946, 5
  %v949 = vsel %vm725, %v944, %v948
  %950 = vrot.lane.b32.xlu0 %v739, 4
  %v951 = vpop.permute.xlu0 %950
  %952 = vrot.lane.b32.xlu0 %v753, 4
  %v953 = vpop.permute.xlu0 %952
  %954 = vrot.lane.b32.xlu0 %v767, 4
  %v955 = vpop.permute.xlu0 %954
  %956 = vrot.lane.b32.xlu0 %v781, 4
  %v957 = vpop.permute.xlu0 %956
  %958 = vrot.lane.b32.xlu0 %v795, 4
  %v959 = vpop.permute.xlu0 %958
  %960 = vrot.lane.b32.xlu0 %v809, 4
  %v961 = vpop.permute.xlu0 %960
  %962 = vrot.lane.b32.xlu0 %v823, 4
  %v963 = vpop.permute.xlu0 %962
  %964 = vrot.lane.b32.xlu0 %v837, 4
  %v965 = vpop.permute.xlu0 %964
  %966 = vrot.lane.b32.xlu0 %v851, 4
  %v967 = vpop.permute.xlu0 %966
  %968 = vrot.lane.b32.xlu0 %v865, 4
  %v969 = vpop.permute.xlu0 %968
  %970 = vrot.lane.b32.xlu0 %v879, 4
  %v971 = vpop.permute.xlu0 %970
  %972 = vrot.lane.b32.xlu0 %v893, 4
  %v973 = vpop.permute.xlu0 %972
  %974 = vrot.lane.b32.xlu0 %v907, 4
  %v975 = vpop.permute.xlu0 %974
  %976 = vrot.lane.b32.xlu0 %v921, 4
  %v977 = vpop.permute.xlu0 %976
  %978 = vrot.lane.b32.xlu0 %v935, 4
  %v979 = vpop.permute.xlu0 %978
  %980 = vrot.lane.b32.xlu0 %v949, 4
  %v981 = vpop.permute.xlu0 %980
  %vm998 = vcmask 60448
  %999 = vst.msk [vmem:[#allocation3] sm:$0xf] %vm998, %v951
  %1000 = vst.msk [vmem:[#allocation3 + $0x4] sm:$0xf] %vm998, %v953
  %1001 = vst.msk [vmem:[#allocation3 + $0x8] sm:$0xf] %vm998, %v955
  %1002 = vst.msk [vmem:[#allocation3 + $0xc] sm:$0xf] %vm998, %v957
  %1003 = vst.msk [vmem:[#allocation3 + $0x10] sm:$0xf] %vm998, %v959
  %1004 = vst.msk [vmem:[#allocation3 + $0x14] sm:$0xf] %vm998, %v961
  %1005 = vst.msk [vmem:[#allocation3 + $0x18] sm:$0xf] %vm998, %v963
  %1006 = vst.msk [vmem:[#allocation3 + $0x1c] sm:$0xf] %vm998, %v965
  %1007 = vst.msk [vmem:[#allocation3 + $0x20] sm:$0xf] %vm998, %v967
  %1008 = vst.msk [vmem:[#allocation3 + $0x24] sm:$0xf] %vm998, %v969
  %1009 = vst.msk [vmem:[#allocation3 + $0x28] sm:$0xf] %vm998, %v971
  %1010 = vst.msk [vmem:[#allocation3 + $0x2c] sm:$0xf] %vm998, %v973
  %1011 = vst.msk [vmem:[#allocation3 + $0x30] sm:$0xf] %vm998, %v975
  %1012 = vst.msk [vmem:[#allocation3 + $0x34] sm:$0xf] %vm998, %v977
  %1013 = vst.msk [vmem:[#allocation3 + $0x38] sm:$0xf] %vm998, %v979
  %1014 = vst.msk [vmem:[#allocation3 + $0x3c] sm:$0xf] %vm998, %v981
  %v1015 = vld [vmem:[#allocation2] sm:$0xe]
  %v1016 = vld [vmem:[#allocation2 + $0x4] sm:$0x1]
  %v1017 = vld [vmem:[#allocation2 + $0x8] sm:$0xe]
  %v1018 = vld [vmem:[#allocation2 + $0xc] sm:$0x1]
  %v1019 = vld [vmem:[#allocation2 + $0x10] sm:$0xe]
  %v1020 = vld [vmem:[#allocation2 + $0x14] sm:$0x1]
  %v1021 = vld [vmem:[#allocation2 + $0x18] sm:$0xe]
  %v1022 = vld [vmem:[#allocation2 + $0x1c] sm:$0x1]
  %v1023 = vld [vmem:[#allocation2 + $0x20] sm:$0xe]
  %v1024 = vld [vmem:[#allocation2 + $0x24] sm:$0x1]
  %v1025 = vld [vmem:[#allocation2 + $0x28] sm:$0xe]
  %v1026 = vld [vmem:[#allocation2 + $0x2c] sm:$0x1]
  %v1027 = vld [vmem:[#allocation2 + $0x30] sm:$0xe]
  %v1028 = vld [vmem:[#allocation2 + $0x34] sm:$0x1]
  %v1029 = vld [vmem:[#allocation2 + $0x38] sm:$0xe]
  %v1030 = vld [vmem:[#allocation2 + $0x3c] sm:$0x1]
  %v1031 = vld [vmem:[#allocation2 + $0x50] sm:$0xe]
  %v1032 = vld [vmem:[#allocation2 + $0x54] sm:$0x1]
  %v1033 = vld [vmem:[#allocation2 + $0x58] sm:$0xe]
  %v1034 = vld [vmem:[#allocation2 + $0x5c] sm:$0x1]
  %v1035 = vld [vmem:[#allocation2 + $0x60] sm:$0xe]
  %v1036 = vld [vmem:[#allocation2 + $0x64] sm:$0x1]
  %v1037 = vld [vmem:[#allocation2 + $0x68] sm:$0xe]
  %v1038 = vld [vmem:[#allocation2 + $0x6c] sm:$0x1]
  %v1039 = vld [vmem:[#allocation2 + $0x70] sm:$0xe]
  %v1040 = vld [vmem:[#allocation2 + $0x74] sm:$0x1]
  %v1041 = vld [vmem:[#allocation2 + $0x78] sm:$0xe]
  %v1042 = vld [vmem:[#allocation2 + $0x7c] sm:$0x1]
  %v1043 = vld [vmem:[#allocation2 + $0x80] sm:$0xe]
  %v1044 = vld [vmem:[#allocation2 + $0x84] sm:$0x1]
  %v1045 = vld [vmem:[#allocation2 + $0x88] sm:$0xe]
  %v1046 = vld [vmem:[#allocation2 + $0x8c] sm:$0x1]
  %vm1079 = vcmask 1042432
  %vm1080 = vcmask 1046532
  %vm1081 = vmor %vm1079, %vm1080
  %v1082 = vrot.slane %v1015, 5
  %v1083 = vrot.slane %v1082, 4
  %v1084 = vrot.slane %v1016, 5
  %v1085 = vsel %vm1081, %v1083, %v1084
  %v1086 = vrot.slane %v1017, 5
  %v1087 = vrot.slane %v1086, 4
  %v1088 = vrot.slane %v1018, 5
  %v1089 = vsel %vm1081, %v1087, %v1088
  %v1090 = vrot.slane %v1019, 5
  %v1091 = vrot.slane %v1090, 4
  %v1092 = vrot.slane %v1020, 5
  %v1093 = vsel %vm1081, %v1091, %v1092
  %v1094 = vrot.slane %v1021, 5
  %v1095 = vrot.slane %v1094, 4
  %v1096 = vrot.slane %v1022, 5
  %v1097 = vsel %vm1081, %v1095, %v1096
  %v1098 = vrot.slane %v1023, 5
  %v1099 = vrot.slane %v1098, 4
  %v1100 = vrot.slane %v1024, 5
  %v1101 = vsel %vm1081, %v1099, %v1100
  %v1102 = vrot.slane %v1025, 5
  %v1103 = vrot.slane %v1102, 4
  %v1104 = vrot.slane %v1026, 5
  %v1105 = vsel %vm1081, %v1103, %v1104
  %v1106 = vrot.slane %v1027, 5
  %v1107 = vrot.slane %v1106, 4
  %v1108 = vrot.slane %v1028, 5
  %v1109 = vsel %vm1081, %v1107, %v1108
  %v1110 = vrot.slane %v1029, 5
  %v1111 = vrot.slane %v1110, 4
  %v1112 = vrot.slane %v1030, 5
  %v1113 = vsel %vm1081, %v1111, %v1112
  %v1114 = vrot.slane %v1031, 5
  %v1115 = vrot.slane %v1114, 4
  %v1116 = vrot.slane %v1032, 5
  %v1117 = vsel %vm1081, %v1115, %v1116
  %v1118 = vrot.slane %v1033, 5
  %v1119 = vrot.slane %v1118, 4
  %v1120 = vrot.slane %v1034, 5
  %v1121 = vsel %vm1081, %v1119, %v1120
  %v1122 = vrot.slane %v1035, 5
  %v1123 = vrot.slane %v1122, 4
  %v1124 = vrot.slane %v1036, 5
  %v1125 = vsel %vm1081, %v1123, %v1124
  %v1126 = vrot.slane %v1037, 5
  %v1127 = vrot.slane %v1126, 4
  %v1128 = vrot.slane %v1038, 5
  %v1129 = vsel %vm1081, %v1127, %v1128
  %v1130 = vrot.slane %v1039, 5
  %v1131 = vrot.slane %v1130, 4
  %v1132 = vrot.slane %v1040, 5
  %v1133 = vsel %vm1081, %v1131, %v1132
  %v1134 = vrot.slane %v1041, 5
  %v1135 = vrot.slane %v1134, 4
  %v1136 = vrot.slane %v1042, 5
  %v1137 = vsel %vm1081, %v1135, %v1136
  %v1138 = vrot.slane %v1043, 5
  %v1139 = vrot.slane %v1138, 4
  %v1140 = vrot.slane %v1044, 5
  %v1141 = vsel %vm1081, %v1139, %v1140
  %v1142 = vrot.slane %v1045, 5
  %v1143 = vrot.slane %v1142, 4
  %v1144 = vrot.slane %v1046, 5
  %v1145 = vsel %vm1081, %v1143, %v1144
  %1146 = vrot.lane.b32.xlu0 %v1085, 8
  %v1147 = vpop.permute.xlu0 %1146
  %1148 = vrot.lane.b32.xlu0 %v1089, 8
  %v1149 = vpop.permute.xlu0 %1148
  %1150 = vrot.lane.b32.xlu0 %v1093, 8
  %v1151 = vpop.permute.xlu0 %1150
  %1152 = vrot.lane.b32.xlu0 %v1097, 8
  %v1153 = vpop.permute.xlu0 %1152
  %1154 = vrot.lane.b32.xlu0 %v1101, 8
  %v1155 = vpop.permute.xlu0 %1154
  %1156 = vrot.lane.b32.xlu0 %v1105, 8
  %v1157 = vpop.permute.xlu0 %1156
  %1158 = vrot.lane.b32.xlu0 %v1109, 8
  %v1159 = vpop.permute.xlu0 %1158
  %1160 = vrot.lane.b32.xlu0 %v1113, 8
  %v1161 = vpop.permute.xlu0 %1160
  %1162 = vrot.lane.b32.xlu0 %v1117, 8
  %v1163 = vpop.permute.xlu0 %1162
  %1164 = vrot.lane.b32.xlu0 %v1121, 8
  %v1165 = vpop.permute.xlu0 %1164
  %1166 = vrot.lane.b32.xlu0 %v1125, 8
  %v1167 = vpop.permute.xlu0 %1166
  %1168 = vrot.lane.b32.xlu0 %v1129, 8
  %v1169 = vpop.permute.xlu0 %1168
  %1170 = vrot.lane.b32.xlu0 %v1133, 8
  %v1171 = vpop.permute.xlu0 %1170
  %1172 = vrot.lane.b32.xlu0 %v1137, 8
  %v1173 = vpop.permute.xlu0 %1172
  %1174 = vrot.lane.b32.xlu0 %v1141, 8
  %v1175 = vpop.permute.xlu0 %1174
  %1176 = vrot.lane.b32.xlu0 %v1145, 8
  %v1177 = vpop.permute.xlu0 %1176
  %vm1194 = vcmask 93248
  %1195 = vst.msk [vmem:[#allocation3] sm:$0xf] %vm1194, %v1147
  %1196 = vst.msk [vmem:[#allocation3 + $0x4] sm:$0xf] %vm1194, %v1149
  %1197 = vst.msk [vmem:[#allocation3 + $0x8] sm:$0xf] %vm1194, %v1151
  %1198 = vst.msk [vmem:[#allocation3 + $0xc] sm:$0xf] %vm1194, %v1153
  %1199 = vst.msk [vmem:[#allocation3 + $0x10] sm:$0xf] %vm1194, %v1155
  %1200 = vst.msk [vmem:[#allocation3 + $0x14] sm:$0xf] %vm1194, %v1157
  %1201 = vst.msk [vmem:[#allocation3 + $0x18] sm:$0xf] %vm1194, %v1159
  %1202 = vst.msk [vmem:[#allocation3 + $0x1c] sm:$0xf] %vm1194, %v1161
  %1203 = vst.msk [vmem:[#allocation3 + $0x20] sm:$0xf] %vm1194, %v1163
  %1204 = vst.msk [vmem:[#allocation3 + $0x24] sm:$0xf] %vm1194, %v1165
  %1205 = vst.msk [vmem:[#allocation3 + $0x28] sm:$0xf] %vm1194, %v1167
  %1206 = vst.msk [vmem:[#allocation3 + $0x2c] sm:$0xf] %vm1194, %v1169
  %1207 = vst.msk [vmem:[#allocation3 + $0x30] sm:$0xf] %vm1194, %v1171
  %1208 = vst.msk [vmem:[#allocation3 + $0x34] sm:$0xf] %vm1194, %v1173
  %1209 = vst.msk [vmem:[#allocation3 + $0x38] sm:$0xf] %vm1194, %v1175
  %1210 = vst.msk [vmem:[#allocation3 + $0x3c] sm:$0xf] %vm1194, %v1177
  %v1211 = vld [vmem:[%s555] sm:$0xf]
  %v1212 = vld [vmem:[%s555 + $0x8] sm:$0xf]
  %v1213 = vld [vmem:[%s555 + $0x10] sm:$0xf]
  %v1214 = vld [vmem:[%s555 + $0x18] sm:$0xf]
  %v1215 = vld [vmem:[%s555 + $0x20] sm:$0xf]
  %v1216 = vld [vmem:[%s555 + $0x28] sm:$0xf]
  %v1217 = vld [vmem:[%s555 + $0x30] sm:$0xf]
  %v1218 = vld [vmem:[%s555 + $0x38] sm:$0xf]
  %v1219 = vld [vmem:[%s555 + $0x50] sm:$0xf]
  %v1220 = vld [vmem:[%s555 + $0x58] sm:$0xf]
  %v1221 = vld [vmem:[%s555 + $0x60] sm:$0xf]
  %v1222 = vld [vmem:[%s555 + $0x68] sm:$0xf]
  %v1223 = vld [vmem:[%s555 + $0x70] sm:$0xf]
  %v1224 = vld [vmem:[%s555 + $0x78] sm:$0xf]
  %v1225 = vld [vmem:[%s555 + $0x80] sm:$0xf]
  %v1226 = vld [vmem:[%s555 + $0x88] sm:$0xf]
  %1243 = vrot.lane.b32.xlu0 %v1211, 12
  %v1244 = vpop.permute.xlu0 %1243
  %1245 = vrot.lane.b32.xlu0 %v1212, 12
  %v1246 = vpop.permute.xlu0 %1245
  %1247 = vrot.lane.b32.xlu0 %v1213, 12
  %v1248 = vpop.permute.xlu0 %1247
  %1249 = vrot.lane.b32.xlu0 %v1214, 12
  %v1250 = vpop.permute.xlu0 %1249
  %1251 = vrot.lane.b32.xlu0 %v1215, 12
  %v1252 = vpop.permute.xlu0 %1251
  %1253 = vrot.lane.b32.xlu0 %v1216, 12
  %v1254 = vpop.permute.xlu0 %1253
  %1255 = vrot.lane.b32.xlu0 %v1217, 12
  %v1256 = vpop.permute.xlu0 %1255
  %1257 = vrot.lane.b32.xlu0 %v1218, 12
  %v1258 = vpop.permute.xlu0 %1257
  %1259 = vrot.lane.b32.xlu0 %v1219, 12
  %v1260 = vpop.permute.xlu0 %1259
  %1261 = vrot.lane.b32.xlu0 %v1220, 12
  %v1262 = vpop.permute.xlu0 %1261
  %1263 = vrot.lane.b32.xlu0 %v1221, 12
  %v1264 = vpop.permute.xlu0 %1263
  %1265 = vrot.lane.b32.xlu0 %v1222, 12
  %v1266 = vpop.permute.xlu0 %1265
  %1267 = vrot.lane.b32.xlu0 %v1223, 12
  %v1268 = vpop.permute.xlu0 %1267
  %1269 = vrot.lane.b32.xlu0 %v1224, 12
  %v1270 = vpop.permute.xlu0 %1269
  %1271 = vrot.lane.b32.xlu0 %v1225, 12
  %v1272 = vpop.permute.xlu0 %1271
  %1273 = vrot.lane.b32.xlu0 %v1226, 12
  %v1274 = vpop.permute.xlu0 %1273
  %vm1291 = vcmask 126048
  %1292 = vst.msk [vmem:[#allocation3] sm:$0xf] %vm1291, %v1244
  %1293 = vst.msk [vmem:[#allocation3 + $0x4] sm:$0xf] %vm1291, %v1246
  %1294 = vst.msk [vmem:[#allocation3 + $0x8] sm:$0xf] %vm1291, %v1248
  %1295 = vst.msk [vmem:[#allocation3 + $0xc] sm:$0xf] %vm1291, %v1250
  %1296 = vst.msk [vmem:[#allocation3 + $0x10] sm:$0xf] %vm1291, %v1252
  %1297 = vst.msk [vmem:[#allocation3 + $0x14] sm:$0xf] %vm1291, %v1254
  %1298 = vst.msk [vmem:[#allocation3 + $0x18] sm:$0xf] %vm1291, %v1256
  %1299 = vst.msk [vmem:[#allocation3 + $0x1c] sm:$0xf] %vm1291, %v1258
  %1300 = vst.msk [vmem:[#allocation3 + $0x20] sm:$0xf] %vm1291, %v1260
  %1301 = vst.msk [vmem:[#allocation3 + $0x24] sm:$0xf] %vm1291, %v1262
  %1302 = vst.msk [vmem:[#allocation3 + $0x28] sm:$0xf] %vm1291, %v1264
  %1303 = vst.msk [vmem:[#allocation3 + $0x2c] sm:$0xf] %vm1291, %v1266
  %1304 = vst.msk [vmem:[#allocation3 + $0x30] sm:$0xf] %vm1291, %v1268
  %1305 = vst.msk [vmem:[#allocation3 + $0x34] sm:$0xf] %vm1291, %v1270
  %1306 = vst.msk [vmem:[#allocation3 + $0x38] sm:$0xf] %vm1291, %v1272
  %1307 = vst.msk [vmem:[#allocation3 + $0x3c] sm:$0xf] %vm1291, %v1274
  %v1308 = vld [vmem:[%s555] sm:$0xf]
  %v1309 = vld [vmem:[%s555 + $0x4] sm:$0x1]
  %v1310 = vld [vmem:[%s555 + $0x8] sm:$0xf]
  %v1311 = vld [vmem:[%s555 + $0xc] sm:$0x1]
  %v1312 = vld [vmem:[%s555 + $0x10] sm:$0xf]
  %v1313 = vld [vmem:[%s555 + $0x14] sm:$0x1]
  %v1314 = vld [vmem:[%s555 + $0x18] sm:$0xf]
  %v1315 = vld [vmem:[%s555 + $0x1c] sm:$0x1]
  %v1316 = vld [vmem:[%s555 + $0x20] sm:$0xf]
  %v1317 = vld [vmem:[%s555 + $0x24] sm:$0x1]
  %v1318 = vld [vmem:[%s555 + $0x28] sm:$0xf]
  %v1319 = vld [vmem:[%s555 + $0x2c] sm:$0x1]
  %v1320 = vld [vmem:[%s555 + $0x30] sm:$0xf]
  %v1321 = vld [vmem:[%s555 + $0x34] sm:$0x1]
  %v1322 = vld [vmem:[%s555 + $0x38] sm:$0xf]
  %v1323 = vld [vmem:[%s555 + $0x3c] sm:$0x1]
  %v1324 = vld [vmem:[%s555 + $0x50] sm:$0xf]
  %v1325 = vld [vmem:[%s555 + $0x54] sm:$0x1]
  %v1326 = vld [vmem:[%s555 + $0x58] sm:$0xf]
  %v1327 = vld [vmem:[%s555 + $0x5c] sm:$0x1]
  %v1328 = vld [vmem:[%s555 + $0x60] sm:$0xf]
  %v1329 = vld [vmem:[%s555 + $0x64] sm:$0x1]
  %v1330 = vld [vmem:[%s555 + $0x68] sm:$0xf]
  %v1331 = vld [vmem:[%s555 + $0x6c] sm:$0x1]
  %v1332 = vld [vmem:[%s555 + $0x70] sm:$0xf]
  %v1333 = vld [vmem:[%s555 + $0x74] sm:$0x1]
  %v1334 = vld [vmem:[%s555 + $0x78] sm:$0xf]
  %v1335 = vld [vmem:[%s555 + $0x7c] sm:$0x1]
  %v1336 = vld [vmem:[%s555 + $0x80] sm:$0xf]
  %v1337 = vld [vmem:[%s555 + $0x84] sm:$0x1]
  %v1338 = vld [vmem:[%s555 + $0x88] sm:$0xf]
  %v1339 = vld [vmem:[%s555 + $0x8c] sm:$0x1]
  %v1341 = vshrl.u32 %v1308, 16
  %v1343 = vrot.slane %v1341, 4
  %v1344 = vshll.u32 %v1308, 16
  %v1346 = vrot.slane %v1344, 5
  %v1347 = vor.u32 %v1343, %v1346
  %v1348 = vrot.slane %v1347, 4
  %v1350 = vshll.u32 %v1309, 16
  %v1352 = vrot.slane %v1350, 5
  %v1353 = vsel %vm725, %v1348, %v1352
  %v1355 = vshrl.u32 %v1310, 16
  %v1357 = vrot.slane %v1355, 4
  %v1358 = vshll.u32 %v1310, 16
  %v1360 = vrot.slane %v1358, 5
  %v1361 = vor.u32 %v1357, %v1360
  %v1362 = vrot.slane %v1361, 4
  %v1364 = vshll.u32 %v1311, 16
  %v1366 = vrot.slane %v1364, 5
  %v1367 = vsel %vm725, %v1362, %v1366
  %v1369 = vshrl.u32 %v1312, 16
  %v1371 = vrot.slane %v1369, 4
  %v1372 = vshll.u32 %v1312, 16
  %v1374 = vrot.slane %v1372, 5
  %v1375 = vor.u32 %v1371, %v1374
  %v1376 = vrot.slane %v1375, 4
  %v1378 = vshll.u32 %v1313, 16
  %v1380 = vrot.slane %v1378, 5
  %v1381 = vsel %vm725, %v1376, %v1380
  %v1383 = vshrl.u32 %v1314, 16
  %v1385 = vrot.slane %v1383, 4
  %v1386 = vshll.u32 %v1314, 16
  %v1388 = vrot.slane %v1386, 5
  %v1389 = vor.u32 %v1385, %v1388
  %v1390 = vrot.slane %v1389, 4
  %v1392 = vshll.u32 %v1315, 16
  %v1394 = vrot.slane %v1392, 5
  %v1395 = vsel %vm725, %v1390, %v1394
  %v1397 = vshrl.u32 %v1316, 16
  %v1399 = vrot.slane %v1397, 4
  %v1400 = vshll.u32 %v1316, 16
  %v1402 = vrot.slane %v1400, 5
  %v1403 = vor.u32 %v1399, %v1402
  %v1404 = vrot.slane %v1403, 4
  %v1406 = vshll.u32 %v1317, 16
  %v1408 = vrot.slane %v1406, 5
  %v1409 = vsel %vm725, %v1404, %v1408
  %v1411 = vshrl.u32 %v1318, 16
  %v1413 = vrot.slane %v1411, 4
  %v1414 = vshll.u32 %v1318, 16
  %v1416 = vrot.slane %v1414, 5
  %v1417 = vor.u32 %v1413, %v1416
  %v1418 = vrot.slane %v1417, 4
  %v1420 = vshll.u32 %v1319, 16
  %v1422 = vrot.slane %v1420, 5
  %v1423 = vsel %vm725, %v1418, %v1422
  %v1425 = vshrl.u32 %v1320, 16
  %v1427 = vrot.slane %v1425, 4
  %v1428 = vshll.u32 %v1320, 16
  %v1430 = vrot.slane %v1428, 5
  %v1431 = vor.u32 %v1427, %v1430
  %v1432 = vrot.slane %v1431, 4
  %v1434 = vshll.u32 %v1321, 16
  %v1436 = vrot.slane %v1434, 5
  %v1437 = vsel %vm725, %v1432, %v1436
  %v1439 = vshrl.u32 %v1322, 16
  %v1441 = vrot.slane %v1439, 4
  %v1442 = vshll.u32 %v1322, 16
  %v1444 = vrot.slane %v1442, 5
  %v1445 = vor.u32 %v1441, %v1444
  %v1446 = vrot.slane %v1445, 4
  %v1448 = vshll.u32 %v1323, 16
  %v1450 = vrot.slane %v1448, 5
  %v1451 = vsel %vm725, %v1446, %v1450
  %v1453 = vshrl.u32 %v1324, 16
  %v1455 = vrot.slane %v1453, 4
  %v1456 = vshll.u32 %v1324, 16
  %v1458 = vrot.slane %v1456, 5
  %v1459 = vor.u32 %v1455, %v1458
  %v1460 = vrot.slane %v1459, 4
  %v1462 = vshll.u32 %v1325, 16
  %v1464 = vrot.slane %v1462, 5
  %v1465 = vsel %vm725, %v1460, %v1464
  %v1467 = vshrl.u32 %v1326, 16
  %v1469 = vrot.slane %v1467, 4
  %v1470 = vshll.u32 %v1326, 16
  %v1472 = vrot.slane %v1470, 5
  %v1473 = vor.u32 %v1469, %v1472
  %v1474 = vrot.slane %v1473, 4
  %v1476 = vshll.u32 %v1327, 16
  %v1478 = vrot.slane %v1476, 5
  %v1479 = vsel %vm725, %v1474, %v1478
  %v1481 = vshrl.u32 %v1328, 16
  %v1483 = vrot.slane %v1481, 4
  %v1484 = vshll.u32 %v1328, 16
  %v1486 = vrot.slane %v1484, 5
  %v1487 = vor.u32 %v1483, %v1486
  %v1488 = vrot.slane %v1487, 4
  %v1490 = vshll.u32 %v1329, 16
  %v1492 = vrot.slane %v1490, 5
  %v1493 = vsel %vm725, %v1488, %v1492
  %v1495 = vshrl.u32 %v1330, 16
  %v1497 = vrot.slane %v1495, 4
  %v1498 = vshll.u32 %v1330, 16
  %v1500 = vrot.slane %v1498, 5
  %v1501 = vor.u32 %v1497, %v1500
  %v1502 = vrot.slane %v1501, 4
  %v1504 = vshll.u32 %v1331, 16
  %v1506 = vrot.slane %v1504, 5
  %v1507 = vsel %vm725, %v1502, %v1506
  %v1509 = vshrl.u32 %v1332, 16
  %v1511 = vrot.slane %v1509, 4
  %v1512 = vshll.u32 %v1332, 16
  %v1514 = vrot.slane %v1512, 5
  %v1515 = vor.u32 %v1511, %v1514
  %v1516 = vrot.slane %v1515, 4
  %v1518 = vshll.u32 %v1333, 16
  %v1520 = vrot.slane %v1518, 5
  %v1521 = vsel %vm725, %v1516, %v1520
  %v1523 = vshrl.u32 %v1334, 16
  %v1525 = vrot.slane %v1523, 4
  %v1526 = vshll.u32 %v1334, 16
  %v1528 = vrot.slane %v1526, 5
  %v1529 = vor.u32 %v1525, %v1528
  %v1530 = vrot.slane %v1529, 4
  %v1532 = vshll.u32 %v1335, 16
  %v1534 = vrot.slane %v1532, 5
  %v1535 = vsel %vm725, %v1530, %v1534
  %v1537 = vshrl.u32 %v1336, 16
  %v1539 = vrot.slane %v1537, 4
  %v1540 = vshll.u32 %v1336, 16
  %v1542 = vrot.slane %v1540, 5
  %v1543 = vor.u32 %v1539, %v1542
  %v1544 = vrot.slane %v1543, 4
  %v1546 = vshll.u32 %v1337, 16
  %v1548 = vrot.slane %v1546, 5
  %v1549 = vsel %vm725, %v1544, %v1548
  %v1551 = vshrl.u32 %v1338, 16
  %v1553 = vrot.slane %v1551, 4
  %v1554 = vshll.u32 %v1338, 16
  %v1556 = vrot.slane %v1554, 5
  %v1557 = vor.u32 %v1553, %v1556
  %v1558 = vrot.slane %v1557, 4
  %v1560 = vshll.u32 %v1339, 16
  %v1562 = vrot.slane %v1560, 5
  %v1563 = vsel %vm725, %v1558, %v1562
  %1564 = vrot.lane.b32.xlu0 %v1353, 16
  %v1565 = vpop.permute.xlu0 %1564
  %1566 = vrot.lane.b32.xlu0 %v1367, 16
  %v1567 = vpop.permute.xlu0 %1566
  %1568 = vrot.lane.b32.xlu0 %v1381, 16
  %v1569 = vpop.permute.xlu0 %1568
  %1570 = vrot.lane.b32.xlu0 %v1395, 16
  %v1571 = vpop.permute.xlu0 %1570
  %1572 = vrot.lane.b32.xlu0 %v1409, 16
  %v1573 = vpop.permute.xlu0 %1572
  %1574 = vrot.lane.b32.xlu0 %v1423, 16
  %v1575 = vpop.permute.xlu0 %1574
  %1576 = vrot.lane.b32.xlu0 %v1437, 16
  %v1577 = vpop.permute.xlu0 %1576
  %1578 = vrot.lane.b32.xlu0 %v1451, 16
  %v1579 = vpop.permute.xlu0 %1578
  %1580 = vrot.lane.b32.xlu0 %v1465, 16
  %v1581 = vpop.permute.xlu0 %1580
  %1582 = vrot.lane.b32.xlu0 %v1479, 16
  %v1583 = vpop.permute.xlu0 %1582
  %1584 = vrot.lane.b32.xlu0 %v1493, 16
  %v1585 = vpop.permute.xlu0 %1584
  %1586 = vrot.lane.b32.xlu0 %v1507, 16
  %v1587 = vpop.permute.xlu0 %1586
  %1588 = vrot.lane.b32.xlu0 %v1521, 16
  %v1589 = vpop.permute.xlu0 %1588
  %1590 = vrot.lane.b32.xlu0 %v1535, 16
  %v1591 = vpop.permute.xlu0 %1590
  %1592 = vrot.lane.b32.xlu0 %v1549, 16
  %v1593 = vpop.permute.xlu0 %1592
  %1594 = vrot.lane.b32.xlu0 %v1563, 16
  %v1595 = vpop.permute.xlu0 %1594
  %vm1612 = vcmask 158848
  %1613 = vst.msk [vmem:[#allocation3] sm:$0xf] %vm1612, %v1565
  %1614 = vst.msk [vmem:[#allocation3 + $0x4] sm:$0xf] %vm1612, %v1567
  %1615 = vst.msk [vmem:[#allocation3 + $0x8] sm:$0xf] %vm1612, %v1569
  %1616 = vst.msk [vmem:[#allocation3 + $0xc] sm:$0xf] %vm1612, %v1571
  %1617 = vst.msk [vmem:[#allocation3 + $0x10] sm:$0xf] %vm1612, %v1573
  %1618 = vst.msk [vmem:[#allocation3 + $0x14] sm:$0xf] %vm1612, %v1575
  %1619 = vst.msk [vmem:[#allocation3 + $0x18] sm:$0xf] %vm1612, %v1577
  %1620 = vst.msk [vmem:[#allocation3 + $0x1c] sm:$0xf] %vm1612, %v1579
  %1621 = vst.msk [vmem:[#allocation3 + $0x20] sm:$0xf] %vm1612, %v1581
  %1622 = vst.msk [vmem:[#allocation3 + $0x24] sm:$0xf] %vm1612, %v1583
  %1623 = vst.msk [vmem:[#allocation3 + $0x28] sm:$0xf] %vm1612, %v1585
  %1624 = vst.msk [vmem:[#allocation3 + $0x2c] sm:$0xf] %vm1612, %v1587
  %1625 = vst.msk [vmem:[#allocation3 + $0x30] sm:$0xf] %vm1612, %v1589
  %1626 = vst.msk [vmem:[#allocation3 + $0x34] sm:$0xf] %vm1612, %v1591
  %1627 = vst.msk [vmem:[#allocation3 + $0x38] sm:$0xf] %vm1612, %v1593
  %1628 = vst.msk [vmem:[#allocation3 + $0x3c] sm:$0xf] %vm1612, %v1595
  %v1629 = vld [vmem:[%s555] sm:$0xe]
  %v1630 = vld [vmem:[%s555 + $0x4] sm:$0x1]
  %v1631 = vld [vmem:[%s555 + $0x8] sm:$0xe]
  %v1632 = vld [vmem:[%s555 + $0xc] sm:$0x1]
  %v1633 = vld [vmem:[%s555 + $0x10] sm:$0xe]
  %v1634 = vld [vmem:[%s555 + $0x14] sm:$0x1]
  %v1635 = vld [vmem:[%s555 + $0x18] sm:$0xe]
  %v1636 = vld [vmem:[%s555 + $0x1c] sm:$0x1]
  %v1637 = vld [vmem:[%s555 + $0x20] sm:$0xe]
  %v1638 = vld [vmem:[%s555 + $0x24] sm:$0x1]
  %v1639 = vld [vmem:[%s555 + $0x28] sm:$0xe]
  %v1640 = vld [vmem:[%s555 + $0x2c] sm:$0x1]
  %v1641 = vld [vmem:[%s555 + $0x30] sm:$0xe]
  %v1642 = vld [vmem:[%s555 + $0x34] sm:$0x1]
  %v1643 = vld [vmem:[%s555 + $0x38] sm:$0xe]
  %v1644 = vld [vmem:[%s555 + $0x3c] sm:$0x1]
  %v1645 = vld [vmem:[%s555 + $0x50] sm:$0xe]
  %v1646 = vld [vmem:[%s555 + $0x54] sm:$0x1]
  %v1647 = vld [vmem:[%s555 + $0x58] sm:$0xe]
  %v1648 = vld [vmem:[%s555 + $0x5c] sm:$0x1]
  %v1649 = vld [vmem:[%s555 + $0x60] sm:$0xe]
  %v1650 = vld [vmem:[%s555 + $0x64] sm:$0x1]
  %v1651 = vld [vmem:[%s555 + $0x68] sm:$0xe]
  %v1652 = vld [vmem:[%s555 + $0x6c] sm:$0x1]
  %v1653 = vld [vmem:[%s555 + $0x70] sm:$0xe]
  %v1654 = vld [vmem:[%s555 + $0x74] sm:$0x1]
  %v1655 = vld [vmem:[%s555 + $0x78] sm:$0xe]
  %v1656 = vld [vmem:[%s555 + $0x7c] sm:$0x1]
  %v1657 = vld [vmem:[%s555 + $0x80] sm:$0xe]
  %v1658 = vld [vmem:[%s555 + $0x84] sm:$0x1]
  %v1659 = vld [vmem:[%s555 + $0x88] sm:$0xe]
  %v1660 = vld [vmem:[%s555 + $0x8c] sm:$0x1]
  %v1693 = vrot.slane %v1629, 5
  %v1694 = vrot.slane %v1693, 4
  %v1695 = vrot.slane %v1630, 5
  %v1696 = vsel %vm1081, %v1694, %v1695
  %v1697 = vrot.slane %v1631, 5
  %v1698 = vrot.slane %v1697, 4
  %v1699 = vrot.slane %v1632, 5
  %v1700 = vsel %vm1081, %v1698, %v1699
  %v1701 = vrot.slane %v1633, 5
  %v1702 = vrot.slane %v1701, 4
  %v1703 = vrot.slane %v1634, 5
  %v1704 = vsel %vm1081, %v1702, %v1703
  %v1705 = vrot.slane %v1635, 5
  %v1706 = vrot.slane %v1705, 4
  %v1707 = vrot.slane %v1636, 5
  %v1708 = vsel %vm1081, %v1706, %v1707
  %v1709 = vrot.slane %v1637, 5
  %v1710 = vrot.slane %v1709, 4
  %v1711 = vrot.slane %v1638, 5
  %v1712 = vsel %vm1081, %v1710, %v1711
  %v1713 = vrot.slane %v1639, 5
  %v1714 = vrot.slane %v1713, 4
  %v1715 = vrot.slane %v1640, 5
  %v1716 = vsel %vm1081, %v1714, %v1715
  %v1717 = vrot.slane %v1641, 5
  %v1718 = vrot.slane %v1717, 4
  %v1719 = vrot.slane %v1642, 5
  %v1720 = vsel %vm1081, %v1718, %v1719
  %v1721 = vrot.slane %v1643, 5
  %v1722 = vrot.slane %v1721, 4
  %v1723 = vrot.slane %v1644, 5
  %v1724 = vsel %vm1081, %v1722, %v1723
  %v1725 = vrot.slane %v1645, 5
  %v1726 = vrot.slane %v1725, 4
  %v1727 = vrot.slane %v1646, 5
  %v1728 = vsel %vm1081, %v1726, %v1727
  %v1729 = vrot.slane %v1647, 5
  %v1730 = vrot.slane %v1729, 4
  %v1731 = vrot.slane %v1648, 5
  %v1732 = vsel %vm1081, %v1730, %v1731
  %v1733 = vrot.slane %v1649, 5
  %v1734 = vrot.slane %v1733, 4
  %v1735 = vrot.slane %v1650, 5
  %v1736 = vsel %vm1081, %v1734, %v1735
  %v1737 = vrot.slane %v1651, 5
  %v1738 = vrot.slane %v1737, 4
  %v1739 = vrot.slane %v1652, 5
  %v1740 = vsel %vm1081, %v1738, %v1739
  %v1741 = vrot.slane %v1653, 5
  %v1742 = vrot.slane %v1741, 4
  %v1743 = vrot.slane %v1654, 5
  %v1744 = vsel %vm1081, %v1742, %v1743
  %v1745 = vrot.slane %v1655, 5
  %v1746 = vrot.slane %v1745, 4
  %v1747 = vrot.slane %v1656, 5
  %v1748 = vsel %vm1081, %v1746, %v1747
  %v1749 = vrot.slane %v1657, 5
  %v1750 = vrot.slane %v1749, 4
  %v1751 = vrot.slane %v1658, 5
  %v1752 = vsel %vm1081, %v1750, %v1751
  %v1753 = vrot.slane %v1659, 5
  %v1754 = vrot.slane %v1753, 4
  %v1755 = vrot.slane %v1660, 5
  %v1756 = vsel %vm1081, %v1754, %v1755
  %1757 = vrot.lane.b32.xlu0 %v1696, 20
  %v1758 = vpop.permute.xlu0 %1757
  %1759 = vrot.lane.b32.xlu0 %v1700, 20
  %v1760 = vpop.permute.xlu0 %1759
  %1761 = vrot.lane.b32.xlu0 %v1704, 20
  %v1762 = vpop.permute.xlu0 %1761
  %1763 = vrot.lane.b32.xlu0 %v1708, 20
  %v1764 = vpop.permute.xlu0 %1763
  %1765 = vrot.lane.b32.xlu0 %v1712, 20
  %v1766 = vpop.permute.xlu0 %1765
  %1767 = vrot.lane.b32.xlu0 %v1716, 20
  %v1768 = vpop.permute.xlu0 %1767
  %1769 = vrot.lane.b32.xlu0 %v1720, 20
  %v1770 = vpop.permute.xlu0 %1769
  %1771 = vrot.lane.b32.xlu0 %v1724, 20
  %v1772 = vpop.permute.xlu0 %1771
  %1773 = vrot.lane.b32.xlu0 %v1728, 20
  %v1774 = vpop.permute.xlu0 %1773
  %1775 = vrot.lane.b32.xlu0 %v1732, 20
  %v1776 = vpop.permute.xlu0 %1775
  %1777 = vrot.lane.b32.xlu0 %v1736, 20
  %v1778 = vpop.permute.xlu0 %1777
  %1779 = vrot.lane.b32.xlu0 %v1740, 20
  %v1780 = vpop.permute.xlu0 %1779
  %1781 = vrot.lane.b32.xlu0 %v1744, 20
  %v1782 = vpop.permute.xlu0 %1781
  %1783 = vrot.lane.b32.xlu0 %v1748, 20
  %v1784 = vpop.permute.xlu0 %1783
  %1785 = vrot.lane.b32.xlu0 %v1752, 20
  %v1786 = vpop.permute.xlu0 %1785
  %1787 = vrot.lane.b32.xlu0 %v1756, 20
  %v1788 = vpop.permute.xlu0 %1787
  %vm1805 = vcmask 191648
  %1806 = vst.msk [vmem:[#allocation3] sm:$0xf] %vm1805, %v1758
  %1807 = vst.msk [vmem:[#allocation3 + $0x4] sm:$0xf] %vm1805, %v1760
  %1808 = vst.msk [vmem:[#allocation3 + $0x8] sm:$0xf] %vm1805, %v1762
  %1809 = vst.msk [vmem:[#allocation3 + $0xc] sm:$0xf] %vm1805, %v1764
  %1810 = vst.msk [vmem:[#allocation3 + $0x10] sm:$0xf] %vm1805, %v1766
  %1811 = vst.msk [vmem:[#allocation3 + $0x14] sm:$0xf] %vm1805, %v1768
  %1812 = vst.msk [vmem:[#allocation3 + $0x18] sm:$0xf] %vm1805, %v1770
  %1813 = vst.msk [vmem:[#allocation3 + $0x1c] sm:$0xf] %vm1805, %v1772
  %1814 = vst.msk [vmem:[#allocation3 + $0x20] sm:$0xf] %vm1805, %v1774
  %1815 = vst.msk [vmem:[#allocation3 + $0x24] sm:$0xf] %vm1805, %v1776
  %1816 = vst.msk [vmem:[#allocation3 + $0x28] sm:$0xf] %vm1805, %v1778
  %1817 = vst.msk [vmem:[#allocation3 + $0x2c] sm:$0xf] %vm1805, %v1780
  %1818 = vst.msk [vmem:[#allocation3 + $0x30] sm:$0xf] %vm1805, %v1782
  %1819 = vst.msk [vmem:[#allocation3 + $0x34] sm:$0xf] %vm1805, %v1784
  %1820 = vst.msk [vmem:[#allocation3 + $0x38] sm:$0xf] %vm1805, %v1786
  %1821 = vst.msk [vmem:[#allocation3 + $0x3c] sm:$0xf] %vm1805, %v1788
  %s1822 = scalar_lea.vmem [#allocation2], 16
  %v1823 = vld [vmem:[%s1822] sm:$0xf]
  %v1824 = vld [vmem:[%s1822 + $0x8] sm:$0xf]
  %v1825 = vld [vmem:[%s1822 + $0x10] sm:$0xf]
  %v1826 = vld [vmem:[%s1822 + $0x18] sm:$0xf]
  %v1827 = vld [vmem:[%s1822 + $0x20] sm:$0xf]
  %v1828 = vld [vmem:[%s1822 + $0x28] sm:$0xf]
  %v1829 = vld [vmem:[%s1822 + $0x30] sm:$0xf]
  %v1830 = vld [vmem:[%s1822 + $0x38] sm:$0xf]
  %v1831 = vld [vmem:[%s1822 + $0x50] sm:$0xf]
  %v1832 = vld [vmem:[%s1822 + $0x58] sm:$0xf]
  %v1833 = vld [vmem:[%s1822 + $0x60] sm:$0xf]
  %v1834 = vld [vmem:[%s1822 + $0x68] sm:$0xf]
  %v1835 = vld [vmem:[%s1822 + $0x70] sm:$0xf]
  %v1836 = vld [vmem:[%s1822 + $0x78] sm:$0xf]
  %v1837 = vld [vmem:[%s1822 + $0x80] sm:$0xf]
  %v1838 = vld [vmem:[%s1822 + $0x88] sm:$0xf]
  %1855 = vrot.lane.b32.xlu0 %v1823, 24
  %v1856 = vpop.permute.xlu0 %1855
  %1857 = vrot.lane.b32.xlu0 %v1824, 24
  %v1858 = vpop.permute.xlu0 %1857
  %1859 = vrot.lane.b32.xlu0 %v1825, 24
  %v1860 = vpop.permute.xlu0 %1859
  %1861 = vrot.lane.b32.xlu0 %v1826, 24
  %v1862 = vpop.permute.xlu0 %1861
  %1863 = vrot.lane.b32.xlu0 %v1827, 24
  %v1864 = vpop.permute.xlu0 %1863
  %1865 = vrot.lane.b32.xlu0 %v1828, 24
  %v1866 = vpop.permute.xlu0 %1865
  %1867 = vrot.lane.b32.xlu0 %v1829, 24
  %v1868 = vpop.permute.xlu0 %1867
  %1869 = vrot.lane.b32.xlu0 %v1830, 24
  %v1870 = vpop.permute.xlu0 %1869
  %1871 = vrot.lane.b32.xlu0 %v1831, 24
  %v1872 = vpop.permute.xlu0 %1871
  %1873 = vrot.lane.b32.xlu0 %v1832, 24
  %v1874 = vpop.permute.xlu0 %1873
  %1875 = vrot.lane.b32.xlu0 %v1833, 24
  %v1876 = vpop.permute.xlu0 %1875
  %1877 = vrot.lane.b32.xlu0 %v1834, 24
  %v1878 = vpop.permute.xlu0 %1877
  %1879 = vrot.lane.b32.xlu0 %v1835, 24
  %v1880 = vpop.permute.xlu0 %1879
  %1881 = vrot.lane.b32.xlu0 %v1836, 24
  %v1882 = vpop.permute.xlu0 %1881
  %1883 = vrot.lane.b32.xlu0 %v1837, 24
  %v1884 = vpop.permute.xlu0 %1883
  %1885 = vrot.lane.b32.xlu0 %v1838, 24
  %v1886 = vpop.permute.xlu0 %1885
  %vm1903 = vcmask 224448
  %1904 = vst.msk [vmem:[#allocation3] sm:$0xf] %vm1903, %v1856
  %1905 = vst.msk [vmem:[#allocation3 + $0x4] sm:$0xf] %vm1903, %v1858
  %1906 = vst.msk [vmem:[#allocation3 + $0x8] sm:$0xf] %vm1903, %v1860
  %1907 = vst.msk [vmem:[#allocation3 + $0xc] sm:$0xf] %vm1903, %v1862
  %1908 = vst.msk [vmem:[#allocation3 + $0x10] sm:$0xf] %vm1903, %v1864
  %1909 = vst.msk [vmem:[#allocation3 + $0x14] sm:$0xf] %vm1903, %v1866
  %1910 = vst.msk [vmem:[#allocation3 + $0x18] sm:$0xf] %vm1903, %v1868
  %1911 = vst.msk [vmem:[#allocation3 + $0x1c] sm:$0xf] %vm1903, %v1870
  %1912 = vst.msk [vmem:[#allocation3 + $0x20] sm:$0xf] %vm1903, %v1872
  %1913 = vst.msk [vmem:[#allocation3 + $0x24] sm:$0xf] %vm1903, %v1874
  %1914 = vst.msk [vmem:[#allocation3 + $0x28] sm:$0xf] %vm1903, %v1876
  %1915 = vst.msk [vmem:[#allocation3 + $0x2c] sm:$0xf] %vm1903, %v1878
  %1916 = vst.msk [vmem:[#allocation3 + $0x30] sm:$0xf] %vm1903, %v1880
  %1917 = vst.msk [vmem:[#allocation3 + $0x34] sm:$0xf] %vm1903, %v1882
  %1918 = vst.msk [vmem:[#allocation3 + $0x38] sm:$0xf] %vm1903, %v1884
  %1919 = vst.msk [vmem:[#allocation3 + $0x3c] sm:$0xf] %vm1903, %v1886
  %v1920 = vld [vmem:[%s1822] sm:$0xf]
  %v1921 = vld [vmem:[%s1822 + $0x4] sm:$0x1]
  %v1922 = vld [vmem:[%s1822 + $0x8] sm:$0xf]
  %v1923 = vld [vmem:[%s1822 + $0xc] sm:$0x1]
  %v1924 = vld [vmem:[%s1822 + $0x10] sm:$0xf]
  %v1925 = vld [vmem:[%s1822 + $0x14] sm:$0x1]
  %v1926 = vld [vmem:[%s1822 + $0x18] sm:$0xf]
  %v1927 = vld [vmem:[%s1822 + $0x1c] sm:$0x1]
  %v1928 = vld [vmem:[%s1822 + $0x20] sm:$0xf]
  %v1929 = vld [vmem:[%s1822 + $0x24] sm:$0x1]
  %v1930 = vld [vmem:[%s1822 + $0x28] sm:$0xf]
  %v1931 = vld [vmem:[%s1822 + $0x2c] sm:$0x1]
  %v1932 = vld [vmem:[%s1822 + $0x30] sm:$0xf]
  %v1933 = vld [vmem:[%s1822 + $0x34] sm:$0x1]
  %v1934 = vld [vmem:[%s1822 + $0x38] sm:$0xf]
  %v1935 = vld [vmem:[%s1822 + $0x3c] sm:$0x1]
  %v1936 = vld [vmem:[%s1822 + $0x50] sm:$0xf]
  %v1937 = vld [vmem:[%s1822 + $0x54] sm:$0x1]
  %v1938 = vld [vmem:[%s1822 + $0x58] sm:$0xf]
  %v1939 = vld [vmem:[%s1822 + $0x5c] sm:$0x1]
  %v1940 = vld [vmem:[%s1822 + $0x60] sm:$0xf]
  %v1941 = vld [vmem:[%s1822 + $0x64] sm:$0x1]
  %v1942 = vld [vmem:[%s1822 + $0x68] sm:$0xf]
  %v1943 = vld [vmem:[%s1822 + $0x6c] sm:$0x1]
  %v1944 = vld [vmem:[%s1822 + $0x70] sm:$0xf]
  %v1945 = vld [vmem:[%s1822 + $0x74] sm:$0x1]
  %v1946 = vld [vmem:[%s1822 + $0x78] sm:$0xf]
  %v1947 = vld [vmem:[%s1822 + $0x7c] sm:$0x1]
  %v1948 = vld [vmem:[%s1822 + $0x80] sm:$0xf]
  %v1949 = vld [vmem:[%s1822 + $0x84] sm:$0x1]
  %v1950 = vld [vmem:[%s1822 + $0x88] sm:$0xf]
  %v1951 = vld [vmem:[%s1822 + $0x8c] sm:$0x1]
  %v1953 = vshrl.u32 %v1920, 16
  %v1955 = vrot.slane %v1953, 4
  %v1956 = vshll.u32 %v1920, 16
  %v1958 = vrot.slane %v1956, 5
  %v1959 = vor.u32 %v1955, %v1958
  %v1960 = vrot.slane %v1959, 4
  %v1962 = vshll.u32 %v1921, 16
  %v1964 = vrot.slane %v1962, 5
  %v1965 = vsel %vm725, %v1960, %v1964
  %v1967 = vshrl.u32 %v1922, 16
  %v1969 = vrot.slane %v1967, 4
  %v1970 = vshll.u32 %v1922, 16
  %v1972 = vrot.slane %v1970, 5
  %v1973 = vor.u32 %v1969, %v1972
  %v1974 = vrot.slane %v1973, 4
  %v1976 = vshll.u32 %v1923, 16
  %v1978 = vrot.slane %v1976, 5
  %v1979 = vsel %vm725, %v1974, %v1978
  %v1981 = vshrl.u32 %v1924, 16
  %v1983 = vrot.slane %v1981, 4
  %v1984 = vshll.u32 %v1924, 16
  %v1986 = vrot.slane %v1984, 5
  %v1987 = vor.u32 %v1983, %v1986
  %v1988 = vrot.slane %v1987, 4
  %v1990 = vshll.u32 %v1925, 16
  %v1992 = vrot.slane %v1990, 5
  %v1993 = vsel %vm725, %v1988, %v1992
  %v1995 = vshrl.u32 %v1926, 16
  %v1997 = vrot.slane %v1995, 4
  %v1998 = vshll.u32 %v1926, 16
  %v2000 = vrot.slane %v1998, 5
  %v2001 = vor.u32 %v1997, %v2000
  %v2002 = vrot.slane %v2001, 4
  %v2004 = vshll.u32 %v1927, 16
  %v2006 = vrot.slane %v2004, 5
  %v2007 = vsel %vm725, %v2002, %v2006
  %v2009 = vshrl.u32 %v1928, 16
  %v2011 = vrot.slane %v2009, 4
  %v2012 = vshll.u32 %v1928, 16
  %v2014 = vrot.slane %v2012, 5
  %v2015 = vor.u32 %v2011, %v2014
  %v2016 = vrot.slane %v2015, 4
  %v2018 = vshll.u32 %v1929, 16
  %v2020 = vrot.slane %v2018, 5
  %v2021 = vsel %vm725, %v2016, %v2020
  %v2023 = vshrl.u32 %v1930, 16
  %v2025 = vrot.slane %v2023, 4
  %v2026 = vshll.u32 %v1930, 16
  %v2028 = vrot.slane %v2026, 5
  %v2029 = vor.u32 %v2025, %v2028
  %v2030 = vrot.slane %v2029, 4
  %v2032 = vshll.u32 %v1931, 16
  %v2034 = vrot.slane %v2032, 5
  %v2035 = vsel %vm725, %v2030, %v2034
  %v2037 = vshrl.u32 %v1932, 16
  %v2039 = vrot.slane %v2037, 4
  %v2040 = vshll.u32 %v1932, 16
  %v2042 = vrot.slane %v2040, 5
  %v2043 = vor.u32 %v2039, %v2042
  %v2044 = vrot.slane %v2043, 4
  %v2046 = vshll.u32 %v1933, 16
  %v2048 = vrot.slane %v2046, 5
  %v2049 = vsel %vm725, %v2044, %v2048
  %v2051 = vshrl.u32 %v1934, 16
  %v2053 = vrot.slane %v2051, 4
  %v2054 = vshll.u32 %v1934, 16
  %v2056 = vrot.slane %v2054, 5
  %v2057 = vor.u32 %v2053, %v2056
  %v2058 = vrot.slane %v2057, 4
  %v2060 = vshll.u32 %v1935, 16
  %v2062 = vrot.slane %v2060, 5
  %v2063 = vsel %vm725, %v2058, %v2062
  %v2065 = vshrl.u32 %v1936, 16
  %v2067 = vrot.slane %v2065, 4
  %v2068 = vshll.u32 %v1936, 16
  %v2070 = vrot.slane %v2068, 5
  %v2071 = vor.u32 %v2067, %v2070
  %v2072 = vrot.slane %v2071, 4
  %v2074 = vshll.u32 %v1937, 16
  %v2076 = vrot.slane %v2074, 5
  %v2077 = vsel %vm725, %v2072, %v2076
  %v2079 = vshrl.u32 %v1938, 16
  %v2081 = vrot.slane %v2079, 4
  %v2082 = vshll.u32 %v1938, 16
  %v2084 = vrot.slane %v2082, 5
  %v2085 = vor.u32 %v2081, %v2084
  %v2086 = vrot.slane %v2085, 4
  %v2088 = vshll.u32 %v1939, 16
  %v2090 = vrot.slane %v2088, 5
  %v2091 = vsel %vm725, %v2086, %v2090
  %v2093 = vshrl.u32 %v1940, 16
  %v2095 = vrot.slane %v2093, 4
  %v2096 = vshll.u32 %v1940, 16
  %v2098 = vrot.slane %v2096, 5
  %v2099 = vor.u32 %v2095, %v2098
  %v2100 = vrot.slane %v2099, 4
  %v2102 = vshll.u32 %v1941, 16
  %v2104 = vrot.slane %v2102, 5
  %v2105 = vsel %vm725, %v2100, %v2104
  %v2107 = vshrl.u32 %v1942, 16
  %v2109 = vrot.slane %v2107, 4
  %v2110 = vshll.u32 %v1942, 16
  %v2112 = vrot.slane %v2110, 5
  %v2113 = vor.u32 %v2109, %v2112
  %v2114 = vrot.slane %v2113, 4
  %v2116 = vshll.u32 %v1943, 16
  %v2118 = vrot.slane %v2116, 5
  %v2119 = vsel %vm725, %v2114, %v2118
  %v2121 = vshrl.u32 %v1944, 16
  %v2123 = vrot.slane %v2121, 4
  %v2124 = vshll.u32 %v1944, 16
  %v2126 = vrot.slane %v2124, 5
  %v2127 = vor.u32 %v2123, %v2126
  %v2128 = vrot.slane %v2127, 4
  %v2130 = vshll.u32 %v1945, 16
  %v2132 = vrot.slane %v2130, 5
  %v2133 = vsel %vm725, %v2128, %v2132
  %v2135 = vshrl.u32 %v1946, 16
  %v2137 = vrot.slane %v2135, 4
  %v2138 = vshll.u32 %v1946, 16
  %v2140 = vrot.slane %v2138, 5
  %v2141 = vor.u32 %v2137, %v2140
  %v2142 = vrot.slane %v2141, 4
  %v2144 = vshll.u32 %v1947, 16
  %v2146 = vrot.slane %v2144, 5
  %v2147 = vsel %vm725, %v2142, %v2146
  %v2149 = vshrl.u32 %v1948, 16
  %v2151 = vrot.slane %v2149, 4
  %v2152 = vshll.u32 %v1948, 16
  %v2154 = vrot.slane %v2152, 5
  %v2155 = vor.u32 %v2151, %v2154
  %v2156 = vrot.slane %v2155, 4
  %v2158 = vshll.u32 %v1949, 16
  %v2160 = vrot.slane %v2158, 5
  %v2161 = vsel %vm725, %v2156, %v2160
  %v2163 = vshrl.u32 %v1950, 16
  %v2165 = vrot.slane %v2163, 4
  %v2166 = vshll.u32 %v1950, 16
  %v2168 = vrot.slane %v2166, 5
  %v2169 = vor.u32 %v2165, %v2168
  %v2170 = vrot.slane %v2169, 4
  %v2172 = vshll.u32 %v1951, 16
  %v2174 = vrot.slane %v2172, 5
  %v2175 = vsel %vm725, %v2170, %v2174
  %2176 = vrot.lane.b32.xlu0 %v1965, 28
  %v2177 = vpop.permute.xlu0 %2176
  %2178 = vrot.lane.b32.xlu0 %v1979, 28
  %v2179 = vpop.permute.xlu0 %2178
  %2180 = vrot.lane.b32.xlu0 %v1993, 28
  %v2181 = vpop.permute.xlu0 %2180
  %2182 = vrot.lane.b32.xlu0 %v2007, 28
  %v2183 = vpop.permute.xlu0 %2182
  %2184 = vrot.lane.b32.xlu0 %v2021, 28
  %v2185 = vpop.permute.xlu0 %2184
  %2186 = vrot.lane.b32.xlu0 %v2035, 28
  %v2187 = vpop.permute.xlu0 %2186
  %2188 = vrot.lane.b32.xlu0 %v2049, 28
  %v2189 = vpop.permute.xlu0 %2188
  %2190 = vrot.lane.b32.xlu0 %v2063, 28
  %v2191 = vpop.permute.xlu0 %2190
  %2192 = vrot.lane.b32.xlu0 %v2077, 28
  %v2193 = vpop.permute.xlu0 %2192
  %2194 = vrot.lane.b32.xlu0 %v2091, 28
  %v2195 = vpop.permute.xlu0 %2194
  %2196 = vrot.lane.b32.xlu0 %v2105, 28
  %v2197 = vpop.permute.xlu0 %2196
  %2198 = vrot.lane.b32.xlu0 %v2119, 28
  %v2199 = vpop.permute.xlu0 %2198
  %2200 = vrot.lane.b32.xlu0 %v2133, 28
  %v2201 = vpop.permute.xlu0 %2200
  %2202 = vrot.lane.b32.xlu0 %v2147, 28
  %v2203 = vpop.permute.xlu0 %2202
  %2204 = vrot.lane.b32.xlu0 %v2161, 28
  %v2205 = vpop.permute.xlu0 %2204
  %2206 = vrot.lane.b32.xlu0 %v2175, 28
  %v2207 = vpop.permute.xlu0 %2206
  %vm2224 = vcmask 257248
  %2225 = vst.msk [vmem:[#allocation3] sm:$0xf] %vm2224, %v2177
  %2226 = vst.msk [vmem:[#allocation3 + $0x4] sm:$0xf] %vm2224, %v2179
  %2227 = vst.msk [vmem:[#allocation3 + $0x8] sm:$0xf] %vm2224, %v2181
  %2228 = vst.msk [vmem:[#allocation3 + $0xc] sm:$0xf] %vm2224, %v2183
  %2229 = vst.msk [vmem:[#allocation3 + $0x10] sm:$0xf] %vm2224, %v2185
  %2230 = vst.msk [vmem:[#allocation3 + $0x14] sm:$0xf] %vm2224, %v2187
  %2231 = vst.msk [vmem:[#allocation3 + $0x18] sm:$0xf] %vm2224, %v2189
  %2232 = vst.msk [vmem:[#allocation3 + $0x1c] sm:$0xf] %vm2224, %v2191
  %2233 = vst.msk [vmem:[#allocation3 + $0x20] sm:$0xf] %vm2224, %v2193
  %2234 = vst.msk [vmem:[#allocation3 + $0x24] sm:$0xf] %vm2224, %v2195
  %2235 = vst.msk [vmem:[#allocation3 + $0x28] sm:$0xf] %vm2224, %v2197
  %2236 = vst.msk [vmem:[#allocation3 + $0x2c] sm:$0xf] %vm2224, %v2199
  %2237 = vst.msk [vmem:[#allocation3 + $0x30] sm:$0xf] %vm2224, %v2201
  %2238 = vst.msk [vmem:[#allocation3 + $0x34] sm:$0xf] %vm2224, %v2203
  %2239 = vst.msk [vmem:[#allocation3 + $0x38] sm:$0xf] %vm2224, %v2205
  %2240 = vst.msk [vmem:[#allocation3 + $0x3c] sm:$0xf] %vm2224, %v2207
  %v2241 = vld [vmem:[%s1822] sm:$0xe]
  %v2242 = vld [vmem:[%s1822 + $0x4] sm:$0x1]
  %v2243 = vld [vmem:[%s1822 + $0x8] sm:$0xe]
  %v2244 = vld [vmem:[%s1822 + $0xc] sm:$0x1]
  %v2245 = vld [vmem:[%s1822 + $0x10] sm:$0xe]
  %v2246 = vld [vmem:[%s1822 + $0x14] sm:$0x1]
  %v2247 = vld [vmem:[%s1822 + $0x18] sm:$0xe]
  %v2248 = vld [vmem:[%s1822 + $0x1c] sm:$0x1]
  %v2249 = vld [vmem:[%s1822 + $0x20] sm:$0xe]
  %v2250 = vld [vmem:[%s1822 + $0x24] sm:$0x1]
  %v2251 = vld [vmem:[%s1822 + $0x28] sm:$0xe]
  %v2252 = vld [vmem:[%s1822 + $0x2c] sm:$0x1]
  %v2253 = vld [vmem:[%s1822 + $0x30] sm:$0xe]
  %v2254 = vld [vmem:[%s1822 + $0x34] sm:$0x1]
  %v2255 = vld [vmem:[%s1822 + $0x38] sm:$0xe]
  %v2256 = vld [vmem:[%s1822 + $0x3c] sm:$0x1]
  %v2257 = vld [vmem:[%s1822 + $0x50] sm:$0xe]
  %v2258 = vld [vmem:[%s1822 + $0x54] sm:$0x1]
  %v2259 = vld [vmem:[%s1822 + $0x58] sm:$0xe]
  %v2260 = vld [vmem:[%s1822 + $0x5c] sm:$0x1]
  %v2261 = vld [vmem:[%s1822 + $0x60] sm:$0xe]
  %v2262 = vld [vmem:[%s1822 + $0x64] sm:$0x1]
  %v2263 = vld [vmem:[%s1822 + $0x68] sm:$0xe]
  %v2264 = vld [vmem:[%s1822 + $0x6c] sm:$0x1]
  %v2265 = vld [vmem:[%s1822 + $0x70] sm:$0xe]
  %v2266 = vld [vmem:[%s1822 + $0x74] sm:$0x1]
  %v2267 = vld [vmem:[%s1822 + $0x78] sm:$0xe]
  %v2268 = vld [vmem:[%s1822 + $0x7c] sm:$0x1]
  %v2269 = vld [vmem:[%s1822 + $0x80] sm:$0xe]
  %v2270 = vld [vmem:[%s1822 + $0x84] sm:$0x1]
  %v2271 = vld [vmem:[%s1822 + $0x88] sm:$0xe]
  %v2272 = vld [vmem:[%s1822 + $0x8c] sm:$0x1]
  %v2305 = vrot.slane %v2241, 5
  %v2306 = vrot.slane %v2305, 4
  %v2307 = vrot.slane %v2242, 5
  %v2308 = vsel %vm1081, %v2306, %v2307
  %v2309 = vrot.slane %v2243, 5
  %v2310 = vrot.slane %v2309, 4
  %v2311 = vrot.slane %v2244, 5
  %v2312 = vsel %vm1081, %v2310, %v2311
  %v2313 = vrot.slane %v2245, 5
  %v2314 = vrot.slane %v2313, 4
  %v2315 = vrot.slane %v2246, 5
  %v2316 = vsel %vm1081, %v2314, %v2315
  %v2317 = vrot.slane %v2247, 5
  %v2318 = vrot.slane %v2317, 4
  %v2319 = vrot.slane %v2248, 5
  %v2320 = vsel %vm1081, %v2318, %v2319
  %v2321 = vrot.slane %v2249, 5
  %v2322 = vrot.slane %v2321, 4
  %v2323 = vrot.slane %v2250, 5
  %v2324 = vsel %vm1081, %v2322, %v2323
  %v2325 = vrot.slane %v2251, 5
  %v2326 = vrot.slane %v2325, 4
  %v2327 = vrot.slane %v2252, 5
  %v2328 = vsel %vm1081, %v2326, %v2327
  %v2329 = vrot.slane %v2253, 5
  %v2330 = vrot.slane %v2329, 4
  %v2331 = vrot.slane %v2254, 5
  %v2332 = vsel %vm1081, %v2330, %v2331
  %v2333 = vrot.slane %v2255, 5
  %v2334 = vrot.slane %v2333, 4
  %v2335 = vrot.slane %v2256, 5
  %v2336 = vsel %vm1081, %v2334, %v2335
  %v2337 = vrot.slane %v2257, 5
  %v2338 = vrot.slane %v2337, 4
  %v2339 = vrot.slane %v2258, 5
  %v2340 = vsel %vm1081, %v2338, %v2339
  %v2341 = vrot.slane %v2259, 5
  %v2342 = vrot.slane %v2341, 4
  %v2343 = vrot.slane %v2260, 5
  %v2344 = vsel %vm1081, %v2342, %v2343
  %v2345 = vrot.slane %v2261, 5
  %v2346 = vrot.slane %v2345, 4
  %v2347 = vrot.slane %v2262, 5
  %v2348 = vsel %vm1081, %v2346, %v2347
  %v2349 = vrot.slane %v2263, 5
  %v2350 = vrot.slane %v2349, 4
  %v2351 = vrot.slane %v2264, 5
  %v2352 = vsel %vm1081, %v2350, %v2351
  %v2353 = vrot.slane %v2265, 5
  %v2354 = vrot.slane %v2353, 4
  %v2355 = vrot.slane %v2266, 5
  %v2356 = vsel %vm1081, %v2354, %v2355
  %v2357 = vrot.slane %v2267, 5
  %v2358 = vrot.slane %v2357, 4
  %v2359 = vrot.slane %v2268, 5
  %v2360 = vsel %vm1081, %v2358, %v2359
  %v2361 = vrot.slane %v2269, 5
  %v2362 = vrot.slane %v2361, 4
  %v2363 = vrot.slane %v2270, 5
  %v2364 = vsel %vm1081, %v2362, %v2363
  %v2365 = vrot.slane %v2271, 5
  %v2366 = vrot.slane %v2365, 4
  %v2367 = vrot.slane %v2272, 5
  %v2368 = vsel %vm1081, %v2366, %v2367
  %2369 = vrot.lane.b32.xlu0 %v2308, 32
  %v2370 = vpop.permute.xlu0 %2369
  %2371 = vrot.lane.b32.xlu0 %v2312, 32
  %v2372 = vpop.permute.xlu0 %2371
  %2373 = vrot.lane.b32.xlu0 %v2316, 32
  %v2374 = vpop.permute.xlu0 %2373
  %2375 = vrot.lane.b32.xlu0 %v2320, 32
  %v2376 = vpop.permute.xlu0 %2375
  %2377 = vrot.lane.b32.xlu0 %v2324, 32
  %v2378 = vpop.permute.xlu0 %2377
  %2379 = vrot.lane.b32.xlu0 %v2328, 32
  %v2380 = vpop.permute.xlu0 %2379
  %2381 = vrot.lane.b32.xlu0 %v2332, 32
  %v2382 = vpop.permute.xlu0 %2381
  %2383 = vrot.lane.b32.xlu0 %v2336, 32
  %v2384 = vpop.permute.xlu0 %2383
  %2385 = vrot.lane.b32.xlu0 %v2340, 32
  %v2386 = vpop.permute.xlu0 %2385
  %2387 = vrot.lane.b32.xlu0 %v2344, 32
  %v2388 = vpop.permute.xlu0 %2387
  %2389 = vrot.lane.b32.xlu0 %v2348, 32
  %v2390 = vpop.permute.xlu0 %2389
  %2391 = vrot.lane.b32.xlu0 %v2352, 32
  %v2392 = vpop.permute.xlu0 %2391
  %2393 = vrot.lane.b32.xlu0 %v2356, 32
  %v2394 = vpop.permute.xlu0 %2393
  %2395 = vrot.lane.b32.xlu0 %v2360, 32
  %v2396 = vpop.permute.xlu0 %2395
  %2397 = vrot.lane.b32.xlu0 %v2364, 32
  %v2398 = vpop.permute.xlu0 %2397
  %2399 = vrot.lane.b32.xlu0 %v2368, 32
  %v2400 = vpop.permute.xlu0 %2399
  %vm2417 = vcmask 290048
  %2418 = vst.msk [vmem:[#allocation3] sm:$0xf] %vm2417, %v2370
  %2419 = vst.msk [vmem:[#allocation3 + $0x4] sm:$0xf] %vm2417, %v2372
  %2420 = vst.msk [vmem:[#allocation3 + $0x8] sm:$0xf] %vm2417, %v2374
  %2421 = vst.msk [vmem:[#allocation3 + $0xc] sm:$0xf] %vm2417, %v2376
  %2422 = vst.msk [vmem:[#allocation3 + $0x10] sm:$0xf] %vm2417, %v2378
  %2423 = vst.msk [vmem:[#allocation3 + $0x14] sm:$0xf] %vm2417, %v2380
  %2424 = vst.msk [vmem:[#allocation3 + $0x18] sm:$0xf] %vm2417, %v2382
  %2425 = vst.msk [vmem:[#allocation3 + $0x1c] sm:$0xf] %vm2417, %v2384
  %2426 = vst.msk [vmem:[#allocation3 + $0x20] sm:$0xf] %vm2417, %v2386
  %2427 = vst.msk [vmem:[#allocation3 + $0x24] sm:$0xf] %vm2417, %v2388
  %2428 = vst.msk [vmem:[#allocation3 + $0x28] sm:$0xf] %vm2417, %v2390
  %2429 = vst.msk [vmem:[#allocation3 + $0x2c] sm:$0xf] %vm2417, %v2392
  %2430 = vst.msk [vmem:[#allocation3 + $0x30] sm:$0xf] %vm2417, %v2394
  %2431 = vst.msk [vmem:[#allocation3 + $0x34] sm:$0xf] %vm2417, %v2396
  %2432 = vst.msk [vmem:[#allocation3 + $0x38] sm:$0xf] %vm2417, %v2398
  %2433 = vst.msk [vmem:[#allocation3 + $0x3c] sm:$0xf] %vm2417, %v2400
  %v2434 = vld [vmem:[#allocation3] sm:$0xf]
  %v2435 = vld [vmem:[#allocation3 + $0x4] sm:$0xf]
  %v2436 = vld [vmem:[#allocation3 + $0x8] sm:$0xf]
  %v2437 = vld [vmem:[#allocation3 + $0xc] sm:$0xf]
  %v2438 = vld [vmem:[#allocation3 + $0x10] sm:$0xf]
  %v2439 = vld [vmem:[#allocation3 + $0x14] sm:$0xf]
  %v2440 = vld [vmem:[#allocation3 + $0x18] sm:$0xf]
  %v2441 = vld [vmem:[#allocation3 + $0x1c] sm:$0xf]
  %v2442 = vld [vmem:[#allocation3 + $0x20] sm:$0xf]
  %v2443 = vld [vmem:[#allocation3 + $0x24] sm:$0xf]
  %v2444 = vld [vmem:[#allocation3 + $0x28] sm:$0xf]
  %v2445 = vld [vmem:[#allocation3 + $0x2c] sm:$0xf]
  %v2446 = vld [vmem:[#allocation3 + $0x30] sm:$0xf]
  %v2447 = vld [vmem:[#allocation3 + $0x34] sm:$0xf]
  %v2448 = vld [vmem:[#allocation3 + $0x38] sm:$0xf]
  %v2449 = vld [vmem:[#allocation3 + $0x3c] sm:$0xf]
  %v2450 = vld [vmem:[%s1] sm:$0xf]
  %v2451 = vld [vmem:[%s1 + $0x4] sm:$0xf]
  %v2452 = vld [vmem:[%s1 + $0x8] sm:$0xf]
  %v2453 = vld [vmem:[%s1 + $0xc] sm:$0xf]
  %v2454 = vld [vmem:[%s1 + $0x10] sm:$0x3]
  %v2471 = vunpack.c.l.b16 %v2434
  %v2472 = vunpack.c.l.b16 %v2435
  %v2473 = vunpack.c.l.b16 %v2436
  %v2474 = vunpack.c.l.b16 %v2437
  %v2475 = vunpack.c.l.b16 %v2438
  %v2476 = vunpack.c.l.b16 %v2439
  %v2477 = vunpack.c.l.b16 %v2440
  %v2478 = vunpack.c.l.b16 %v2441
  %v2479 = vunpack.c.l.b16 %v2442
  %v2480 = vunpack.c.l.b16 %v2443
  %v2481 = vunpack.c.l.b16 %v2444
  %v2482 = vunpack.c.l.b16 %v2445
  %v2483 = vunpack.c.l.b16 %v2446
  %v2484 = vunpack.c.l.b16 %v2447
  %v2485 = vunpack.c.l.b16 %v2448
  %v2486 = vunpack.c.l.b16 %v2449
  %v2487 = vpack.c.b16 %v2472, %v2471
  %v2488 = vpack.c.b16 %v2474, %v2473
  %v2489 = vpack.c.b16 %v2476, %v2475
  %v2490 = vpack.c.b16 %v2478, %v2477
  %v2491 = vpack.c.b16 %v2480, %v2479
  %v2492 = vpack.c.b16 %v2482, %v2481
  %v2493 = vpack.c.b16 %v2484, %v2483
  %v2494 = vpack.c.b16 %v2486, %v2485
  %v2500 = vunpack.c.l.b16 %v2450
  %v2501 = vunpack.c.l.b16 %v2451
  %v2502 = vunpack.c.l.b16 %v2452
  %v2503 = vunpack.c.l.b16 %v2453
  %v2504 = vunpack.c.l.b16 %v2454
  %v2505 = vpack.c.b16 %v2501, %v2500
  %v2506 = vpack.c.b16 %v2503, %v2502
  %v2507 = vpack.c.b16 %v2504, %v2504
  %vm2510 = vcmask 293888
  %v2512 = vsel %vm2510, %v2487, 0
  %v2515 = vsel %vm2510, %v2488, 0
  %v2518 = vsel %vm2510, %v2489, 0
  %v2521 = vsel %vm2510, %v2490, 0
  %v2524 = vsel %vm2510, %v2491, 0
  %v2527 = vsel %vm2510, %v2492, 0
  %v2530 = vsel %vm2510, %v2493, 0
  %v2533 = vsel %vm2510, %v2494, 0
  %vm2535 = vcmask 1041408
  %v2537 = vsel %vm2535, %v2507, 0
  %2539 = vmatprep.subr.bf16.mxu0 0
  %2540 = vmatpush1.bf16.msra.mxu0 0
  %2541 = vmatprep.subr.bf16.mxu0 0
  %2542 = vmatpush1.bf16.msra.mxu0 0
  %2543 = vmatprep.subr.bf16.mxu0 0
  %2544 = vmatpush1.bf16.msra.mxu0 0
  %2545 = vmatprep.subr.bf16.mxu0 0
  %2546 = vmatpush1.bf16.msra.mxu0 0
  %2547 = vmatprep.subr.bf16.mxu0 0
  %2548 = vmatpush1.bf16.msra.mxu0 0
  %2549 = vmatprep.subr.bf16.mxu0 0
  %2550 = vmatpush1.bf16.msra.mxu0 %v2537
  %2551 = vmatprep.subr.bf16.mxu0 0
  %2552 = vmatpush1.bf16.msra.mxu0 %v2506
  %2553 = vmatprep.subr.bf16.mxu0 0
  %2554 = vmatpush1.bf16.msra.mxu0 %v2505
  %2555 = vmatprep.subr.bf16.mxu0 0
  %2556 = vmatpush2.bf16.msra.mxu0 0
  %2557 = vmatprep.subr.bf16.mxu0 0
  %2558 = vmatpush2.bf16.msra.mxu0 0
  %2559 = vmatprep.subr.bf16.mxu0 0
  %2560 = vmatpush2.bf16.msra.mxu0 0
  %2561 = vmatprep.subr.bf16.mxu0 0
  %2562 = vmatpush2.bf16.msra.mxu0 0
  %2563 = vmatprep.subr.bf16.mxu0 0
  %2564 = vmatpush2.bf16.msra.mxu0 0
  %2565 = vmatprep.subr.bf16.mxu0 0
  %2566 = vmatpush2.bf16.msra.mxu0 0
  %2567 = vmatprep.subr.bf16.mxu0 0
  %2568 = vmatpush2.bf16.msra.mxu0 0
  %2569 = vmatprep.subr.bf16.mxu0 0
  %2570 = vmatpush2.bf16.msra.mxu0 0
  %2571 = vmatprep.mubr.bf16.mxu0 0
  %2572 = vmatmul.mubr.bf16.gmra.mxu0 %v2512
  %v2573 = vpop.f32.mrf.mxu0
  %v2574 = vadd.f32 0.0, %v2573
  %v2575 = vpop.f32.mrf.mxu0
  %v2576 = vpop.f32.mrf.mxu0
  %v2577 = vadd.f32 0.0, %v2576
  %v2578 = vpop.f32.mrf.mxu0
  %2579 = vmatprep.mubr.bf16.mxu0 0
  %2580 = vmatmul.mubr.bf16.gmra.mxu0 %v2515
  %v2581 = vpop.f32.mrf.mxu0
  %v2582 = vadd.f32 0.0, %v2581
  %v2583 = vpop.f32.mrf.mxu0
  %v2584 = vpop.f32.mrf.mxu0
  %v2585 = vadd.f32 0.0, %v2584
  %v2586 = vpop.f32.mrf.mxu0
  %2587 = vmatprep.mubr.bf16.mxu0 0
  %2588 = vmatmul.mubr.bf16.gmra.mxu0 %v2518
  %v2589 = vpop.f32.mrf.mxu0
  %v2590 = vadd.f32 0.0, %v2589
  %v2591 = vpop.f32.mrf.mxu0
  %v2592 = vpop.f32.mrf.mxu0
  %v2593 = vadd.f32 0.0, %v2592
  %v2594 = vpop.f32.mrf.mxu0
  %2595 = vmatprep.mubr.bf16.mxu0 0
  %2596 = vmatmul.mubr.bf16.gmra.mxu0 %v2521
  %v2597 = vpop.f32.mrf.mxu0
  %v2598 = vadd.f32 0.0, %v2597
  %v2599 = vpop.f32.mrf.mxu0
  %v2600 = vpop.f32.mrf.mxu0
  %v2601 = vadd.f32 0.0, %v2600
  %v2602 = vpop.f32.mrf.mxu0
  %2603 = vmatprep.mubr.bf16.mxu0 0
  %2604 = vmatmul.mubr.bf16.gmra.mxu0 %v2524
  %v2605 = vpop.f32.mrf.mxu0
  %v2606 = vadd.f32 0.0, %v2605
  %v2607 = vpop.f32.mrf.mxu0
  %v2608 = vpop.f32.mrf.mxu0
  %v2609 = vadd.f32 0.0, %v2608
  %v2610 = vpop.f32.mrf.mxu0
  %2611 = vmatprep.mubr.bf16.mxu0 0
  %2612 = vmatmul.mubr.bf16.gmra.mxu0 %v2527
  %v2613 = vpop.f32.mrf.mxu0
  %v2614 = vadd.f32 0.0, %v2613
  %v2615 = vpop.f32.mrf.mxu0
  %v2616 = vpop.f32.mrf.mxu0
  %v2617 = vadd.f32 0.0, %v2616
  %v2618 = vpop.f32.mrf.mxu0
  %2619 = vmatprep.mubr.bf16.mxu0 0
  %2620 = vmatmul.mubr.bf16.gmra.mxu0 %v2530
  %v2621 = vpop.f32.mrf.mxu0
  %v2622 = vadd.f32 0.0, %v2621
  %v2623 = vpop.f32.mrf.mxu0
  %v2624 = vpop.f32.mrf.mxu0
  %v2625 = vadd.f32 0.0, %v2624
  %v2626 = vpop.f32.mrf.mxu0
  %2627 = vmatprep.mubr.bf16.mxu0 0
  %2628 = vmatmul.mubr.bf16.gmra.mxu0 %v2533
  %v2629 = vpop.f32.mrf.mxu0
  %v2630 = vadd.f32 0.0, %v2629
  %v2631 = vpop.f32.mrf.mxu0
  %v2632 = vpop.f32.mrf.mxu0
  %v2633 = vadd.f32 0.0, %v2632
  %v2634 = vpop.f32.mrf.mxu0
  %2635 = vdwg.mxu0
  %v2636 = vpack.c.bf16 %v2574, %v2574
  %v2637 = vpack.c.bf16 %v2577, %v2577
  %v2638 = vpack.c.bf16 %v2582, %v2582
  %v2639 = vpack.c.bf16 %v2585, %v2585
  %v2640 = vpack.c.bf16 %v2590, %v2590
  %v2641 = vpack.c.bf16 %v2593, %v2593
  %v2642 = vpack.c.bf16 %v2598, %v2598
  %v2643 = vpack.c.bf16 %v2601, %v2601
  %v2644 = vpack.c.bf16 %v2606, %v2606
  %v2645 = vpack.c.bf16 %v2609, %v2609
  %v2646 = vpack.c.bf16 %v2614, %v2614
  %v2647 = vpack.c.bf16 %v2617, %v2617
  %v2648 = vpack.c.bf16 %v2622, %v2622
  %v2649 = vpack.c.bf16 %v2625, %v2625
  %v2650 = vpack.c.bf16 %v2630, %v2630
  %v2651 = vpack.c.bf16 %v2633, %v2633
  %vm2652 = vcmask 60416
  %2653 = vst.msk [vmem:[%s2] sm:$0xf] %vm2652, %v2636
  %2654 = vst.msk [vmem:[%s2 + $0x4] sm:$0xf] %vm2652, %v2637
  %2655 = vst.msk [vmem:[%s2 + $0x8] sm:$0xf] %vm2652, %v2638
  %2656 = vst.msk [vmem:[%s2 + $0xc] sm:$0xf] %vm2652, %v2639
  %2657 = vst.msk [vmem:[%s2 + $0x10] sm:$0xf] %vm2652, %v2640
  %2658 = vst.msk [vmem:[%s2 + $0x14] sm:$0xf] %vm2652, %v2641
  %2659 = vst.msk [vmem:[%s2 + $0x18] sm:$0xf] %vm2652, %v2642
  %2660 = vst.msk [vmem:[%s2 + $0x1c] sm:$0xf] %vm2652, %v2643
  %2661 = vst.msk [vmem:[%s2 + $0x20] sm:$0xf] %vm2652, %v2644
  %2662 = vst.msk [vmem:[%s2 + $0x24] sm:$0xf] %vm2652, %v2645
  %2663 = vst.msk [vmem:[%s2 + $0x28] sm:$0xf] %vm2652, %v2646
  %2664 = vst.msk [vmem:[%s2 + $0x2c] sm:$0xf] %vm2652, %v2647
  %2665 = vst.msk [vmem:[%s2 + $0x30] sm:$0xf] %vm2652, %v2648
  %2666 = vst.msk [vmem:[%s2 + $0x34] sm:$0xf] %vm2652, %v2649
  %2667 = vst.msk [vmem:[%s2 + $0x38] sm:$0xf] %vm2652, %v2650
  %2668 = vst.msk [vmem:[%s2 + $0x3c] sm:$0xf] %vm2652, %v2651
  %v2669 = vld [vmem:[%s3] sm:$0x1]
  %vm2670 = vcmask 64512
  %v2671 = vsel %vm2670, %v2574, 0.0
  %v2672 = vsel %vm2670, %v2577, 0.0
  %v2673 = vadd.f32 %v2671, %v2672
  %v2674 = vsel %vm2670, %v2582, 0.0
  %v2675 = vadd.f32 %v2673, %v2674
  %v2676 = vsel %vm2670, %v2585, 0.0
  %v2677 = vadd.f32 %v2675, %v2676
  %v2678 = vsel %vm2670, %v2590, 0.0
  %v2679 = vadd.f32 %v2677, %v2678
  %v2680 = vsel %vm2670, %v2593, 0.0
  %v2681 = vadd.f32 %v2679, %v2680
  %v2682 = vsel %vm2670, %v2598, 0.0
  %v2683 = vadd.f32 %v2681, %v2682
  %v2684 = vsel %vm2670, %v2601, 0.0
  %v2685 = vadd.f32 %v2683, %v2684
  %v2686 = vsel %vm2670, %v2606, 0.0
  %v2687 = vadd.f32 %v2685, %v2686
  %v2688 = vsel %vm2670, %v2609, 0.0
  %v2689 = vadd.f32 %v2687, %v2688
  %v2690 = vsel %vm2670, %v2614, 0.0
  %v2691 = vadd.f32 %v2689, %v2690
  %v2692 = vsel %vm2670, %v2617, 0.0
  %v2693 = vadd.f32 %v2691, %v2692
  %v2694 = vsel %vm2670, %v2622, 0.0
  %v2695 = vadd.f32 %v2693, %v2694
  %v2696 = vsel %vm2670, %v2625, 0.0
  %v2697 = vadd.f32 %v2695, %v2696
  %v2698 = vsel %vm2670, %v2630, 0.0
  %v2699 = vadd.f32 %v2697, %v2698
  %v2700 = vsel %vm2670, %v2633, 0.0
  %v2701 = vadd.f32 %v2699, %v2700
  %v2702 = vrot.slane %v2701, 4
  %v2703 = vadd.f32 %v2701, %v2702
  %v2704 = vrot.slane %v2703, 2
  %v2705 = vadd.f32 %v2703, %v2704
  %v2706 = vrot.slane %v2705, 1
  %v2707 = vadd.f32 %v2705, %v2706
  %v2708 = vadd.f32 %v2669, %v2707
  %vm2709 = vcmask 57344
  %2710 = vst.msk [vmem:[%s3] sm:$0x1] %vm2709, %v2708
  %v2711 = vld [vmem:[%s3 + $0x1] sm:$0x1]
  %v2712 = vmul.f32 %v2574, %v2574
  %v2713 = vmul.f32 %v2577, %v2577
  %v2714 = vmul.f32 %v2582, %v2582
  %v2715 = vmul.f32 %v2585, %v2585
  %v2716 = vmul.f32 %v2590, %v2590
  %v2717 = vmul.f32 %v2593, %v2593
  %v2718 = vmul.f32 %v2598, %v2598
  %v2719 = vmul.f32 %v2601, %v2601
  %v2720 = vmul.f32 %v2606, %v2606
  %v2721 = vmul.f32 %v2609, %v2609
  %v2722 = vmul.f32 %v2614, %v2614
  %v2723 = vmul.f32 %v2617, %v2617
  %v2724 = vmul.f32 %v2622, %v2622
  %v2725 = vmul.f32 %v2625, %v2625
  %v2726 = vmul.f32 %v2630, %v2630
  %v2727 = vmul.f32 %v2633, %v2633
  %v2728 = vsel %vm2670, %v2712, 0.0
  %v2729 = vsel %vm2670, %v2713, 0.0
  %v2730 = vadd.f32 %v2728, %v2729
  %v2731 = vsel %vm2670, %v2714, 0.0
  %v2732 = vadd.f32 %v2730, %v2731
  %v2733 = vsel %vm2670, %v2715, 0.0
  %v2734 = vadd.f32 %v2732, %v2733
  %v2735 = vsel %vm2670, %v2716, 0.0
  %v2736 = vadd.f32 %v2734, %v2735
  %v2737 = vsel %vm2670, %v2717, 0.0
  %v2738 = vadd.f32 %v2736, %v2737
  %v2739 = vsel %vm2670, %v2718, 0.0
  %v2740 = vadd.f32 %v2738, %v2739
  %v2741 = vsel %vm2670, %v2719, 0.0
  %v2742 = vadd.f32 %v2740, %v2741
  %v2743 = vsel %vm2670, %v2720, 0.0
  %v2744 = vadd.f32 %v2742, %v2743
  %v2745 = vsel %vm2670, %v2721, 0.0
  %v2746 = vadd.f32 %v2744, %v2745
  %v2747 = vsel %vm2670, %v2722, 0.0
  %v2748 = vadd.f32 %v2746, %v2747
  %v2749 = vsel %vm2670, %v2723, 0.0
  %v2750 = vadd.f32 %v2748, %v2749
  %v2751 = vsel %vm2670, %v2724, 0.0
  %v2752 = vadd.f32 %v2750, %v2751
  %v2753 = vsel %vm2670, %v2725, 0.0
  %v2754 = vadd.f32 %v2752, %v2753
  %v2755 = vsel %vm2670, %v2726, 0.0
  %v2756 = vadd.f32 %v2754, %v2755
  %v2757 = vsel %vm2670, %v2727, 0.0
  %v2758 = vadd.f32 %v2756, %v2757
  %v2759 = vrot.slane %v2758, 4
  %v2760 = vadd.f32 %v2758, %v2759
  %v2761 = vrot.slane %v2760, 2
  %v2762 = vadd.f32 %v2760, %v2761
  %v2763 = vrot.slane %v2762, 1
  %v2764 = vadd.f32 %v2762, %v2763
  %v2765 = vadd.f32 %v2711, %v2764
  %2766 = vst.msk [vmem:[%s3 + $0x1] sm:$0x1] %vm2709, %v2765
  // Predicated region
  $region14: #{_lambda_.3} parent=0 // pred_check
    _
  $region15: #{_lambda_.3} parent=0 // pred_check_branch
    %2768 = sbr.rel (0) target = $region17
  $region16: #{_lambda_.3} parent=0 // pred_region
    _
  $region17: #{_lambda_.3} parent=0 // pred_fallthru
    _
  // Predicated region
  $region18: #{_lambda_.3} parent=0 // pred_check
    _
  $region19: #{_lambda_.3} parent=0 // pred_check_branch
    %2770 = sbr.rel (0) target = $region21
  $region20: #{_lambda_.3} parent=0 // pred_region
    _
  $region21: #{_lambda_.3} parent=0 // pred_fallthru
    _
  // Predicated region
  $region22: #{_lambda_.3} parent=0 // pred_check
    _
  $region23: #{_lambda_.3} parent=0 // pred_check_branch
    %2772 = sbr.rel (0) target = $region25
  $region24: #{_lambda_.3} parent=0 // pred_region
    _
  $region25: #{_lambda_.3} parent=0 // pred_fallthru
    _
  // Predicated region
  $region26: #{_lambda_.3} parent=0 // pred_check
    _
  $region27: #{_lambda_.3} parent=0 // pred_check_branch
    %2774 = sbr.rel (0) target = $region29
  $region28: #{_lambda_.3} parent=0 // pred_region
    _
  $region29: #{_lambda_.3} parent=0 // pred_fallthru
    _

</llo_original>
